<compile_context>
chip_gen: v7x
topology: tpu7x:2x2x1
jax: 0.10.0
libtpu: 0.0.40
codegen_flags: <defaults>
</compile_context>

<pallas_src>
import functools
import math

import jax
import jax.numpy as jnp
from jax.experimental import pallas as pl
from jax.experimental.pallas import tpu as pltpu


# ----------------------------------------------------------------------------
# Fused Pallas kernel
# ----------------------------------------------------------------------------
def _sigmoid(x):
    # Single-EUP-op sigmoid: sigma(x) = 0.5*tanh(0.5*x) + 0.5 (exact).
    return 0.5 * jnp.tanh(0.5 * x) + 0.5


def _phycrnet_fused_kernel(*refs, nsteps, n_enc, n_lstm):
    pos = 0

    def take():
        nonlocal pos
        r = refs[pos]
        pos += 1
        return r

    # ---- unpack refs (inputs, then outputs) ----
    x_ref = take()
    h0_refs, c0_refs = [], []
    for _ in range(n_lstm):
        h0_refs.append(take())
        c0_refs.append(take())
    enc_refs = [(take(), take()) for _ in range(n_enc)]            # (M, b)
    lstm_refs = [(take(), take(), take()) for _ in range(n_lstm)]  # (Mx, Mh, b)
    mout_ref = take()
    bout_ref = take()
    xs_ref = take()                                                # (nsteps,B,Fx)
    hsec_refs, csec_refs = [], []
    for _ in range(n_lstm):
        hsec_refs.append(take())
        csec_refs.append(take())

    # ---- hoist weight (bf16) / bias (f32) loads out of the step loop ----
    enc_ops = [(m[...], b[...]) for (m, b) in enc_refs]
    lstm_ops = [(mx[...], mh[...], b[...]) for (mx, mh, b) in lstm_refs]
    m_out = mout_ref[...]
    b_out = bout_ref[...]

    x = x_ref[...]                      # (B, Fx) f32
    hs = [r[...] for r in h0_refs]      # each (B, Fh_n) f32
    cs = [r[...] for r in c0_refs]

    if nsteps < 2:
        # torch module never sets second_last_state in this case (wrapper
        # returns []); just keep the output buffers defined.
        for n in range(n_lstm):
            hsec_refs[n][...] = hs[n]
            csec_refs[n][...] = cs[n]

    # TODO(synk): for large cfg["step"] switch this unrolled Python loop to
    # lax.fori_loop with pl.ds(step, 1) stores and carried (x, h, c).
    for step in range(nsteps):
        xt = x
        z = x
        # Encoder blocks: dense circular-conv GEMM (bf16 weights) + bias + ReLU.
        for (m_e, b_e) in enc_ops:
            z = jnp.dot(z.astype(jnp.bfloat16), m_e,
                        preferred_element_type=jnp.float32) + b_e
            z = jnp.maximum(z, 0.0)
        # ConvLSTM cells: gates = z@Mx + h@Mh + b (gate-major, 128-aligned).
        for n, (m_x, m_h, b_g) in enumerate(lstm_ops):
            fh = hs[n].shape[-1]
            gates = (jnp.dot(z.astype(jnp.bfloat16), m_x,
                             preferred_element_type=jnp.float32)
                     + jnp.dot(hs[n].astype(jnp.bfloat16), m_h,
                               preferred_element_type=jnp.float32)
                     + b_g)
            gi = gates[:, 0 * fh:1 * fh]
            gf = gates[:, 1 * fh:2 * fh]
            gg = gates[:, 2 * fh:3 * fh]
            go = gates[:, 3 * fh:4 * fh]
            c_new = _sigmoid(gf) * cs[n] + _sigmoid(gi) * jnp.tanh(gg)
            h_new = _sigmoid(go) * jnp.tanh(c_new)
            hs[n] = h_new
            cs[n] = c_new
            z = h_new
        # Pixel-shuffle + 5x5 circular conv folded (dt pre-folded) + residual.
        out = jnp.dot(z.astype(jnp.bfloat16), m_out,
                      preferred_element_type=jnp.float32) + b_out
        x = xt + out

        # Direct per-step lane-dense store (no history lists / end-of-kernel concat).
        xs_ref[step] = x
        if step == nsteps - 2:
            for n in range(n_lstm):
                hsec_refs[n][...] = hs[n]
                csec_refs[n][...] = cs[n]


def _fused_call(x_flat, h0_list, c0_list, enc_ops, lstm_ops, out_op, *, nsteps):
    B, fx = x_flat.shape
    n_enc = len(enc_ops)
    n_lstm = len(lstm_ops)

    def vmem_spec():
        # Whole array resident in VMEM; no grid -> single DMA per operand,
        # no redundant double-buffering of the constant folded weights.
        return pl.BlockSpec(memory_space=pltpu.MemorySpace.VMEM)

    inputs = [x_flat]
    for h0, c0 in zip(h0_list, c0_list):
        inputs += [h0, c0]
    for m, bvec in enc_ops:
        inputs += [m, bvec]
    for mx, mh, bvec in lstm_ops:
        inputs += [mx, mh, bvec]
    m_out, b_out = out_op
    inputs += [m_out, b_out]
    in_specs = [vmem_spec() for _ in inputs]

    out_shapes = [jax.ShapeDtypeStruct((nsteps, B, fx), jnp.float32)]
    for h0 in h0_list:
        fh = h0.shape[-1]
        out_shapes.append(jax.ShapeDtypeStruct((B, fh), jnp.float32))  # h @ step-2
        out_shapes.append(jax.ShapeDtypeStruct((B, fh), jnp.float32))  # c @ step-2
    out_specs = tuple(vmem_spec() for _ in out_shapes)

    kernel = functools.partial(_phycrnet_fused_kernel, nsteps=nsteps,
                               n_enc=n_enc, n_lstm=n_lstm)
    return pl.pallas_call(
        kernel,
        out_shape=tuple(out_shapes),
        in_specs=in_specs,
        out_specs=out_specs,
        compiler_params=pltpu.CompilerParams(
            vmem_limit_bytes=32 * 1024 * 1024),
    )(*inputs)


# ----------------------------------------------------------------------------
# Offline operator construction (plain JAX, input-independent weight folding)
# ----------------------------------------------------------------------------
def _circular_conv_nhwc(x, w_oihw, stride, pad):
    """Circular-padded 2-D conv; NHWC activations, OIHW (PyTorch) weights."""
    if pad > 0:
        x = jnp.pad(x, ((0, 0), (pad, pad), (pad, pad), (0, 0)), mode="wrap")
    w_hwio = jnp.transpose(w_oihw, (2, 3, 1, 0))
    return jax.lax.conv_general_dilated(
        x, w_hwio, window_strides=(stride, stride), padding="VALID",
        dimension_numbers=("NHWC", "HWIO", "NHWC"))


def _pixel_shuffle_nhwc(x, r):
    # Matches torch.nn.PixelShuffle: ch = c*r*r + i*r + j -> out[h*r+i, w*r+j, c]
    B, H, W, C = x.shape
    c_out = C // (r * r)
    x = x.reshape(B, H, W, c_out, r, r)
    x = jnp.transpose(x, (0, 1, 4, 2, 5, 3))
    return x.reshape(B, H * r, W * r, c_out)


def _linear_op_to_dense(fn, h, w, c):
    """Dense (h*w*c, ho*wo*co) matrix of a linear map on NHWC-flattened fields."""
    n = h * w * c
    basis = jnp.eye(n, dtype=jnp.float32).reshape(n, h, w, c)
    out = fn(basis)
    ho, wo, co = out.shape[1], out.shape[2], out.shape[3]
    return out.reshape(n, ho * wo * co), (ho, wo, co)


def _uniform(key, shape, scale):
    return jax.random.uniform(key, shape, jnp.float32, -scale, scale)


def build_operators(key, cfg, H, W):
    """Mirror PhyCRNetLSM's init; fold every circular conv / pixel-shuffle into a
    dense GEMM operator over NHWC-flattened fields (spatial size baked in).
    Matrices are stored in bf16 (HBM/VMEM halved), biases in f32."""
    # TODO(synk): residual channel-broadcast for input_channels > 1 not implemented.
    assert cfg["input_channels"] == 1
    in_ch = [cfg["input_channels"]] + cfg["hidden_channels"]
    n_enc, n_lstm = cfg["num_layers"]
    dt = float(cfg["dt"])

    enc_ops, lstm_ops, lstm_meta = [], [], []
    h_cur, w_cur, c_cur = H, W, cfg["input_channels"]

    # EncoderBlocks: weight_norm(conv) + ReLU.  weight_norm init has g = ||v||,
    # so the effective weight equals v; conv bias is zero-initialised.
    for n in range(n_enc):
        O, I, K = cfg["hidden_channels"][n], in_ch[n], cfg["input_kernel_size"][n]
        s, p = cfg["input_stride"][n], cfg["input_padding"][n]
        key, k1 = jax.random.split(key)
        scale = 0.1 * math.sqrt(1.0 / (O * I * K))
        wv = _uniform(k1, (O, I, K, K), scale)
        M, (ho, wo, co) = _linear_op_to_dense(
            lambda b, w_=wv, s_=s, p_=p: _circular_conv_nhwc(b, w_, s_, p_),
            h_cur, w_cur, c_cur)
        enc_ops.append((M.astype(jnp.bfloat16),
                        jnp.zeros((1, ho * wo * co), jnp.float32)))
        h_cur, w_cur, c_cur = ho, wo, co

    # ConvLSTM cells: fold the 4 x-convs and 4 h-convs into two dense operators
    # (x -> i,f,c,o) and (h -> i,f,c,o), gate-major column blocks.
    for n in range(n_enc, n_enc + n_lstm):
        O, I, K = cfg["hidden_channels"][n], in_ch[n], cfg["input_kernel_size"][n]
        s, p = cfg["input_stride"][n], cfg["input_padding"][n]
        cx = 0.1 * math.sqrt(1.0 / (O * I * K))
        ch = 0.1 * math.sqrt(1.0 / (O * O * 3))
        gate_x_cols, gate_h_cols = [], []
        ho = wo = None
        for _gate in ("i", "f", "c", "o"):
            key, k1, k2 = jax.random.split(key, 3)
            wx = _uniform(k1, (O, I, K, K), cx)
            wh = _uniform(k2, (O, O, 3, 3), ch)
            Mx, (ho, wo, _) = _linear_op_to_dense(
                lambda b, w_=wx, s_=s, p_=p: _circular_conv_nhwc(b, w_, s_, p_),
                h_cur, w_cur, c_cur)
            Mh, _ = _linear_op_to_dense(
                lambda b, w_=wh: _circular_conv_nhwc(b, w_, 1, 1), ho, wo, O)
            gate_x_cols.append(Mx)
            gate_h_cols.append(Mh)
        fh = ho * wo * O
        # 128-aligned gate blocks keep per-step gate slicing zero-copy.
        assert fh % 128 == 0, "folded gate width must be a multiple of 128"
        Mxg = jnp.concatenate(gate_x_cols, axis=1)          # (Fin, 4*Fh)
        Mhg = jnp.concatenate(gate_h_cols, axis=1)          # (Fh,  4*Fh)
        # Biases: Wxi/Wxf/Wxc zero, Wxo filled with 1.0; Wh* convs have no bias.
        bg = jnp.concatenate([jnp.zeros((3 * fh,), jnp.float32),
                              jnp.ones((fh,), jnp.float32)]).reshape(1, 4 * fh)
        lstm_ops.append((Mxg.astype(jnp.bfloat16), Mhg.astype(jnp.bfloat16), bg))
        lstm_meta.append((ho, wo, O))
        h_cur, w_cur, c_cur = ho, wo, O

    # Output layer: PixelShuffle(r) then Conv2d(1, 1, 5, 1, 2, circular),
    # folded into a single dense operator; bias zero-initialised.
    # The Euler dt is folded in offline so the kernel epilogue is x = xt + out.
    key, k1 = jax.random.split(key)
    so = 0.1 * math.sqrt(1.0 / (1 * 1 * 5))
    w_out = _uniform(k1, (1, 1, 5, 5), so)
    r = cfg["upscale_factor"]

    def _ps_then_conv(b):
        return _circular_conv_nhwc(_pixel_shuffle_nhwc(b, r), w_out, 1, 2)

    Mout, (hf, wf, cf) = _linear_op_to_dense(_ps_then_conv, h_cur, w_cur, c_cur)
    assert (hf, wf, cf) == (H, W, cfg["input_channels"])
    out_op = ((dt * Mout).astype(jnp.bfloat16),
              jnp.zeros((1, hf * wf * cf), jnp.float32))

    return dict(enc=enc_ops, lstm=lstm_ops, lstm_meta=lstm_meta, out=out_op)


# ----------------------------------------------------------------------------
# Forward pass (mirrors PhyCRNetLSM.forward); NCHW in / NCHW out
# ----------------------------------------------------------------------------
def phycrnet_forward(ops, cfg, init_state, x_nchw):
    B, Cin, H, W = x_nchw.shape
    nsteps = cfg["step"]

    x_flat = jnp.transpose(x_nchw, (0, 2, 3, 1)).reshape(B, H * W * Cin)
    h0_list, c0_list = [], []
    for n, (h, c) in enumerate(init_state):
        hn, wn, cn = ops["lstm_meta"][n]
        h0_list.append(jnp.transpose(h, (0, 2, 3, 1)).reshape(B, hn * wn * cn))
        c0_list.append(jnp.transpose(c, (0, 2, 3, 1)).reshape(B, hn * wn * cn))

    outs = _fused_call(x_flat, h0_list, c0_list, ops["enc"], ops["lstm"],
                       ops["out"], nsteps=nsteps)
    xs_all = outs[0]                      # (nsteps, B, Fx)

    def to_nchw(flat, hh, ww, cc):
        return jnp.transpose(flat.reshape(B, hh, ww, cc), (0, 3, 1, 2))

    outputs = [to_nchw(xs_all[s], H, W, Cin)
               for s in cfg["ef_step"] if 0 <= s < nsteps]

    second_last_state = []
    if nsteps >= 2:
        for n in range(len(ops["lstm"])):
            hn, wn, cn = ops["lstm_meta"][n]
            h_sec = outs[1 + 2 * n]
            c_sec = outs[2 + 2 * n]
            second_last_state.append((to_nchw(h_sec, hn, wn, cn),
                                      to_nchw(c_sec, hn, wn, cn)))
    return outputs, second_last_state


# ----------------------------------------------------------------------------
if __name__ == "__main__":
    cfg = dict(
        input_channels=1,
        hidden_channels=[8, 4],          # last one = upscale_factor**2
        input_kernel_size=[4, 3],
        input_stride=[2, 1],
        input_padding=[1, 1],
        dt=0.1,
        num_layers=[1, 1],               # [num_encoder, num_convlstm]
        upscale_factor=2,
        step=3,
        ef_step=[1, 2],
    )

    key = jax.random.PRNGKey(0)
    key, kp, kx, kh, kc = jax.random.split(key, 5)

    B, H, W = 2, 16, 16
    ops = build_operators(kp, cfg, H, W)

    x = jax.random.normal(kx, (B, cfg["input_channels"], H, W), jnp.float32)
    h0 = jax.random.normal(kh, (B, cfg["hidden_channels"][-1], H // 2, W // 2),
                           jnp.float32)
    c0 = jax.random.normal(kc, (B, cfg["hidden_channels"][-1], H // 2, W // 2),
                           jnp.float32)
    init_state = [(h0, c0)]

    outputs, second_last_state = phycrnet_forward(ops, cfg, init_state, x)

    for o in outputs:
        jax.block_until_ready(o)
    for h, c in second_last_state:
        jax.block_until_ready(h)
        jax.block_until_ready(c)

    assert len(outputs) == 2 and outputs[0].shape == (B, 1, H, W)
    assert len(second_last_state) == 1
    assert second_last_state[0][0].shape == (B, cfg["hidden_channels"][-1],
                                             H // 2, W // 2)
    print("KERNEL_OK")
</pallas_src>

<mosaic_0001>
module attributes {stable_mosaic.version = 11 : i64} {
  func.func @_phycrnet_fused_kernel(%arg0: memref<2x256xf32, #tpu.memory_space<vmem>>, %arg1: memref<2x256xf32, #tpu.memory_space<vmem>>, %arg2: memref<2x256xf32, #tpu.memory_space<vmem>>, %arg3: memref<256x512xbf16, #tpu.memory_space<vmem>>, %arg4: memref<1x512xf32, #tpu.memory_space<vmem>>, %arg5: memref<512x1024xbf16, #tpu.memory_space<vmem>>, %arg6: memref<256x1024xbf16, #tpu.memory_space<vmem>>, %arg7: memref<1x1024xf32, #tpu.memory_space<vmem>>, %arg8: memref<256x256xbf16, #tpu.memory_space<vmem>>, %arg9: memref<1x256xf32, #tpu.memory_space<vmem>>, %arg10: memref<3x2x256xf32, #tpu.memory_space<vmem>>, %arg11: memref<2x256xf32, #tpu.memory_space<vmem>>, %arg12: memref<2x256xf32, #tpu.memory_space<vmem>>) attributes {dimension_semantics = [], scalar_prefetch = 0 : i64, scratch_operands = 0 : i64, tpu.core_type = #tpu.core_type<tc>} {
    %c0 = arith.constant 0 : index
    %c0_0 = arith.constant 0 : index
    %0 = vector.load %arg3[%c0, %c0_0] : memref<256x512xbf16, #tpu.memory_space<vmem>>, vector<256x512xbf16>
    %c0_1 = arith.constant 0 : index
    %c0_2 = arith.constant 0 : index
    %1 = vector.load %arg4[%c0_1, %c0_2] : memref<1x512xf32, #tpu.memory_space<vmem>>, vector<1x512xf32>
    %c0_3 = arith.constant 0 : index
    %c0_4 = arith.constant 0 : index
    %2 = vector.load %arg5[%c0_3, %c0_4] : memref<512x1024xbf16, #tpu.memory_space<vmem>>, vector<512x1024xbf16>
    %c0_5 = arith.constant 0 : index
    %c0_6 = arith.constant 0 : index
    %3 = vector.load %arg6[%c0_5, %c0_6] : memref<256x1024xbf16, #tpu.memory_space<vmem>>, vector<256x1024xbf16>
    %c0_7 = arith.constant 0 : index
    %c0_8 = arith.constant 0 : index
    %4 = vector.load %arg7[%c0_7, %c0_8] : memref<1x1024xf32, #tpu.memory_space<vmem>>, vector<1x1024xf32>
    %c0_9 = arith.constant 0 : index
    %c0_10 = arith.constant 0 : index
    %5 = vector.load %arg8[%c0_9, %c0_10] : memref<256x256xbf16, #tpu.memory_space<vmem>>, vector<256x256xbf16>
    %c0_11 = arith.constant 0 : index
    %c0_12 = arith.constant 0 : index
    %6 = vector.load %arg9[%c0_11, %c0_12] : memref<1x256xf32, #tpu.memory_space<vmem>>, vector<1x256xf32>
    %c0_13 = arith.constant 0 : index
    %c0_14 = arith.constant 0 : index
    %7 = vector.load %arg0[%c0_13, %c0_14] : memref<2x256xf32, #tpu.memory_space<vmem>>, vector<2x256xf32>
    %c0_15 = arith.constant 0 : index
    %c0_16 = arith.constant 0 : index
    %8 = vector.load %arg1[%c0_15, %c0_16] : memref<2x256xf32, #tpu.memory_space<vmem>>, vector<2x256xf32>
    %c0_17 = arith.constant 0 : index
    %c0_18 = arith.constant 0 : index
    %9 = vector.load %arg2[%c0_17, %c0_18] : memref<2x256xf32, #tpu.memory_space<vmem>>, vector<2x256xf32>
    %10 = arith.truncf %7 : vector<2x256xf32> to vector<2x256xbf16>
    %cst = arith.constant dense<0.000000e+00> : vector<2x512xf32>
    %11 = tpu.matmul %10, %0, %cst {dimension_numbers = #tpu.dot_dimension_numbers<[1], [0], [0], [1], [0, 0, 1, 1], [], []>} : vector<2x256xbf16>, vector<256x512xbf16>, vector<2x512xf32> -> vector<2x512xf32>
    %12 = vector.broadcast %1 : vector<1x512xf32> to vector<2x512xf32>
    %13 = arith.addf %11, %12 : vector<2x512xf32>
    %cst_19 = arith.constant 0.000000e+00 : f32
    %14 = vector.broadcast %cst_19 : f32 to vector<2x512xf32>
    %15 = arith.maximumf %13, %14 : vector<2x512xf32>
    %16 = arith.truncf %15 : vector<2x512xf32> to vector<2x512xbf16>
    %cst_20 = arith.constant dense<0.000000e+00> : vector<2x1024xf32>
    %17 = tpu.matmul %16, %2, %cst_20 {dimension_numbers = #tpu.dot_dimension_numbers<[1], [0], [0], [1], [0, 0, 1, 1], [], []>} : vector<2x512xbf16>, vector<512x1024xbf16>, vector<2x1024xf32> -> vector<2x1024xf32>
    %18 = arith.truncf %8 : vector<2x256xf32> to vector<2x256xbf16>
    %cst_21 = arith.constant dense<0.000000e+00> : vector<2x1024xf32>
    %19 = tpu.matmul %18, %3, %cst_21 {dimension_numbers = #tpu.dot_dimension_numbers<[1], [0], [0], [1], [0, 0, 1, 1], [], []>} : vector<2x256xbf16>, vector<256x1024xbf16>, vector<2x1024xf32> -> vector<2x1024xf32>
    %20 = arith.addf %17, %19 : vector<2x1024xf32>
    %21 = vector.broadcast %4 : vector<1x1024xf32> to vector<2x1024xf32>
    %22 = arith.addf %20, %21 : vector<2x1024xf32>
    %23 = vector.extract_strided_slice %22 {offsets = [0, 0], sizes = [2, 256], strides = [1, 1]} : vector<2x1024xf32> to vector<2x256xf32>
    %24 = vector.extract_strided_slice %22 {offsets = [0, 256], sizes = [2, 256], strides = [1, 1]} : vector<2x1024xf32> to vector<2x256xf32>
    %25 = vector.extract_strided_slice %22 {offsets = [0, 512], sizes = [2, 256], strides = [1, 1]} : vector<2x1024xf32> to vector<2x256xf32>
    %26 = vector.extract_strided_slice %22 {offsets = [0, 768], sizes = [2, 256], strides = [1, 1]} : vector<2x1024xf32> to vector<2x256xf32>
    %cst_22 = arith.constant 5.000000e-01 : f32
    %27 = vector.broadcast %cst_22 : f32 to vector<2x256xf32>
    %28 = arith.mulf %27, %24 : vector<2x256xf32>
    %29 = math.tanh %28 : vector<2x256xf32>
    %cst_23 = arith.constant 5.000000e-01 : f32
    %30 = vector.broadcast %cst_23 : f32 to vector<2x256xf32>
    %31 = arith.mulf %30, %29 : vector<2x256xf32>
    %cst_24 = arith.constant 5.000000e-01 : f32
    %32 = vector.broadcast %cst_24 : f32 to vector<2x256xf32>
    %33 = arith.addf %31, %32 : vector<2x256xf32>
    %34 = arith.mulf %33, %9 : vector<2x256xf32>
    %cst_25 = arith.constant 5.000000e-01 : f32
    %35 = vector.broadcast %cst_25 : f32 to vector<2x256xf32>
    %36 = arith.mulf %35, %23 : vector<2x256xf32>
    %37 = math.tanh %36 : vector<2x256xf32>
    %cst_26 = arith.constant 5.000000e-01 : f32
    %38 = vector.broadcast %cst_26 : f32 to vector<2x256xf32>
    %39 = arith.mulf %38, %37 : vector<2x256xf32>
    %cst_27 = arith.constant 5.000000e-01 : f32
    %40 = vector.broadcast %cst_27 : f32 to vector<2x256xf32>
    %41 = arith.addf %39, %40 : vector<2x256xf32>
    %42 = math.tanh %25 : vector<2x256xf32>
    %43 = arith.mulf %41, %42 : vector<2x256xf32>
    %44 = arith.addf %34, %43 : vector<2x256xf32>
    %cst_28 = arith.constant 5.000000e-01 : f32
    %45 = vector.broadcast %cst_28 : f32 to vector<2x256xf32>
    %46 = arith.mulf %45, %26 : vector<2x256xf32>
    %47 = math.tanh %46 : vector<2x256xf32>
    %cst_29 = arith.constant 5.000000e-01 : f32
    %48 = vector.broadcast %cst_29 : f32 to vector<2x256xf32>
    %49 = arith.mulf %48, %47 : vector<2x256xf32>
    %cst_30 = arith.constant 5.000000e-01 : f32
    %50 = vector.broadcast %cst_30 : f32 to vector<2x256xf32>
    %51 = arith.addf %49, %50 : vector<2x256xf32>
    %52 = math.tanh %44 : vector<2x256xf32>
    %53 = arith.mulf %51, %52 : vector<2x256xf32>
    %54 = arith.truncf %53 : vector<2x256xf32> to vector<2x256xbf16>
    %cst_31 = arith.constant dense<0.000000e+00> : vector<2x256xf32>
    %55 = tpu.matmul %54, %5, %cst_31 {dimension_numbers = #tpu.dot_dimension_numbers<[1], [0], [0], [1], [0, 0, 1, 1], [], []>} : vector<2x256xbf16>, vector<256x256xbf16>, vector<2x256xf32> -> vector<2x256xf32>
    %56 = vector.broadcast %6 : vector<1x256xf32> to vector<2x256xf32>
    %57 = arith.addf %55, %56 : vector<2x256xf32>
    %58 = arith.addf %7, %57 : vector<2x256xf32>
    %c0_32 = arith.constant 0 : index
    %c0_33 = arith.constant 0 : index
    %c0_34 = arith.constant 0 : index
    %59 = vector.load %arg10[%c0_32, %c0_33, %c0_34] : memref<3x2x256xf32, #tpu.memory_space<vmem>>, vector<1x2x256xf32>
    %60 = vector.shape_cast %59 : vector<1x2x256xf32> to vector<2x256xf32>
    %61 = vector.shape_cast %58 : vector<2x256xf32> to vector<1x2x256xf32>
    tpu.vector_store %arg10[%c0_32, %c0_33, %c0_34], %61 {strides = array<i32>} : memref<3x2x256xf32, #tpu.memory_space<vmem>>, vector<1x2x256xf32>,
    %62 = arith.truncf %58 : vector<2x256xf32> to vector<2x256xbf16>
    %cst_35 = arith.constant dense<0.000000e+00> : vector<2x512xf32>
    %63 = tpu.matmul %62, %0, %cst_35 {dimension_numbers = #tpu.dot_dimension_numbers<[1], [0], [0], [1], [0, 0, 1, 1], [], []>} : vector<2x256xbf16>, vector<256x512xbf16>, vector<2x512xf32> -> vector<2x512xf32>
    %64 = vector.broadcast %1 : vector<1x512xf32> to vector<2x512xf32>
    %65 = arith.addf %63, %64 : vector<2x512xf32>
    %cst_36 = arith.constant 0.000000e+00 : f32
    %66 = vector.broadcast %cst_36 : f32 to vector<2x512xf32>
    %67 = arith.maximumf %65, %66 : vector<2x512xf32>
    %68 = arith.truncf %67 : vector<2x512xf32> to vector<2x512xbf16>
    %cst_37 = arith.constant dense<0.000000e+00> : vector<2x1024xf32>
    %69 = tpu.matmul %68, %2, %cst_37 {dimension_numbers = #tpu.dot_dimension_numbers<[1], [0], [0], [1], [0, 0, 1, 1], [], []>} : vector<2x512xbf16>, vector<512x1024xbf16>, vector<2x1024xf32> -> vector<2x1024xf32>
    %70 = arith.truncf %53 : vector<2x256xf32> to vector<2x256xbf16>
    %cst_38 = arith.constant dense<0.000000e+00> : vector<2x1024xf32>
    %71 = tpu.matmul %70, %3, %cst_38 {dimension_numbers = #tpu.dot_dimension_numbers<[1], [0], [0], [1], [0, 0, 1, 1], [], []>} : vector<2x256xbf16>, vector<256x1024xbf16>, vector<2x1024xf32> -> vector<2x1024xf32>
    %72 = arith.addf %69, %71 : vector<2x1024xf32>
    %73 = vector.broadcast %4 : vector<1x1024xf32> to vector<2x1024xf32>
    %74 = arith.addf %72, %73 : vector<2x1024xf32>
    %75 = vector.extract_strided_slice %74 {offsets = [0, 0], sizes = [2, 256], strides = [1, 1]} : vector<2x1024xf32> to vector<2x256xf32>
    %76 = vector.extract_strided_slice %74 {offsets = [0, 256], sizes = [2, 256], strides = [1, 1]} : vector<2x1024xf32> to vector<2x256xf32>
    %77 = vector.extract_strided_slice %74 {offsets = [0, 512], sizes = [2, 256], strides = [1, 1]} : vector<2x1024xf32> to vector<2x256xf32>
    %78 = vector.extract_strided_slice %74 {offsets = [0, 768], sizes = [2, 256], strides = [1, 1]} : vector<2x1024xf32> to vector<2x256xf32>
    %cst_39 = arith.constant 5.000000e-01 : f32
    %79 = vector.broadcast %cst_39 : f32 to vector<2x256xf32>
    %80 = arith.mulf %79, %76 : vector<2x256xf32>
    %81 = math.tanh %80 : vector<2x256xf32>
    %cst_40 = arith.constant 5.000000e-01 : f32
    %82 = vector.broadcast %cst_40 : f32 to vector<2x256xf32>
    %83 = arith.mulf %82, %81 : vector<2x256xf32>
    %cst_41 = arith.constant 5.000000e-01 : f32
    %84 = vector.broadcast %cst_41 : f32 to vector<2x256xf32>
    %85 = arith.addf %83, %84 : vector<2x256xf32>
    %86 = arith.mulf %85, %44 : vector<2x256xf32>
    %cst_42 = arith.constant 5.000000e-01 : f32
    %87 = vector.broadcast %cst_42 : f32 to vector<2x256xf32>
    %88 = arith.mulf %87, %75 : vector<2x256xf32>
    %89 = math.tanh %88 : vector<2x256xf32>
    %cst_43 = arith.constant 5.000000e-01 : f32
    %90 = vector.broadcast %cst_43 : f32 to vector<2x256xf32>
    %91 = arith.mulf %90, %89 : vector<2x256xf32>
    %cst_44 = arith.constant 5.000000e-01 : f32
    %92 = vector.broadcast %cst_44 : f32 to vector<2x256xf32>
    %93 = arith.addf %91, %92 : vector<2x256xf32>
    %94 = math.tanh %77 : vector<2x256xf32>
    %95 = arith.mulf %93, %94 : vector<2x256xf32>
    %96 = arith.addf %86, %95 : vector<2x256xf32>
    %cst_45 = arith.constant 5.000000e-01 : f32
    %97 = vector.broadcast %cst_45 : f32 to vector<2x256xf32>
    %98 = arith.mulf %97, %78 : vector<2x256xf32>
    %99 = math.tanh %98 : vector<2x256xf32>
    %cst_46 = arith.constant 5.000000e-01 : f32
    %100 = vector.broadcast %cst_46 : f32 to vector<2x256xf32>
    %101 = arith.mulf %100, %99 : vector<2x256xf32>
    %cst_47 = arith.constant 5.000000e-01 : f32
    %102 = vector.broadcast %cst_47 : f32 to vector<2x256xf32>
    %103 = arith.addf %101, %102 : vector<2x256xf32>
    %104 = math.tanh %96 : vector<2x256xf32>
    %105 = arith.mulf %103, %104 : vector<2x256xf32>
    %106 = arith.truncf %105 : vector<2x256xf32> to vector<2x256xbf16>
    %cst_48 = arith.constant dense<0.000000e+00> : vector<2x256xf32>
    %107 = tpu.matmul %106, %5, %cst_48 {dimension_numbers = #tpu.dot_dimension_numbers<[1], [0], [0], [1], [0, 0, 1, 1], [], []>} : vector<2x256xbf16>, vector<256x256xbf16>, vector<2x256xf32> -> vector<2x256xf32>
    %108 = vector.broadcast %6 : vector<1x256xf32> to vector<2x256xf32>
    %109 = arith.addf %107, %108 : vector<2x256xf32>
    %110 = arith.addf %58, %109 : vector<2x256xf32>
    %c1 = arith.constant 1 : index
    %c0_49 = arith.constant 0 : index
    %c0_50 = arith.constant 0 : index
    %111 = vector.load %arg10[%c1, %c0_49, %c0_50] : memref<3x2x256xf32, #tpu.memory_space<vmem>>, vector<1x2x256xf32>
    %112 = vector.shape_cast %111 : vector<1x2x256xf32> to vector<2x256xf32>
    %113 = vector.shape_cast %110 : vector<2x256xf32> to vector<1x2x256xf32>
    tpu.vector_store %arg10[%c1, %c0_49, %c0_50], %113 {strides = array<i32>} : memref<3x2x256xf32, #tpu.memory_space<vmem>>, vector<1x2x256xf32>,
    %c0_51 = arith.constant 0 : index
    %c0_52 = arith.constant 0 : index
    %114 = vector.load %arg11[%c0_51, %c0_52] : memref<2x256xf32, #tpu.memory_space<vmem>>, vector<2x256xf32>
    tpu.vector_store %arg11[%c0_51, %c0_52], %105 {strides = array<i32>} : memref<2x256xf32, #tpu.memory_space<vmem>>, vector<2x256xf32>,
    %c0_53 = arith.constant 0 : index
    %c0_54 = arith.constant 0 : index
    %115 = vector.load %arg12[%c0_53, %c0_54] : memref<2x256xf32, #tpu.memory_space<vmem>>, vector<2x256xf32>
    tpu.vector_store %arg12[%c0_53, %c0_54], %96 {strides = array<i32>} : memref<2x256xf32, #tpu.memory_space<vmem>>, vector<2x256xf32>,
    %116 = arith.truncf %110 : vector<2x256xf32> to vector<2x256xbf16>
    %cst_55 = arith.constant dense<0.000000e+00> : vector<2x512xf32>
    %117 = tpu.matmul %116, %0, %cst_55 {dimension_numbers = #tpu.dot_dimension_numbers<[1], [0], [0], [1], [0, 0, 1, 1], [], []>} : vector<2x256xbf16>, vector<256x512xbf16>, vector<2x512xf32> -> vector<2x512xf32>
    %118 = vector.broadcast %1 : vector<1x512xf32> to vector<2x512xf32>
    %119 = arith.addf %117, %118 : vector<2x512xf32>
    %cst_56 = arith.constant 0.000000e+00 : f32
    %120 = vector.broadcast %cst_56 : f32 to vector<2x512xf32>
    %121 = arith.maximumf %119, %120 : vector<2x512xf32>
    %122 = arith.truncf %121 : vector<2x512xf32> to vector<2x512xbf16>
    %cst_57 = arith.constant dense<0.000000e+00> : vector<2x1024xf32>
    %123 = tpu.matmul %122, %2, %cst_57 {dimension_numbers = #tpu.dot_dimension_numbers<[1], [0], [0], [1], [0, 0, 1, 1], [], []>} : vector<2x512xbf16>, vector<512x1024xbf16>, vector<2x1024xf32> -> vector<2x1024xf32>
    %124 = arith.truncf %105 : vector<2x256xf32> to vector<2x256xbf16>
    %cst_58 = arith.constant dense<0.000000e+00> : vector<2x1024xf32>
    %125 = tpu.matmul %124, %3, %cst_58 {dimension_numbers = #tpu.dot_dimension_numbers<[1], [0], [0], [1], [0, 0, 1, 1], [], []>} : vector<2x256xbf16>, vector<256x1024xbf16>, vector<2x1024xf32> -> vector<2x1024xf32>
    %126 = arith.addf %123, %125 : vector<2x1024xf32>
    %127 = vector.broadcast %4 : vector<1x1024xf32> to vector<2x1024xf32>
    %128 = arith.addf %126, %127 : vector<2x1024xf32>
    %129 = vector.extract_strided_slice %128 {offsets = [0, 0], sizes = [2, 256], strides = [1, 1]} : vector<2x1024xf32> to vector<2x256xf32>
    %130 = vector.extract_strided_slice %128 {offsets = [0, 256], sizes = [2, 256], strides = [1, 1]} : vector<2x1024xf32> to vector<2x256xf32>
    %131 = vector.extract_strided_slice %128 {offsets = [0, 512], sizes = [2, 256], strides = [1, 1]} : vector<2x1024xf32> to vector<2x256xf32>
    %132 = vector.extract_strided_slice %128 {offsets = [0, 768], sizes = [2, 256], strides = [1, 1]} : vector<2x1024xf32> to vector<2x256xf32>
    %cst_59 = arith.constant 5.000000e-01 : f32
    %133 = vector.broadcast %cst_59 : f32 to vector<2x256xf32>
    %134 = arith.mulf %133, %130 : vector<2x256xf32>
    %135 = math.tanh %134 : vector<2x256xf32>
    %cst_60 = arith.constant 5.000000e-01 : f32
    %136 = vector.broadcast %cst_60 : f32 to vector<2x256xf32>
    %137 = arith.mulf %136, %135 : vector<2x256xf32>
    %cst_61 = arith.constant 5.000000e-01 : f32
    %138 = vector.broadcast %cst_61 : f32 to vector<2x256xf32>
    %139 = arith.addf %137, %138 : vector<2x256xf32>
    %140 = arith.mulf %139, %96 : vector<2x256xf32>
    %cst_62 = arith.constant 5.000000e-01 : f32
    %141 = vector.broadcast %cst_62 : f32 to vector<2x256xf32>
    %142 = arith.mulf %141, %129 : vector<2x256xf32>
    %143 = math.tanh %142 : vector<2x256xf32>
    %cst_63 = arith.constant 5.000000e-01 : f32
    %144 = vector.broadcast %cst_63 : f32 to vector<2x256xf32>
    %145 = arith.mulf %144, %143 : vector<2x256xf32>
    %cst_64 = arith.constant 5.000000e-01 : f32
    %146 = vector.broadcast %cst_64 : f32 to vector<2x256xf32>
    %147 = arith.addf %145, %146 : vector<2x256xf32>
    %148 = math.tanh %131 : vector<2x256xf32>
    %149 = arith.mulf %147, %148 : vector<2x256xf32>
    %150 = arith.addf %140, %149 : vector<2x256xf32>
    %cst_65 = arith.constant 5.000000e-01 : f32
    %151 = vector.broadcast %cst_65 : f32 to vector<2x256xf32>
    %152 = arith.mulf %151, %132 : vector<2x256xf32>
    %153 = math.tanh %152 : vector<2x256xf32>
    %cst_66 = arith.constant 5.000000e-01 : f32
    %154 = vector.broadcast %cst_66 : f32 to vector<2x256xf32>
    %155 = arith.mulf %154, %153 : vector<2x256xf32>
    %cst_67 = arith.constant 5.000000e-01 : f32
    %156 = vector.broadcast %cst_67 : f32 to vector<2x256xf32>
    %157 = arith.addf %155, %156 : vector<2x256xf32>
    %158 = math.tanh %150 : vector<2x256xf32>
    %159 = arith.mulf %157, %158 : vector<2x256xf32>
    %160 = arith.truncf %159 : vector<2x256xf32> to vector<2x256xbf16>
    %cst_68 = arith.constant dense<0.000000e+00> : vector<2x256xf32>
    %161 = tpu.matmul %160, %5, %cst_68 {dimension_numbers = #tpu.dot_dimension_numbers<[1], [0], [0], [1], [0, 0, 1, 1], [], []>} : vector<2x256xbf16>, vector<256x256xbf16>, vector<2x256xf32> -> vector<2x256xf32>
    %162 = vector.broadcast %6 : vector<1x256xf32> to vector<2x256xf32>
    %163 = arith.addf %161, %162 : vector<2x256xf32>
    %164 = arith.addf %110, %163 : vector<2x256xf32>
    %c2 = arith.constant 2 : index
    %c0_69 = arith.constant 0 : index
    %c0_70 = arith.constant 0 : index
    %165 = vector.load %arg10[%c2, %c0_69, %c0_70] : memref<3x2x256xf32, #tpu.memory_space<vmem>>, vector<1x2x256xf32>
    %166 = vector.shape_cast %165 : vector<1x2x256xf32> to vector<2x256xf32>
    %167 = vector.shape_cast %164 : vector<2x256xf32> to vector<1x2x256xf32>
    tpu.vector_store %arg10[%c2, %c0_69, %c0_70], %167 {strides = array<i32>} : memref<3x2x256xf32, #tpu.memory_space<vmem>>, vector<1x2x256xf32>,
    return
  }
}

</mosaic_0001>

<llo_original>
// kernel: tpu_custom_call.1
$region0: #{tpu_custom_call.1}
  #allocation0 [shape = 'u32[]', space=smem, size = 0x4, offset = 0x4, fixed_abs, tag = 'smem constant byte address 0x4 - core index']
  #allocation1 [shape = 'u32[144,128]{1,0:T(1,128)}', space=vmem, size = 0x12000, scoped, tag = 'internal scratch']
  %s0 = inlined_call_operand.hbm [shape: f32[2,256], index: 0, kind: input, shape index: {}]
  %s1 = inlined_call_operand.hbm [shape: f32[2,256], index: 1, kind: input, shape index: {}]
  %s2 = inlined_call_operand.vmem [shape: f32[2,256], index: 2, kind: input, shape index: {}]
  %s3 = inlined_call_operand.hbm [shape: bf16[256,512], index: 3, kind: input, shape index: {}]
  %s4 = inlined_call_operand.hbm [shape: f32[1,512], index: 4, kind: input, shape index: {}]
  %s5 = inlined_call_operand.hbm [shape: bf16[512,1024], index: 5, kind: input, shape index: {}]
  %s6 = inlined_call_operand.hbm [shape: bf16[256,1024], index: 6, kind: input, shape index: {}]
  %s7 = inlined_call_operand.vmem [shape: f32[1,1024], index: 7, kind: input, shape index: {}]
  %s8 = inlined_call_operand.hbm [shape: bf16[256,256], index: 8, kind: input, shape index: {}]
  %s9 = inlined_call_operand.vmem [shape: f32[1,256], index: 9, kind: input, shape index: {}]
  %s10 = inlined_call_operand.hbm [shape: f32[3,2,256], index: 10, kind: output, shape index: {0}]
  %s11 = inlined_call_operand.hbm [shape: f32[2,256], index: 11, kind: output, shape index: {1}]
  %s12 = inlined_call_operand.hbm [shape: f32[2,256], index: 12, kind: output, shape index: {2}]
  %13 = xla_tuple %s10, %s11, %s12
  %s14 = sld [smem:[#allocation0]]
  $region94: #{tpu_custom_call.1} parent=0
    _
  %s16 = ssub.s32 1, %s14
  %s17 = scalar_select 0, %s16, %s14
  $region1: #{tpu_custom_call.1} parent=0
    #allocation2 [shape = 'u8[2048]{0}', space=vmem, size = 0x800, scoped, tag = 'input window, operand 0, single buffered']
    #allocation3 [shape = 's32[1]{0}', space=sflag, size = 0x4, scoped, tag = 'scoped memory for tpu_custom_call.1']
    #allocation4 [shape = 's32[1]{0}', space=sflag, size = 0x4, scoped, tag = 'scoped memory for tpu_custom_call.1']
    #allocation5 [shape = 'u8[2048]{0}', space=vmem, size = 0x800, scoped, tag = 'input window, operand 1, single buffered']
    #allocation6 [shape = 's32[1]{0}', space=sflag, size = 0x4, scoped, tag = 'scoped memory for tpu_custom_call.1']
    #allocation7 [shape = 'u8[262144]{0}', space=vmem, size = 0x40000, scoped, tag = 'input window, operand 3, single buffered']
    #allocation8 [shape = 'u8[2048]{0}', space=vmem, size = 0x800, scoped, tag = 'input window, operand 4, single buffered']
    #allocation9 [shape = 's32[1]{0}', space=sflag, size = 0x4, scoped, tag = 'scoped memory for tpu_custom_call.1']
    #allocation10 [shape = 'u8[1048576]{0}', space=vmem, size = 0x100000, scoped, tag = 'input window, operand 5, single buffered']
    #allocation11 [shape = 'u8[524288]{0}', space=vmem, size = 0x80000, scoped, tag = 'input window, operand 6, single buffered']
    #allocation12 [shape = 's32[1]{0}', space=sflag, size = 0x4, scoped, tag = 'scoped memory for tpu_custom_call.1']
    #allocation13 [shape = 'u8[131072]{0}', space=vmem, size = 0x20000, scoped, tag = 'input window, operand 8, single buffered']
    #allocation14 [shape = 'u8[6144]{0}', space=vmem, size = 0x1800, scoped, tag = 'output window, operand 0, single buffered']
    #allocation15 [shape = 'u8[2048]{0}', space=vmem, size = 0x800, scoped, tag = 'output window, operand 1, single buffered']
    #allocation16 [shape = 's32[1]{0}', space=sflag, size = 0x4, scoped, tag = 'scoped memory for tpu_custom_call.1']
    #allocation17 [shape = 'u8[2048]{0}', space=vmem, size = 0x800, scoped, tag = 'output window, operand 2, single buffered']
    %18 = vsyncpa [#allocation3], 0
    %19 = vsyncpa [#allocation6], 0
    %20 = vsyncpa [#allocation9], 0
    %21 = vsyncpa [#allocation12], 0
    %22 = vsyncpa [#allocation4], 0
    %23 = vsyncpa [#allocation16], 0
    // Predicated region
    $region2: #{tpu_custom_call.1} parent=1 // pred_check
      _
    $region3: #{tpu_custom_call.1} parent=1 // pred_check_branch
      %25 = sbr.rel (0) target = $region5
    $region4: #{tpu_custom_call.1} parent=1 // pred_region
      %s27 = ssub.s32 64, 64
      %28 = vsyncadd [#allocation3], %s27
      %s30 = sshll.u32 [#allocation2], 4
      %s31 = int_to_ptr.vmem [resolvable:$true] %s30
      %33 = dma.hbm_to_vmem [thread:$0]  %s0, 64, %s31, [#allocation3]
    $region5: #{tpu_custom_call.1} parent=1 // pred_fallthru
      _
    // Predicated region
    $region6: #{tpu_custom_call.1} parent=1 // pred_check
      _
    $region7: #{tpu_custom_call.1} parent=1 // pred_check_branch
      %35 = sbr.rel (0) target = $region9
    $region8: #{tpu_custom_call.1} parent=1 // pred_region
      %s37 = ssub.s32 64, 64
      %38 = vsyncadd [#allocation6], %s37
      %s40 = sshll.u32 [#allocation5], 4
      %s41 = int_to_ptr.vmem [resolvable:$true] %s40
      %43 = dma.hbm_to_vmem [thread:$0]  %s1, 64, %s41, [#allocation6]
    $region9: #{tpu_custom_call.1} parent=1 // pred_fallthru
      _
    // Predicated region
    $region10: #{tpu_custom_call.1} parent=1 // pred_check
      _
    $region11: #{tpu_custom_call.1} parent=1 // pred_check_branch
      %45 = sbr.rel (0) target = $region13
    $region12: #{tpu_custom_call.1} parent=1 // pred_region
      _
    $region13: #{tpu_custom_call.1} parent=1 // pred_fallthru
      _
    // Predicated region
    $region14: #{tpu_custom_call.1} parent=1 // pred_check
      _
    $region15: #{tpu_custom_call.1} parent=1 // pred_check_branch
      %47 = sbr.rel (0) target = $region17
    $region16: #{tpu_custom_call.1} parent=1 // pred_region
      %s49 = ssub.s32 8192, 8192
      %50 = vsyncadd [#allocation6], %s49
      %s51 = sshll.u32 [#allocation7], 4
      %s52 = int_to_ptr.vmem [resolvable:$true] %s51
      %57 = dma.hbm_to_vmem [thread:$0]  %s3, 8192, %s52, [#allocation6], 256, 256, 16
    $region17: #{tpu_custom_call.1} parent=1 // pred_fallthru
      _
    // Predicated region
    $region18: #{tpu_custom_call.1} parent=1 // pred_check
      _
    $region19: #{tpu_custom_call.1} parent=1 // pred_check_branch
      %59 = sbr.rel (0) target = $region21
    $region20: #{tpu_custom_call.1} parent=1 // pred_region
      %s61 = ssub.s32 64, 64
      %62 = vsyncadd [#allocation9], %s61
      %s64 = sshll.u32 [#allocation8], 4
      %s65 = int_to_ptr.vmem [resolvable:$true] %s64
      %67 = dma.hbm_to_vmem [thread:$0]  %s4, 64, %s65, [#allocation9]
    $region21: #{tpu_custom_call.1} parent=1 // pred_fallthru
      _
    // Predicated region
    $region22: #{tpu_custom_call.1} parent=1 // pred_check
      _
    $region23: #{tpu_custom_call.1} parent=1 // pred_check_branch
      %69 = sbr.rel (0) target = $region25
    $region24: #{tpu_custom_call.1} parent=1 // pred_region
      %s71 = ssub.s32 32768, 32768
      %72 = vsyncadd [#allocation9], %s71
      %s73 = sshll.u32 [#allocation10], 4
      %s74 = int_to_ptr.vmem [resolvable:$true] %s73
      %79 = dma.hbm_to_vmem [thread:$0]  %s5, 32768, %s74, [#allocation9], 512, 512, 32
    $region25: #{tpu_custom_call.1} parent=1 // pred_fallthru
      _
    // Predicated region
    $region26: #{tpu_custom_call.1} parent=1 // pred_check
      _
    $region27: #{tpu_custom_call.1} parent=1 // pred_check_branch
      %81 = sbr.rel (0) target = $region29
    $region28: #{tpu_custom_call.1} parent=1 // pred_region
      %s83 = ssub.s32 16384, 16384
      %84 = vsyncadd [#allocation12], %s83
      %s85 = sshll.u32 [#allocation11], 4
      %s86 = int_to_ptr.vmem [resolvable:$true] %s85
      %91 = dma.hbm_to_vmem [thread:$0]  %s6, 16384, %s86, [#allocation12], 512, 512, 32
    $region29: #{tpu_custom_call.1} parent=1 // pred_fallthru
      _
    // Predicated region
    $region30: #{tpu_custom_call.1} parent=1 // pred_check
      _
    $region31: #{tpu_custom_call.1} parent=1 // pred_check_branch
      %93 = sbr.rel (0) target = $region33
    $region32: #{tpu_custom_call.1} parent=1 // pred_region
      _
    $region33: #{tpu_custom_call.1} parent=1 // pred_fallthru
      _
    // Predicated region
    $region34: #{tpu_custom_call.1} parent=1 // pred_check
      _
    $region35: #{tpu_custom_call.1} parent=1 // pred_check_branch
      %95 = sbr.rel (0) target = $region37
    $region36: #{tpu_custom_call.1} parent=1 // pred_region
      %s97 = ssub.s32 4096, 4096
      %98 = vsyncadd [#allocation12], %s97
      %s99 = sshll.u32 [#allocation13], 4
      %s100 = int_to_ptr.vmem [resolvable:$true] %s99
      %105 = dma.hbm_to_vmem [thread:$0]  %s8, 4096, %s100, [#allocation12], 128, 128, 8
    $region37: #{tpu_custom_call.1} parent=1 // pred_fallthru
      _
    // Predicated region
    $region38: #{tpu_custom_call.1} parent=1 // pred_check
      _
    $region39: #{tpu_custom_call.1} parent=1 // pred_check_branch
      %107 = sbr.rel (0) target = $region41
    $region40: #{tpu_custom_call.1} parent=1 // pred_region
      _
    $region41: #{tpu_custom_call.1} parent=1 // pred_fallthru
      _
    // Predicated region
    $region42: #{tpu_custom_call.1} parent=1 // pred_check
      _
    $region43: #{tpu_custom_call.1} parent=1 // pred_check_branch
      %109 = sbr.rel (0) target = $region45
    $region44: #{tpu_custom_call.1} parent=1 // pred_region
      %110 = dma.done [#allocation3], 64
    $region45: #{tpu_custom_call.1} parent=1 // pred_fallthru
      _
    // Predicated region
    $region46: #{tpu_custom_call.1} parent=1 // pred_check
      _
    $region47: #{tpu_custom_call.1} parent=1 // pred_check_branch
      %112 = sbr.rel (0) target = $region49
    $region48: #{tpu_custom_call.1} parent=1 // pred_region
      %113 = dma.done [#allocation6], 64
    $region49: #{tpu_custom_call.1} parent=1 // pred_fallthru
      _
    // Predicated region
    $region50: #{tpu_custom_call.1} parent=1 // pred_check
      _
    $region51: #{tpu_custom_call.1} parent=1 // pred_check_branch
      %115 = sbr.rel (0) target = $region53
    $region52: #{tpu_custom_call.1} parent=1 // pred_region
      %116 = dma.done [#allocation6], 8192
    $region53: #{tpu_custom_call.1} parent=1 // pred_fallthru
      _
    // Predicated region
    $region54: #{tpu_custom_call.1} parent=1 // pred_check
      _
    $region55: #{tpu_custom_call.1} parent=1 // pred_check_branch
      %118 = sbr.rel (0) target = $region57
    $region56: #{tpu_custom_call.1} parent=1 // pred_region
      %119 = dma.done [#allocation9], 64
    $region57: #{tpu_custom_call.1} parent=1 // pred_fallthru
      _
    // Predicated region
    $region58: #{tpu_custom_call.1} parent=1 // pred_check
      _
    $region59: #{tpu_custom_call.1} parent=1 // pred_check_branch
      %121 = sbr.rel (0) target = $region61
    $region60: #{tpu_custom_call.1} parent=1 // pred_region
      %122 = dma.done [#allocation9], 32768
    $region61: #{tpu_custom_call.1} parent=1 // pred_fallthru
      _
    // Predicated region
    $region62: #{tpu_custom_call.1} parent=1 // pred_check
      _
    $region63: #{tpu_custom_call.1} parent=1 // pred_check_branch
      %124 = sbr.rel (0) target = $region65
    $region64: #{tpu_custom_call.1} parent=1 // pred_region
      %125 = dma.done [#allocation12], 16384
    $region65: #{tpu_custom_call.1} parent=1 // pred_fallthru
      _
    // Predicated region
    $region66: #{tpu_custom_call.1} parent=1 // pred_check
      _
    $region67: #{tpu_custom_call.1} parent=1 // pred_check_branch
      %127 = sbr.rel (0) target = $region69
    $region68: #{tpu_custom_call.1} parent=1 // pred_region
      %128 = dma.done [#allocation12], 4096
    $region69: #{tpu_custom_call.1} parent=1 // pred_fallthru
      _
    %v129 = vld [vmem:[#allocation7] sm:$0xff]
    %v130 = vld [vmem:[#allocation7 + $0x8] sm:$0xff]
    %v131 = vld [vmem:[#allocation7 + $0x10] sm:$0xff]
    %v132 = vld [vmem:[#allocation7 + $0x18] sm:$0xff]
    %v133 = vld [vmem:[#allocation7 + $0x20] sm:$0xff]
    %v134 = vld [vmem:[#allocation7 + $0x28] sm:$0xff]
    %v135 = vld [vmem:[#allocation7 + $0x30] sm:$0xff]
    %v136 = vld [vmem:[#allocation7 + $0x38] sm:$0xff]
    %v137 = vld [vmem:[#allocation7 + $0x40] sm:$0xff]
    %v138 = vld [vmem:[#allocation7 + $0x48] sm:$0xff]
    %v139 = vld [vmem:[#allocation7 + $0x50] sm:$0xff]
    %v140 = vld [vmem:[#allocation7 + $0x58] sm:$0xff]
    %v141 = vld [vmem:[#allocation7 + $0x60] sm:$0xff]
    %v142 = vld [vmem:[#allocation7 + $0x68] sm:$0xff]
    %v143 = vld [vmem:[#allocation7 + $0x70] sm:$0xff]
    %v144 = vld [vmem:[#allocation7 + $0x78] sm:$0xff]
    %v145 = vld [vmem:[#allocation7 + $0x80] sm:$0xff]
    %v146 = vld [vmem:[#allocation7 + $0x88] sm:$0xff]
    %v147 = vld [vmem:[#allocation7 + $0x90] sm:$0xff]
    %v148 = vld [vmem:[#allocation7 + $0x98] sm:$0xff]
    %v149 = vld [vmem:[#allocation7 + $0xa0] sm:$0xff]
    %v150 = vld [vmem:[#allocation7 + $0xa8] sm:$0xff]
    %v151 = vld [vmem:[#allocation7 + $0xb0] sm:$0xff]
    %v152 = vld [vmem:[#allocation7 + $0xb8] sm:$0xff]
    %v153 = vld [vmem:[#allocation7 + $0xc0] sm:$0xff]
    %v154 = vld [vmem:[#allocation7 + $0xc8] sm:$0xff]
    %v155 = vld [vmem:[#allocation7 + $0xd0] sm:$0xff]
    %v156 = vld [vmem:[#allocation7 + $0xd8] sm:$0xff]
    %v157 = vld [vmem:[#allocation7 + $0xe0] sm:$0xff]
    %v158 = vld [vmem:[#allocation7 + $0xe8] sm:$0xff]
    %v159 = vld [vmem:[#allocation7 + $0xf0] sm:$0xff]
    %v160 = vld [vmem:[#allocation7 + $0xf8] sm:$0xff]
    %v161 = vld [vmem:[#allocation7 + $0x100] sm:$0xff]
    %v162 = vld [vmem:[#allocation7 + $0x108] sm:$0xff]
    %v163 = vld [vmem:[#allocation7 + $0x110] sm:$0xff]
    %v164 = vld [vmem:[#allocation7 + $0x118] sm:$0xff]
    %v165 = vld [vmem:[#allocation7 + $0x120] sm:$0xff]
    %v166 = vld [vmem:[#allocation7 + $0x128] sm:$0xff]
    %v167 = vld [vmem:[#allocation7 + $0x130] sm:$0xff]
    %v168 = vld [vmem:[#allocation7 + $0x138] sm:$0xff]
    %v169 = vld [vmem:[#allocation7 + $0x140] sm:$0xff]
    %v170 = vld [vmem:[#allocation7 + $0x148] sm:$0xff]
    %v171 = vld [vmem:[#allocation7 + $0x150] sm:$0xff]
    %v172 = vld [vmem:[#allocation7 + $0x158] sm:$0xff]
    %v173 = vld [vmem:[#allocation7 + $0x160] sm:$0xff]
    %v174 = vld [vmem:[#allocation7 + $0x168] sm:$0xff]
    %v175 = vld [vmem:[#allocation7 + $0x170] sm:$0xff]
    %v176 = vld [vmem:[#allocation7 + $0x178] sm:$0xff]
    %v177 = vld [vmem:[#allocation7 + $0x180] sm:$0xff]
    %v178 = vld [vmem:[#allocation7 + $0x188] sm:$0xff]
    %v179 = vld [vmem:[#allocation7 + $0x190] sm:$0xff]
    %v180 = vld [vmem:[#allocation7 + $0x198] sm:$0xff]
    %v181 = vld [vmem:[#allocation7 + $0x1a0] sm:$0xff]
    %v182 = vld [vmem:[#allocation7 + $0x1a8] sm:$0xff]
    %v183 = vld [vmem:[#allocation7 + $0x1b0] sm:$0xff]
    %v184 = vld [vmem:[#allocation7 + $0x1b8] sm:$0xff]
    %v185 = vld [vmem:[#allocation7 + $0x1c0] sm:$0xff]
    %v186 = vld [vmem:[#allocation7 + $0x1c8] sm:$0xff]
    %v187 = vld [vmem:[#allocation7 + $0x1d0] sm:$0xff]
    %v188 = vld [vmem:[#allocation7 + $0x1d8] sm:$0xff]
    %v189 = vld [vmem:[#allocation7 + $0x1e0] sm:$0xff]
    %v190 = vld [vmem:[#allocation7 + $0x1e8] sm:$0xff]
    %v191 = vld [vmem:[#allocation7 + $0x1f0] sm:$0xff]
    %v192 = vld [vmem:[#allocation7 + $0x1f8] sm:$0xff]
    %v193 = vld [vmem:[#allocation8] sm:$0xf]
    %v194 = vld [vmem:[#allocation10] sm:$0xff]
    %v195 = vld [vmem:[#allocation10 + $0x8] sm:$0xff]
    %v196 = vld [vmem:[#allocation10 + $0x10] sm:$0xff]
    %v197 = vld [vmem:[#allocation10 + $0x18] sm:$0xff]
    %v198 = vld [vmem:[#allocation10 + $0x20] sm:$0xff]
    %v199 = vld [vmem:[#allocation10 + $0x28] sm:$0xff]
    %v200 = vld [vmem:[#allocation10 + $0x30] sm:$0xff]
    %v201 = vld [vmem:[#allocation10 + $0x38] sm:$0xff]
    %v202 = vld [vmem:[#allocation10 + $0x40] sm:$0xff]
    %v203 = vld [vmem:[#allocation10 + $0x48] sm:$0xff]
    %v204 = vld [vmem:[#allocation10 + $0x50] sm:$0xff]
    %v205 = vld [vmem:[#allocation10 + $0x58] sm:$0xff]
    %v206 = vld [vmem:[#allocation10 + $0x60] sm:$0xff]
    %v207 = vld [vmem:[#allocation10 + $0x68] sm:$0xff]
    %v208 = vld [vmem:[#allocation10 + $0x70] sm:$0xff]
    %v209 = vld [vmem:[#allocation10 + $0x78] sm:$0xff]
    %v210 = vld [vmem:[#allocation10 + $0x80] sm:$0xff]
    %v211 = vld [vmem:[#allocation10 + $0x88] sm:$0xff]
    %v212 = vld [vmem:[#allocation10 + $0x90] sm:$0xff]
    %v213 = vld [vmem:[#allocation10 + $0x98] sm:$0xff]
    %v214 = vld [vmem:[#allocation10 + $0xa0] sm:$0xff]
    %v215 = vld [vmem:[#allocation10 + $0xa8] sm:$0xff]
    %v216 = vld [vmem:[#allocation10 + $0xb0] sm:$0xff]
    %v217 = vld [vmem:[#allocation10 + $0xb8] sm:$0xff]
    %v218 = vld [vmem:[#allocation10 + $0xc0] sm:$0xff]
    %v219 = vld [vmem:[#allocation10 + $0xc8] sm:$0xff]
    %v220 = vld [vmem:[#allocation10 + $0xd0] sm:$0xff]
    %v221 = vld [vmem:[#allocation10 + $0xd8] sm:$0xff]
    %v222 = vld [vmem:[#allocation10 + $0xe0] sm:$0xff]
    %v223 = vld [vmem:[#allocation10 + $0xe8] sm:$0xff]
    %v224 = vld [vmem:[#allocation10 + $0xf0] sm:$0xff]
    %v225 = vld [vmem:[#allocation10 + $0xf8] sm:$0xff]
    %v226 = vld [vmem:[#allocation10 + $0x100] sm:$0xff]
    %v227 = vld [vmem:[#allocation10 + $0x108] sm:$0xff]
    %v228 = vld [vmem:[#allocation10 + $0x110] sm:$0xff]
    %v229 = vld [vmem:[#allocation10 + $0x118] sm:$0xff]
    %v230 = vld [vmem:[#allocation10 + $0x120] sm:$0xff]
    %v231 = vld [vmem:[#allocation10 + $0x128] sm:$0xff]
    %v232 = vld [vmem:[#allocation10 + $0x130] sm:$0xff]
    %v233 = vld [vmem:[#allocation10 + $0x138] sm:$0xff]
    %v234 = vld [vmem:[#allocation10 + $0x140] sm:$0xff]
    %v235 = vld [vmem:[#allocation10 + $0x148] sm:$0xff]
    %v236 = vld [vmem:[#allocation10 + $0x150] sm:$0xff]
    %v237 = vld [vmem:[#allocation10 + $0x158] sm:$0xff]
    %v238 = vld [vmem:[#allocation10 + $0x160] sm:$0xff]
    %v239 = vld [vmem:[#allocation10 + $0x168] sm:$0xff]
    %v240 = vld [vmem:[#allocation10 + $0x170] sm:$0xff]
    %v241 = vld [vmem:[#allocation10 + $0x178] sm:$0xff]
    %v242 = vld [vmem:[#allocation10 + $0x180] sm:$0xff]
    %v243 = vld [vmem:[#allocation10 + $0x188] sm:$0xff]
    %v244 = vld [vmem:[#allocation10 + $0x190] sm:$0xff]
    %v245 = vld [vmem:[#allocation10 + $0x198] sm:$0xff]
    %v246 = vld [vmem:[#allocation10 + $0x1a0] sm:$0xff]
    %v247 = vld [vmem:[#allocation10 + $0x1a8] sm:$0xff]
    %v248 = vld [vmem:[#allocation10 + $0x1b0] sm:$0xff]
    %v249 = vld [vmem:[#allocation10 + $0x1b8] sm:$0xff]
    %v250 = vld [vmem:[#allocation10 + $0x1c0] sm:$0xff]
    %v251 = vld [vmem:[#allocation10 + $0x1c8] sm:$0xff]
    %v252 = vld [vmem:[#allocation10 + $0x1d0] sm:$0xff]
    %v253 = vld [vmem:[#allocation10 + $0x1d8] sm:$0xff]
    %v254 = vld [vmem:[#allocation10 + $0x1e0] sm:$0xff]
    %v255 = vld [vmem:[#allocation10 + $0x1e8] sm:$0xff]
    %v256 = vld [vmem:[#allocation10 + $0x1f0] sm:$0xff]
    %v257 = vld [vmem:[#allocation10 + $0x1f8] sm:$0xff]
    %v258 = vld [vmem:[#allocation10 + $0x200] sm:$0xff]
    %v259 = vld [vmem:[#allocation10 + $0x208] sm:$0xff]
    %v260 = vld [vmem:[#allocation10 + $0x210] sm:$0xff]
    %v261 = vld [vmem:[#allocation10 + $0x218] sm:$0xff]
    %v262 = vld [vmem:[#allocation10 + $0x220] sm:$0xff]
    %v263 = vld [vmem:[#allocation10 + $0x228] sm:$0xff]
    %v264 = vld [vmem:[#allocation10 + $0x230] sm:$0xff]
    %v265 = vld [vmem:[#allocation10 + $0x238] sm:$0xff]
    %v266 = vld [vmem:[#allocation10 + $0x240] sm:$0xff]
    %v267 = vld [vmem:[#allocation10 + $0x248] sm:$0xff]
    %v268 = vld [vmem:[#allocation10 + $0x250] sm:$0xff]
    %v269 = vld [vmem:[#allocation10 + $0x258] sm:$0xff]
    %v270 = vld [vmem:[#allocation10 + $0x260] sm:$0xff]
    %v271 = vld [vmem:[#allocation10 + $0x268] sm:$0xff]
    %v272 = vld [vmem:[#allocation10 + $0x270] sm:$0xff]
    %v273 = vld [vmem:[#allocation10 + $0x278] sm:$0xff]
    %v274 = vld [vmem:[#allocation10 + $0x280] sm:$0xff]
    %v275 = vld [vmem:[#allocation10 + $0x288] sm:$0xff]
    %v276 = vld [vmem:[#allocation10 + $0x290] sm:$0xff]
    %v277 = vld [vmem:[#allocation10 + $0x298] sm:$0xff]
    %v278 = vld [vmem:[#allocation10 + $0x2a0] sm:$0xff]
    %v279 = vld [vmem:[#allocation10 + $0x2a8] sm:$0xff]
    %v280 = vld [vmem:[#allocation10 + $0x2b0] sm:$0xff]
    %v281 = vld [vmem:[#allocation10 + $0x2b8] sm:$0xff]
    %v282 = vld [vmem:[#allocation10 + $0x2c0] sm:$0xff]
    %v283 = vld [vmem:[#allocation10 + $0x2c8] sm:$0xff]
    %v284 = vld [vmem:[#allocation10 + $0x2d0] sm:$0xff]
    %v285 = vld [vmem:[#allocation10 + $0x2d8] sm:$0xff]
    %v286 = vld [vmem:[#allocation10 + $0x2e0] sm:$0xff]
    %v287 = vld [vmem:[#allocation10 + $0x2e8] sm:$0xff]
    %v288 = vld [vmem:[#allocation10 + $0x2f0] sm:$0xff]
    %v289 = vld [vmem:[#allocation10 + $0x2f8] sm:$0xff]
    %v290 = vld [vmem:[#allocation10 + $0x300] sm:$0xff]
    %v291 = vld [vmem:[#allocation10 + $0x308] sm:$0xff]
    %v292 = vld [vmem:[#allocation10 + $0x310] sm:$0xff]
    %v293 = vld [vmem:[#allocation10 + $0x318] sm:$0xff]
    %v294 = vld [vmem:[#allocation10 + $0x320] sm:$0xff]
    %v295 = vld [vmem:[#allocation10 + $0x328] sm:$0xff]
    %v296 = vld [vmem:[#allocation10 + $0x330] sm:$0xff]
    %v297 = vld [vmem:[#allocation10 + $0x338] sm:$0xff]
    %v298 = vld [vmem:[#allocation10 + $0x340] sm:$0xff]
    %v299 = vld [vmem:[#allocation10 + $0x348] sm:$0xff]
    %v300 = vld [vmem:[#allocation10 + $0x350] sm:$0xff]
    %v301 = vld [vmem:[#allocation10 + $0x358] sm:$0xff]
    %v302 = vld [vmem:[#allocation10 + $0x360] sm:$0xff]
    %v303 = vld [vmem:[#allocation10 + $0x368] sm:$0xff]
    %v304 = vld [vmem:[#allocation10 + $0x370] sm:$0xff]
    %v305 = vld [vmem:[#allocation10 + $0x378] sm:$0xff]
    %v306 = vld [vmem:[#allocation10 + $0x380] sm:$0xff]
    %v307 = vld [vmem:[#allocation10 + $0x388] sm:$0xff]
    %v308 = vld [vmem:[#allocation10 + $0x390] sm:$0xff]
    %v309 = vld [vmem:[#allocation10 + $0x398] sm:$0xff]
    %v310 = vld [vmem:[#allocation10 + $0x3a0] sm:$0xff]
    %v311 = vld [vmem:[#allocation10 + $0x3a8] sm:$0xff]
    %v312 = vld [vmem:[#allocation10 + $0x3b0] sm:$0xff]
    %v313 = vld [vmem:[#allocation10 + $0x3b8] sm:$0xff]
    %v314 = vld [vmem:[#allocation10 + $0x3c0] sm:$0xff]
    %v315 = vld [vmem:[#allocation10 + $0x3c8] sm:$0xff]
    %v316 = vld [vmem:[#allocation10 + $0x3d0] sm:$0xff]
    %v317 = vld [vmem:[#allocation10 + $0x3d8] sm:$0xff]
    %v318 = vld [vmem:[#allocation10 + $0x3e0] sm:$0xff]
    %v319 = vld [vmem:[#allocation10 + $0x3e8] sm:$0xff]
    %v320 = vld [vmem:[#allocation10 + $0x3f0] sm:$0xff]
    %v321 = vld [vmem:[#allocation10 + $0x3f8] sm:$0xff]
    %v322 = vld [vmem:[#allocation10 + $0x400] sm:$0xff]
    %v323 = vld [vmem:[#allocation10 + $0x408] sm:$0xff]
    %v324 = vld [vmem:[#allocation10 + $0x410] sm:$0xff]
    %v325 = vld [vmem:[#allocation10 + $0x418] sm:$0xff]
    %v326 = vld [vmem:[#allocation10 + $0x420] sm:$0xff]
    %v327 = vld [vmem:[#allocation10 + $0x428] sm:$0xff]
    %v328 = vld [vmem:[#allocation10 + $0x430] sm:$0xff]
    %v329 = vld [vmem:[#allocation10 + $0x438] sm:$0xff]
    %v330 = vld [vmem:[#allocation10 + $0x440] sm:$0xff]
    %v331 = vld [vmem:[#allocation10 + $0x448] sm:$0xff]
    %v332 = vld [vmem:[#allocation10 + $0x450] sm:$0xff]
    %v333 = vld [vmem:[#allocation10 + $0x458] sm:$0xff]
    %v334 = vld [vmem:[#allocation10 + $0x460] sm:$0xff]
    %v335 = vld [vmem:[#allocation10 + $0x468] sm:$0xff]
    %v336 = vld [vmem:[#allocation10 + $0x470] sm:$0xff]
    %v337 = vld [vmem:[#allocation10 + $0x478] sm:$0xff]
    %v338 = vld [vmem:[#allocation10 + $0x480] sm:$0xff]
    %v339 = vld [vmem:[#allocation10 + $0x488] sm:$0xff]
    %v340 = vld [vmem:[#allocation10 + $0x490] sm:$0xff]
    %v341 = vld [vmem:[#allocation10 + $0x498] sm:$0xff]
    %v342 = vld [vmem:[#allocation10 + $0x4a0] sm:$0xff]
    %v343 = vld [vmem:[#allocation10 + $0x4a8] sm:$0xff]
    %v344 = vld [vmem:[#allocation10 + $0x4b0] sm:$0xff]
    %v345 = vld [vmem:[#allocation10 + $0x4b8] sm:$0xff]
    %v346 = vld [vmem:[#allocation10 + $0x4c0] sm:$0xff]
    %v347 = vld [vmem:[#allocation10 + $0x4c8] sm:$0xff]
    %v348 = vld [vmem:[#allocation10 + $0x4d0] sm:$0xff]
    %v349 = vld [vmem:[#allocation10 + $0x4d8] sm:$0xff]
    %v350 = vld [vmem:[#allocation10 + $0x4e0] sm:$0xff]
    %v351 = vld [vmem:[#allocation10 + $0x4e8] sm:$0xff]
    %v352 = vld [vmem:[#allocation10 + $0x4f0] sm:$0xff]
    %v353 = vld [vmem:[#allocation10 + $0x4f8] sm:$0xff]
    %v354 = vld [vmem:[#allocation10 + $0x500] sm:$0xff]
    %v355 = vld [vmem:[#allocation10 + $0x508] sm:$0xff]
    %v356 = vld [vmem:[#allocation10 + $0x510] sm:$0xff]
    %v357 = vld [vmem:[#allocation10 + $0x518] sm:$0xff]
    %v358 = vld [vmem:[#allocation10 + $0x520] sm:$0xff]
    %v359 = vld [vmem:[#allocation10 + $0x528] sm:$0xff]
    %v360 = vld [vmem:[#allocation10 + $0x530] sm:$0xff]
    %v361 = vld [vmem:[#allocation10 + $0x538] sm:$0xff]
    %v362 = vld [vmem:[#allocation10 + $0x540] sm:$0xff]
    %v363 = vld [vmem:[#allocation10 + $0x548] sm:$0xff]
    %v364 = vld [vmem:[#allocation10 + $0x550] sm:$0xff]
    %v365 = vld [vmem:[#allocation10 + $0x558] sm:$0xff]
    %v366 = vld [vmem:[#allocation10 + $0x560] sm:$0xff]
    %v367 = vld [vmem:[#allocation10 + $0x568] sm:$0xff]
    %v368 = vld [vmem:[#allocation10 + $0x570] sm:$0xff]
    %v369 = vld [vmem:[#allocation10 + $0x578] sm:$0xff]
    %v370 = vld [vmem:[#allocation10 + $0x580] sm:$0xff]
    %v371 = vld [vmem:[#allocation10 + $0x588] sm:$0xff]
    %v372 = vld [vmem:[#allocation10 + $0x590] sm:$0xff]
    %v373 = vld [vmem:[#allocation10 + $0x598] sm:$0xff]
    %v374 = vld [vmem:[#allocation10 + $0x5a0] sm:$0xff]
    %v375 = vld [vmem:[#allocation10 + $0x5a8] sm:$0xff]
    %v376 = vld [vmem:[#allocation10 + $0x5b0] sm:$0xff]
    %v377 = vld [vmem:[#allocation10 + $0x5b8] sm:$0xff]
    %v378 = vld [vmem:[#allocation10 + $0x5c0] sm:$0xff]
    %v379 = vld [vmem:[#allocation10 + $0x5c8] sm:$0xff]
    %v380 = vld [vmem:[#allocation10 + $0x5d0] sm:$0xff]
    %v381 = vld [vmem:[#allocation10 + $0x5d8] sm:$0xff]
    %v382 = vld [vmem:[#allocation10 + $0x5e0] sm:$0xff]
    %v383 = vld [vmem:[#allocation10 + $0x5e8] sm:$0xff]
    %v384 = vld [vmem:[#allocation10 + $0x5f0] sm:$0xff]
    %v385 = vld [vmem:[#allocation10 + $0x5f8] sm:$0xff]
    %v386 = vld [vmem:[#allocation10 + $0x600] sm:$0xff]
    %v387 = vld [vmem:[#allocation10 + $0x608] sm:$0xff]
    %v388 = vld [vmem:[#allocation10 + $0x610] sm:$0xff]
    %v389 = vld [vmem:[#allocation10 + $0x618] sm:$0xff]
    %v390 = vld [vmem:[#allocation10 + $0x620] sm:$0xff]
    %v391 = vld [vmem:[#allocation10 + $0x628] sm:$0xff]
    %v392 = vld [vmem:[#allocation10 + $0x630] sm:$0xff]
    %v393 = vld [vmem:[#allocation10 + $0x638] sm:$0xff]
    %v394 = vld [vmem:[#allocation10 + $0x640] sm:$0xff]
    %v395 = vld [vmem:[#allocation10 + $0x648] sm:$0xff]
    %v396 = vld [vmem:[#allocation10 + $0x650] sm:$0xff]
    %v397 = vld [vmem:[#allocation10 + $0x658] sm:$0xff]
    %v398 = vld [vmem:[#allocation10 + $0x660] sm:$0xff]
    %v399 = vld [vmem:[#allocation10 + $0x668] sm:$0xff]
    %v400 = vld [vmem:[#allocation10 + $0x670] sm:$0xff]
    %v401 = vld [vmem:[#allocation10 + $0x678] sm:$0xff]
    %v402 = vld [vmem:[#allocation10 + $0x680] sm:$0xff]
    %v403 = vld [vmem:[#allocation10 + $0x688] sm:$0xff]
    %v404 = vld [vmem:[#allocation10 + $0x690] sm:$0xff]
    %v405 = vld [vmem:[#allocation10 + $0x698] sm:$0xff]
    %v406 = vld [vmem:[#allocation10 + $0x6a0] sm:$0xff]
    %v407 = vld [vmem:[#allocation10 + $0x6a8] sm:$0xff]
    %v408 = vld [vmem:[#allocation10 + $0x6b0] sm:$0xff]
    %v409 = vld [vmem:[#allocation10 + $0x6b8] sm:$0xff]
    %v410 = vld [vmem:[#allocation10 + $0x6c0] sm:$0xff]
    %v411 = vld [vmem:[#allocation10 + $0x6c8] sm:$0xff]
    %v412 = vld [vmem:[#allocation10 + $0x6d0] sm:$0xff]
    %v413 = vld [vmem:[#allocation10 + $0x6d8] sm:$0xff]
    %v414 = vld [vmem:[#allocation10 + $0x6e0] sm:$0xff]
    %v415 = vld [vmem:[#allocation10 + $0x6e8] sm:$0xff]
    %v416 = vld [vmem:[#allocation10 + $0x6f0] sm:$0xff]
    %v417 = vld [vmem:[#allocation10 + $0x6f8] sm:$0xff]
    %v418 = vld [vmem:[#allocation10 + $0x700] sm:$0xff]
    %v419 = vld [vmem:[#allocation10 + $0x708] sm:$0xff]
    %v420 = vld [vmem:[#allocation10 + $0x710] sm:$0xff]
    %v421 = vld [vmem:[#allocation10 + $0x718] sm:$0xff]
    %v422 = vld [vmem:[#allocation10 + $0x720] sm:$0xff]
    %v423 = vld [vmem:[#allocation10 + $0x728] sm:$0xff]
    %v424 = vld [vmem:[#allocation10 + $0x730] sm:$0xff]
    %v425 = vld [vmem:[#allocation10 + $0x738] sm:$0xff]
    %v426 = vld [vmem:[#allocation10 + $0x740] sm:$0xff]
    %v427 = vld [vmem:[#allocation10 + $0x748] sm:$0xff]
    %v428 = vld [vmem:[#allocation10 + $0x750] sm:$0xff]
    %v429 = vld [vmem:[#allocation10 + $0x758] sm:$0xff]
    %v430 = vld [vmem:[#allocation10 + $0x760] sm:$0xff]
    %v431 = vld [vmem:[#allocation10 + $0x768] sm:$0xff]
    %v432 = vld [vmem:[#allocation10 + $0x770] sm:$0xff]
    %v433 = vld [vmem:[#allocation10 + $0x778] sm:$0xff]
    %v434 = vld [vmem:[#allocation10 + $0x780] sm:$0xff]
    %v435 = vld [vmem:[#allocation10 + $0x788] sm:$0xff]
    %v436 = vld [vmem:[#allocation10 + $0x790] sm:$0xff]
    %v437 = vld [vmem:[#allocation10 + $0x798] sm:$0xff]
    %v438 = vld [vmem:[#allocation10 + $0x7a0] sm:$0xff]
    %v439 = vld [vmem:[#allocation10 + $0x7a8] sm:$0xff]
    %v440 = vld [vmem:[#allocation10 + $0x7b0] sm:$0xff]
    %v441 = vld [vmem:[#allocation10 + $0x7b8] sm:$0xff]
    %v442 = vld [vmem:[#allocation10 + $0x7c0] sm:$0xff]
    %v443 = vld [vmem:[#allocation10 + $0x7c8] sm:$0xff]
    %v444 = vld [vmem:[#allocation10 + $0x7d0] sm:$0xff]
    %v445 = vld [vmem:[#allocation10 + $0x7d8] sm:$0xff]
    %v446 = vld [vmem:[#allocation10 + $0x7e0] sm:$0xff]
    %v447 = vld [vmem:[#allocation10 + $0x7e8] sm:$0xff]
    %v448 = vld [vmem:[#allocation10 + $0x7f0] sm:$0xff]
    %v449 = vld [vmem:[#allocation10 + $0x7f8] sm:$0xff]
    %v450 = vld [vmem:[#allocation11] sm:$0xff]
    %v451 = vld [vmem:[#allocation11 + $0x8] sm:$0xff]
    %v452 = vld [vmem:[#allocation11 + $0x10] sm:$0xff]
    %v453 = vld [vmem:[#allocation11 + $0x18] sm:$0xff]
    %v454 = vld [vmem:[#allocation11 + $0x20] sm:$0xff]
    %v455 = vld [vmem:[#allocation11 + $0x28] sm:$0xff]
    %v456 = vld [vmem:[#allocation11 + $0x30] sm:$0xff]
    %v457 = vld [vmem:[#allocation11 + $0x38] sm:$0xff]
    %v458 = vld [vmem:[#allocation11 + $0x40] sm:$0xff]
    %v459 = vld [vmem:[#allocation11 + $0x48] sm:$0xff]
    %v460 = vld [vmem:[#allocation11 + $0x50] sm:$0xff]
    %v461 = vld [vmem:[#allocation11 + $0x58] sm:$0xff]
    %v462 = vld [vmem:[#allocation11 + $0x60] sm:$0xff]
    %v463 = vld [vmem:[#allocation11 + $0x68] sm:$0xff]
    %v464 = vld [vmem:[#allocation11 + $0x70] sm:$0xff]
    %v465 = vld [vmem:[#allocation11 + $0x78] sm:$0xff]
    %v466 = vld [vmem:[#allocation11 + $0x80] sm:$0xff]
    %v467 = vld [vmem:[#allocation11 + $0x88] sm:$0xff]
    %v468 = vld [vmem:[#allocation11 + $0x90] sm:$0xff]
    %v469 = vld [vmem:[#allocation11 + $0x98] sm:$0xff]
    %v470 = vld [vmem:[#allocation11 + $0xa0] sm:$0xff]
    %v471 = vld [vmem:[#allocation11 + $0xa8] sm:$0xff]
    %v472 = vld [vmem:[#allocation11 + $0xb0] sm:$0xff]
    %v473 = vld [vmem:[#allocation11 + $0xb8] sm:$0xff]
    %v474 = vld [vmem:[#allocation11 + $0xc0] sm:$0xff]
    %v475 = vld [vmem:[#allocation11 + $0xc8] sm:$0xff]
    %v476 = vld [vmem:[#allocation11 + $0xd0] sm:$0xff]
    %v477 = vld [vmem:[#allocation11 + $0xd8] sm:$0xff]
    %v478 = vld [vmem:[#allocation11 + $0xe0] sm:$0xff]
    %v479 = vld [vmem:[#allocation11 + $0xe8] sm:$0xff]
    %v480 = vld [vmem:[#allocation11 + $0xf0] sm:$0xff]
    %v481 = vld [vmem:[#allocation11 + $0xf8] sm:$0xff]
    %v482 = vld [vmem:[#allocation11 + $0x100] sm:$0xff]
    %v483 = vld [vmem:[#allocation11 + $0x108] sm:$0xff]
    %v484 = vld [vmem:[#allocation11 + $0x110] sm:$0xff]
    %v485 = vld [vmem:[#allocation11 + $0x118] sm:$0xff]
    %v486 = vld [vmem:[#allocation11 + $0x120] sm:$0xff]
    %v487 = vld [vmem:[#allocation11 + $0x128] sm:$0xff]
    %v488 = vld [vmem:[#allocation11 + $0x130] sm:$0xff]
    %v489 = vld [vmem:[#allocation11 + $0x138] sm:$0xff]
    %v490 = vld [vmem:[#allocation11 + $0x140] sm:$0xff]
    %v491 = vld [vmem:[#allocation11 + $0x148] sm:$0xff]
    %v492 = vld [vmem:[#allocation11 + $0x150] sm:$0xff]
    %v493 = vld [vmem:[#allocation11 + $0x158] sm:$0xff]
    %v494 = vld [vmem:[#allocation11 + $0x160] sm:$0xff]
    %v495 = vld [vmem:[#allocation11 + $0x168] sm:$0xff]
    %v496 = vld [vmem:[#allocation11 + $0x170] sm:$0xff]
    %v497 = vld [vmem:[#allocation11 + $0x178] sm:$0xff]
    %v498 = vld [vmem:[#allocation11 + $0x180] sm:$0xff]
    %v499 = vld [vmem:[#allocation11 + $0x188] sm:$0xff]
    %v500 = vld [vmem:[#allocation11 + $0x190] sm:$0xff]
    %v501 = vld [vmem:[#allocation11 + $0x198] sm:$0xff]
    %v502 = vld [vmem:[#allocation11 + $0x1a0] sm:$0xff]
    %v503 = vld [vmem:[#allocation11 + $0x1a8] sm:$0xff]
    %v504 = vld [vmem:[#allocation11 + $0x1b0] sm:$0xff]
    %v505 = vld [vmem:[#allocation11 + $0x1b8] sm:$0xff]
    %v506 = vld [vmem:[#allocation11 + $0x1c0] sm:$0xff]
    %v507 = vld [vmem:[#allocation11 + $0x1c8] sm:$0xff]
    %v508 = vld [vmem:[#allocation11 + $0x1d0] sm:$0xff]
    %v509 = vld [vmem:[#allocation11 + $0x1d8] sm:$0xff]
    %v510 = vld [vmem:[#allocation11 + $0x1e0] sm:$0xff]
    %v511 = vld [vmem:[#allocation11 + $0x1e8] sm:$0xff]
    %v512 = vld [vmem:[#allocation11 + $0x1f0] sm:$0xff]
    %v513 = vld [vmem:[#allocation11 + $0x1f8] sm:$0xff]
    %v514 = vld [vmem:[#allocation11 + $0x200] sm:$0xff]
    %v515 = vld [vmem:[#allocation11 + $0x208] sm:$0xff]
    %v516 = vld [vmem:[#allocation11 + $0x210] sm:$0xff]
    %v517 = vld [vmem:[#allocation11 + $0x218] sm:$0xff]
    %v518 = vld [vmem:[#allocation11 + $0x220] sm:$0xff]
    %v519 = vld [vmem:[#allocation11 + $0x228] sm:$0xff]
    %v520 = vld [vmem:[#allocation11 + $0x230] sm:$0xff]
    %v521 = vld [vmem:[#allocation11 + $0x238] sm:$0xff]
    %v522 = vld [vmem:[#allocation11 + $0x240] sm:$0xff]
    %v523 = vld [vmem:[#allocation11 + $0x248] sm:$0xff]
    %v524 = vld [vmem:[#allocation11 + $0x250] sm:$0xff]
    %v525 = vld [vmem:[#allocation11 + $0x258] sm:$0xff]
    %v526 = vld [vmem:[#allocation11 + $0x260] sm:$0xff]
    %v527 = vld [vmem:[#allocation11 + $0x268] sm:$0xff]
    %v528 = vld [vmem:[#allocation11 + $0x270] sm:$0xff]
    %v529 = vld [vmem:[#allocation11 + $0x278] sm:$0xff]
    %v530 = vld [vmem:[#allocation11 + $0x280] sm:$0xff]
    %v531 = vld [vmem:[#allocation11 + $0x288] sm:$0xff]
    %v532 = vld [vmem:[#allocation11 + $0x290] sm:$0xff]
    %v533 = vld [vmem:[#allocation11 + $0x298] sm:$0xff]
    %v534 = vld [vmem:[#allocation11 + $0x2a0] sm:$0xff]
    %v535 = vld [vmem:[#allocation11 + $0x2a8] sm:$0xff]
    %v536 = vld [vmem:[#allocation11 + $0x2b0] sm:$0xff]
    %v537 = vld [vmem:[#allocation11 + $0x2b8] sm:$0xff]
    %v538 = vld [vmem:[#allocation11 + $0x2c0] sm:$0xff]
    %v539 = vld [vmem:[#allocation11 + $0x2c8] sm:$0xff]
    %v540 = vld [vmem:[#allocation11 + $0x2d0] sm:$0xff]
    %v541 = vld [vmem:[#allocation11 + $0x2d8] sm:$0xff]
    %v542 = vld [vmem:[#allocation11 + $0x2e0] sm:$0xff]
    %v543 = vld [vmem:[#allocation11 + $0x2e8] sm:$0xff]
    %v544 = vld [vmem:[#allocation11 + $0x2f0] sm:$0xff]
    %v545 = vld [vmem:[#allocation11 + $0x2f8] sm:$0xff]
    %v546 = vld [vmem:[#allocation11 + $0x300] sm:$0xff]
    %v547 = vld [vmem:[#allocation11 + $0x308] sm:$0xff]
    %v548 = vld [vmem:[#allocation11 + $0x310] sm:$0xff]
    %v549 = vld [vmem:[#allocation11 + $0x318] sm:$0xff]
    %v550 = vld [vmem:[#allocation11 + $0x320] sm:$0xff]
    %v551 = vld [vmem:[#allocation11 + $0x328] sm:$0xff]
    %v552 = vld [vmem:[#allocation11 + $0x330] sm:$0xff]
    %v553 = vld [vmem:[#allocation11 + $0x338] sm:$0xff]
    %v554 = vld [vmem:[#allocation11 + $0x340] sm:$0xff]
    %v555 = vld [vmem:[#allocation11 + $0x348] sm:$0xff]
    %v556 = vld [vmem:[#allocation11 + $0x350] sm:$0xff]
    %v557 = vld [vmem:[#allocation11 + $0x358] sm:$0xff]
    %v558 = vld [vmem:[#allocation11 + $0x360] sm:$0xff]
    %v559 = vld [vmem:[#allocation11 + $0x368] sm:$0xff]
    %v560 = vld [vmem:[#allocation11 + $0x370] sm:$0xff]
    %v561 = vld [vmem:[#allocation11 + $0x378] sm:$0xff]
    %v562 = vld [vmem:[#allocation11 + $0x380] sm:$0xff]
    %v563 = vld [vmem:[#allocation11 + $0x388] sm:$0xff]
    %v564 = vld [vmem:[#allocation11 + $0x390] sm:$0xff]
    %v565 = vld [vmem:[#allocation11 + $0x398] sm:$0xff]
    %v566 = vld [vmem:[#allocation11 + $0x3a0] sm:$0xff]
    %v567 = vld [vmem:[#allocation11 + $0x3a8] sm:$0xff]
    %v568 = vld [vmem:[#allocation11 + $0x3b0] sm:$0xff]
    %v569 = vld [vmem:[#allocation11 + $0x3b8] sm:$0xff]
    %v570 = vld [vmem:[#allocation11 + $0x3c0] sm:$0xff]
    %v571 = vld [vmem:[#allocation11 + $0x3c8] sm:$0xff]
    %v572 = vld [vmem:[#allocation11 + $0x3d0] sm:$0xff]
    %v573 = vld [vmem:[#allocation11 + $0x3d8] sm:$0xff]
    %v574 = vld [vmem:[#allocation11 + $0x3e0] sm:$0xff]
    %v575 = vld [vmem:[#allocation11 + $0x3e8] sm:$0xff]
    %v576 = vld [vmem:[#allocation11 + $0x3f0] sm:$0xff]
    %v577 = vld [vmem:[#allocation11 + $0x3f8] sm:$0xff]
    %v578 = vld [vmem:[%s7] sm:$0xff]
    %v579 = vld [vmem:[#allocation13] sm:$0xff]
    %v580 = vld [vmem:[#allocation13 + $0x8] sm:$0xff]
    %v581 = vld [vmem:[#allocation13 + $0x10] sm:$0xff]
    %v582 = vld [vmem:[#allocation13 + $0x18] sm:$0xff]
    %v583 = vld [vmem:[#allocation13 + $0x20] sm:$0xff]
    %v584 = vld [vmem:[#allocation13 + $0x28] sm:$0xff]
    %v585 = vld [vmem:[#allocation13 + $0x30] sm:$0xff]
    %v586 = vld [vmem:[#allocation13 + $0x38] sm:$0xff]
    %v587 = vld [vmem:[#allocation13 + $0x40] sm:$0xff]
    %v588 = vld [vmem:[#allocation13 + $0x48] sm:$0xff]
    %v589 = vld [vmem:[#allocation13 + $0x50] sm:$0xff]
    %v590 = vld [vmem:[#allocation13 + $0x58] sm:$0xff]
    %v591 = vld [vmem:[#allocation13 + $0x60] sm:$0xff]
    %v592 = vld [vmem:[#allocation13 + $0x68] sm:$0xff]
    %v593 = vld [vmem:[#allocation13 + $0x70] sm:$0xff]
    %v594 = vld [vmem:[#allocation13 + $0x78] sm:$0xff]
    %v595 = vld [vmem:[#allocation13 + $0x80] sm:$0xff]
    %v596 = vld [vmem:[#allocation13 + $0x88] sm:$0xff]
    %v597 = vld [vmem:[#allocation13 + $0x90] sm:$0xff]
    %v598 = vld [vmem:[#allocation13 + $0x98] sm:$0xff]
    %v599 = vld [vmem:[#allocation13 + $0xa0] sm:$0xff]
    %v600 = vld [vmem:[#allocation13 + $0xa8] sm:$0xff]
    %v601 = vld [vmem:[#allocation13 + $0xb0] sm:$0xff]
    %v602 = vld [vmem:[#allocation13 + $0xb8] sm:$0xff]
    %v603 = vld [vmem:[#allocation13 + $0xc0] sm:$0xff]
    %v604 = vld [vmem:[#allocation13 + $0xc8] sm:$0xff]
    %v605 = vld [vmem:[#allocation13 + $0xd0] sm:$0xff]
    %v606 = vld [vmem:[#allocation13 + $0xd8] sm:$0xff]
    %v607 = vld [vmem:[#allocation13 + $0xe0] sm:$0xff]
    %v608 = vld [vmem:[#allocation13 + $0xe8] sm:$0xff]
    %v609 = vld [vmem:[#allocation13 + $0xf0] sm:$0xff]
    %v610 = vld [vmem:[#allocation13 + $0xf8] sm:$0xff]
    %v611 = vld [vmem:[%s9] sm:$0x3]
    %v612 = vld [vmem:[#allocation2] sm:$0xf]
    %v613 = vld [vmem:[#allocation5] sm:$0xf]
    %v614 = vld [vmem:[%s2] sm:$0xf]
    %v617 = vunpack.c.l.s4 1983009808
    %v618 = vunpack.c.0.s8 %v617
    %v619 = vlaneseq
    %v620 = vshrl.u32 %v619, 7
    %v621 = vsub.s32 %v618, %v620
    %v622 = vrot.slane %v612, %v621
    %v623 = vcombine.high %v622, %v622
    %v626 = vpack.c.bf16 %v622, %v622
    %v627 = vpack.c.bf16 %v623, %v623
    %v629 = vlaneseq
    %v630 = vshrl.u32 %v629, 7
    %v631 = vsub.s32 0, %v630
    %v632 = vrot.slane %v193, %v631
    %v633 = vlaneseq
    %v634 = vshrl.u32 %v633, 7
    %v635 = vsub.s32 1, %v634
    %v636 = vrot.slane %v193, %v635
    %v637 = vlaneseq
    %v638 = vshrl.u32 %v637, 7
    %v639 = vsub.s32 2, %v638
    %v640 = vrot.slane %v193, %v639
    %v641 = vlaneseq
    %v642 = vshrl.u32 %v641, 7
    %v643 = vsub.s32 3, %v642
    %v644 = vrot.slane %v193, %v643
    %v713 = vunpack.c.l.b16 %v129
    %v714 = vunpack.c.h.b16 %v129
    %v715 = vunpack.c.l.b16 %v130
    %v716 = vunpack.c.h.b16 %v130
    %v717 = vunpack.c.l.b16 %v131
    %v718 = vunpack.c.h.b16 %v131
    %v719 = vunpack.c.l.b16 %v132
    %v720 = vunpack.c.h.b16 %v132
    %v721 = vunpack.c.l.b16 %v133
    %v722 = vunpack.c.h.b16 %v133
    %v723 = vunpack.c.l.b16 %v134
    %v724 = vunpack.c.h.b16 %v134
    %v725 = vunpack.c.l.b16 %v135
    %v726 = vunpack.c.h.b16 %v135
    %v727 = vunpack.c.l.b16 %v136
    %v728 = vunpack.c.h.b16 %v136
    %v729 = vunpack.c.l.b16 %v137
    %v730 = vunpack.c.h.b16 %v137
    %v731 = vunpack.c.l.b16 %v138
    %v732 = vunpack.c.h.b16 %v138
    %v733 = vunpack.c.l.b16 %v139
    %v734 = vunpack.c.h.b16 %v139
    %v735 = vunpack.c.l.b16 %v140
    %v736 = vunpack.c.h.b16 %v140
    %v737 = vunpack.c.l.b16 %v141
    %v738 = vunpack.c.h.b16 %v141
    %v739 = vunpack.c.l.b16 %v142
    %v740 = vunpack.c.h.b16 %v142
    %v741 = vunpack.c.l.b16 %v143
    %v742 = vunpack.c.h.b16 %v143
    %v743 = vunpack.c.l.b16 %v144
    %v744 = vunpack.c.h.b16 %v144
    %v745 = vunpack.c.l.b16 %v145
    %v746 = vunpack.c.h.b16 %v145
    %v747 = vunpack.c.l.b16 %v146
    %v748 = vunpack.c.h.b16 %v146
    %v749 = vunpack.c.l.b16 %v147
    %v750 = vunpack.c.h.b16 %v147
    %v751 = vunpack.c.l.b16 %v148
    %v752 = vunpack.c.h.b16 %v148
    %v753 = vunpack.c.l.b16 %v149
    %v754 = vunpack.c.h.b16 %v149
    %v755 = vunpack.c.l.b16 %v150
    %v756 = vunpack.c.h.b16 %v150
    %v757 = vunpack.c.l.b16 %v151
    %v758 = vunpack.c.h.b16 %v151
    %v759 = vunpack.c.l.b16 %v152
    %v760 = vunpack.c.h.b16 %v152
    %v761 = vunpack.c.l.b16 %v153
    %v762 = vunpack.c.h.b16 %v153
    %v763 = vunpack.c.l.b16 %v154
    %v764 = vunpack.c.h.b16 %v154
    %v765 = vunpack.c.l.b16 %v155
    %v766 = vunpack.c.h.b16 %v155
    %v767 = vunpack.c.l.b16 %v156
    %v768 = vunpack.c.h.b16 %v156
    %v769 = vunpack.c.l.b16 %v157
    %v770 = vunpack.c.h.b16 %v157
    %v771 = vunpack.c.l.b16 %v158
    %v772 = vunpack.c.h.b16 %v158
    %v773 = vunpack.c.l.b16 %v159
    %v774 = vunpack.c.h.b16 %v159
    %v775 = vunpack.c.l.b16 %v160
    %v776 = vunpack.c.h.b16 %v160
    %v777 = vunpack.c.l.b16 %v161
    %v778 = vunpack.c.h.b16 %v161
    %v779 = vunpack.c.l.b16 %v162
    %v780 = vunpack.c.h.b16 %v162
    %v781 = vunpack.c.l.b16 %v163
    %v782 = vunpack.c.h.b16 %v163
    %v783 = vunpack.c.l.b16 %v164
    %v784 = vunpack.c.h.b16 %v164
    %v785 = vunpack.c.l.b16 %v165
    %v786 = vunpack.c.h.b16 %v165
    %v787 = vunpack.c.l.b16 %v166
    %v788 = vunpack.c.h.b16 %v166
    %v789 = vunpack.c.l.b16 %v167
    %v790 = vunpack.c.h.b16 %v167
    %v791 = vunpack.c.l.b16 %v168
    %v792 = vunpack.c.h.b16 %v168
    %v793 = vunpack.c.l.b16 %v169
    %v794 = vunpack.c.h.b16 %v169
    %v795 = vunpack.c.l.b16 %v170
    %v796 = vunpack.c.h.b16 %v170
    %v797 = vunpack.c.l.b16 %v171
    %v798 = vunpack.c.h.b16 %v171
    %v799 = vunpack.c.l.b16 %v172
    %v800 = vunpack.c.h.b16 %v172
    %v801 = vunpack.c.l.b16 %v173
    %v802 = vunpack.c.h.b16 %v173
    %v803 = vunpack.c.l.b16 %v174
    %v804 = vunpack.c.h.b16 %v174
    %v805 = vunpack.c.l.b16 %v175
    %v806 = vunpack.c.h.b16 %v175
    %v807 = vunpack.c.l.b16 %v176
    %v808 = vunpack.c.h.b16 %v176
    %v809 = vunpack.c.l.b16 %v177
    %v810 = vunpack.c.h.b16 %v177
    %v811 = vunpack.c.l.b16 %v178
    %v812 = vunpack.c.h.b16 %v178
    %v813 = vunpack.c.l.b16 %v179
    %v814 = vunpack.c.h.b16 %v179
    %v815 = vunpack.c.l.b16 %v180
    %v816 = vunpack.c.h.b16 %v180
    %v817 = vunpack.c.l.b16 %v181
    %v818 = vunpack.c.h.b16 %v181
    %v819 = vunpack.c.l.b16 %v182
    %v820 = vunpack.c.h.b16 %v182
    %v821 = vunpack.c.l.b16 %v183
    %v822 = vunpack.c.h.b16 %v183
    %v823 = vunpack.c.l.b16 %v184
    %v824 = vunpack.c.h.b16 %v184
    %v825 = vunpack.c.l.b16 %v185
    %v826 = vunpack.c.h.b16 %v185
    %v827 = vunpack.c.l.b16 %v186
    %v828 = vunpack.c.h.b16 %v186
    %v829 = vunpack.c.l.b16 %v187
    %v830 = vunpack.c.h.b16 %v187
    %v831 = vunpack.c.l.b16 %v188
    %v832 = vunpack.c.h.b16 %v188
    %v833 = vunpack.c.l.b16 %v189
    %v834 = vunpack.c.h.b16 %v189
    %v835 = vunpack.c.l.b16 %v190
    %v836 = vunpack.c.h.b16 %v190
    %v837 = vunpack.c.l.b16 %v191
    %v838 = vunpack.c.h.b16 %v191
    %v839 = vunpack.c.l.b16 %v192
    %v840 = vunpack.c.h.b16 %v192
    %v841 = vpack.c.b16 %v717, %v713
    %v842 = vpack.c.b16 %v718, %v714
    %v843 = vpack.c.b16 %v719, %v715
    %v844 = vpack.c.b16 %v720, %v716
    %v845 = vpack.c.b16 %v725, %v721
    %v846 = vpack.c.b16 %v726, %v722
    %v847 = vpack.c.b16 %v727, %v723
    %v848 = vpack.c.b16 %v728, %v724
    %v849 = vpack.c.b16 %v733, %v729
    %v850 = vpack.c.b16 %v734, %v730
    %v851 = vpack.c.b16 %v735, %v731
    %v852 = vpack.c.b16 %v736, %v732
    %v853 = vpack.c.b16 %v741, %v737
    %v854 = vpack.c.b16 %v742, %v738
    %v855 = vpack.c.b16 %v743, %v739
    %v856 = vpack.c.b16 %v744, %v740
    %v857 = vpack.c.b16 %v749, %v745
    %v858 = vpack.c.b16 %v750, %v746
    %v859 = vpack.c.b16 %v751, %v747
    %v860 = vpack.c.b16 %v752, %v748
    %v861 = vpack.c.b16 %v757, %v753
    %v862 = vpack.c.b16 %v758, %v754
    %v863 = vpack.c.b16 %v759, %v755
    %v864 = vpack.c.b16 %v760, %v756
    %v865 = vpack.c.b16 %v765, %v761
    %v866 = vpack.c.b16 %v766, %v762
    %v867 = vpack.c.b16 %v767, %v763
    %v868 = vpack.c.b16 %v768, %v764
    %v869 = vpack.c.b16 %v773, %v769
    %v870 = vpack.c.b16 %v774, %v770
    %v871 = vpack.c.b16 %v775, %v771
    %v872 = vpack.c.b16 %v776, %v772
    %v873 = vpack.c.b16 %v781, %v777
    %v874 = vpack.c.b16 %v782, %v778
    %v875 = vpack.c.b16 %v783, %v779
    %v876 = vpack.c.b16 %v784, %v780
    %v877 = vpack.c.b16 %v789, %v785
    %v878 = vpack.c.b16 %v790, %v786
    %v879 = vpack.c.b16 %v791, %v787
    %v880 = vpack.c.b16 %v792, %v788
    %v881 = vpack.c.b16 %v797, %v793
    %v882 = vpack.c.b16 %v798, %v794
    %v883 = vpack.c.b16 %v799, %v795
    %v884 = vpack.c.b16 %v800, %v796
    %v885 = vpack.c.b16 %v805, %v801
    %v886 = vpack.c.b16 %v806, %v802
    %v887 = vpack.c.b16 %v807, %v803
    %v888 = vpack.c.b16 %v808, %v804
    %v889 = vpack.c.b16 %v813, %v809
    %v890 = vpack.c.b16 %v814, %v810
    %v891 = vpack.c.b16 %v815, %v811
    %v892 = vpack.c.b16 %v816, %v812
    %v893 = vpack.c.b16 %v821, %v817
    %v894 = vpack.c.b16 %v822, %v818
    %v895 = vpack.c.b16 %v823, %v819
    %v896 = vpack.c.b16 %v824, %v820
    %v897 = vpack.c.b16 %v829, %v825
    %v898 = vpack.c.b16 %v830, %v826
    %v899 = vpack.c.b16 %v831, %v827
    %v900 = vpack.c.b16 %v832, %v828
    %v901 = vpack.c.b16 %v837, %v833
    %v902 = vpack.c.b16 %v838, %v834
    %v903 = vpack.c.b16 %v839, %v835
    %v904 = vpack.c.b16 %v840, %v836
    %969 = vmatprep.subr.bf16.mxu0 %v842
    %970 = vmatpush1.bf16.msra.mxu0 %v841
    %971 = vmatprep.subr.bf16.mxu0 %v846
    %972 = vmatpush1.bf16.msra.mxu0 %v845
    %973 = vmatprep.subr.bf16.mxu0 %v850
    %974 = vmatpush1.bf16.msra.mxu0 %v849
    %975 = vmatprep.subr.bf16.mxu0 %v854
    %976 = vmatpush1.bf16.msra.mxu0 %v853
    %977 = vmatprep.subr.bf16.mxu0 %v858
    %978 = vmatpush1.bf16.msra.mxu0 %v857
    %979 = vmatprep.subr.bf16.mxu0 %v862
    %980 = vmatpush1.bf16.msra.mxu0 %v861
    %981 = vmatprep.subr.bf16.mxu0 %v866
    %982 = vmatpush1.bf16.msra.mxu0 %v865
    %983 = vmatprep.subr.bf16.mxu0 %v870
    %984 = vmatpush1.bf16.msra.mxu0 %v869
    %985 = vmatprep.subr.bf16.mxu0 %v874
    %986 = vmatpush1.bf16.msra.mxu0 %v873
    %987 = vmatprep.subr.bf16.mxu0 %v878
    %988 = vmatpush1.bf16.msra.mxu0 %v877
    %989 = vmatprep.subr.bf16.mxu0 %v882
    %990 = vmatpush1.bf16.msra.mxu0 %v881
    %991 = vmatprep.subr.bf16.mxu0 %v886
    %992 = vmatpush1.bf16.msra.mxu0 %v885
    %993 = vmatprep.subr.bf16.mxu0 %v890
    %994 = vmatpush1.bf16.msra.mxu0 %v889
    %995 = vmatprep.subr.bf16.mxu0 %v894
    %996 = vmatpush1.bf16.msra.mxu0 %v893
    %997 = vmatprep.subr.bf16.mxu0 %v898
    %998 = vmatpush1.bf16.msra.mxu0 %v897
    %999 = vmatprep.subr.bf16.mxu0 %v902
    %1000 = vmatpush1.bf16.msra.mxu0 %v901
    %1001 = vmatprep.mubr.bf16.mxu0 %v627
    %1002 = vmatmul.mubr.bf16.gmra.mrb[0].mxu0 %v626
    %v1003 = vpop.f32.mrb[0].mxu0
    %v1004 = vadd.f32 %v632, %v1003
    %v1005 = vpop.f32.mrb[0].mxu0
    %v1006 = vadd.f32 %v636, %v1005
    %v1007 = vpop.f32.mrb[0].mxu0
    %v1008 = vpop.f32.mrb[0].mxu0
    %1009 = vdwg.mxu0
    %1010 = vmatprep.subr.bf16.mxu0 %v844
    %1011 = vmatpush1.bf16.msra.mxu0 %v843
    %1012 = vmatprep.subr.bf16.mxu0 %v848
    %1013 = vmatpush1.bf16.msra.mxu0 %v847
    %1014 = vmatprep.subr.bf16.mxu0 %v852
    %1015 = vmatpush1.bf16.msra.mxu0 %v851
    %1016 = vmatprep.subr.bf16.mxu0 %v856
    %1017 = vmatpush1.bf16.msra.mxu0 %v855
    %1018 = vmatprep.subr.bf16.mxu0 %v860
    %1019 = vmatpush1.bf16.msra.mxu0 %v859
    %1020 = vmatprep.subr.bf16.mxu0 %v864
    %1021 = vmatpush1.bf16.msra.mxu0 %v863
    %1022 = vmatprep.subr.bf16.mxu0 %v868
    %1023 = vmatpush1.bf16.msra.mxu0 %v867
    %1024 = vmatprep.subr.bf16.mxu0 %v872
    %1025 = vmatpush1.bf16.msra.mxu0 %v871
    %1026 = vmatprep.subr.bf16.mxu0 %v876
    %1027 = vmatpush1.bf16.msra.mxu0 %v875
    %1028 = vmatprep.subr.bf16.mxu0 %v880
    %1029 = vmatpush1.bf16.msra.mxu0 %v879
    %1030 = vmatprep.subr.bf16.mxu0 %v884
    %1031 = vmatpush1.bf16.msra.mxu0 %v883
    %1032 = vmatprep.subr.bf16.mxu0 %v888
    %1033 = vmatpush1.bf16.msra.mxu0 %v887
    %1034 = vmatprep.subr.bf16.mxu0 %v892
    %1035 = vmatpush1.bf16.msra.mxu0 %v891
    %1036 = vmatprep.subr.bf16.mxu0 %v896
    %1037 = vmatpush1.bf16.msra.mxu0 %v895
    %1038 = vmatprep.subr.bf16.mxu0 %v900
    %1039 = vmatpush1.bf16.msra.mxu0 %v899
    %1040 = vmatprep.subr.bf16.mxu0 %v904
    %1041 = vmatpush1.bf16.msra.mxu0 %v903
    %1042 = vmatprep.mubr.bf16.mxu0 %v627
    %1043 = vmatmul.mubr.bf16.gmra.mrb[0].mxu0 %v626
    %v1044 = vpop.f32.mrb[0].mxu0
    %v1045 = vadd.f32 %v640, %v1044
    %v1046 = vpop.f32.mrb[0].mxu0
    %v1047 = vadd.f32 %v644, %v1046
    %v1048 = vpop.f32.mrb[0].mxu0
    %v1049 = vpop.f32.mrb[0].mxu0
    %1050 = vdwg.mxu0
    %v1051 = vmax.f32 %v1004, 0.0
    %v1052 = vmax.f32 %v1006, 0.0
    %v1053 = vmax.f32 %v1045, 0.0
    %v1054 = vmax.f32 %v1047, 0.0
    %v1055 = vpack.c.bf16 %v1051, %v1051
    %v1056 = vpack.c.bf16 %v1052, %v1052
    %v1057 = vpack.c.bf16 %v1053, %v1053
    %v1058 = vpack.c.bf16 %v1054, %v1054
    %v1061 = vunpack.c.l.s4 1983009808
    %v1062 = vunpack.c.0.s8 %v1061
    %v1063 = vlaneseq
    %v1064 = vshrl.u32 %v1063, 7
    %v1065 = vsub.s32 %v1062, %v1064
    %v1066 = vrot.slane %v613, %v1065
    %v1067 = vcombine.high %v1066, %v1066
    %v1070 = vpack.c.bf16 %v1066, %v1066
    %v1071 = vpack.c.bf16 %v1067, %v1067
    %v1200 = vunpack.c.l.b16 %v450
    %v1201 = vunpack.c.h.b16 %v450
    %v1202 = vunpack.c.l.b16 %v451
    %v1203 = vunpack.c.h.b16 %v451
    %v1204 = vunpack.c.l.b16 %v452
    %v1205 = vunpack.c.h.b16 %v452
    %v1206 = vunpack.c.l.b16 %v453
    %v1207 = vunpack.c.h.b16 %v453
    %v1208 = vunpack.c.l.b16 %v454
    %v1209 = vunpack.c.h.b16 %v454
    %v1210 = vunpack.c.l.b16 %v455
    %v1211 = vunpack.c.h.b16 %v455
    %v1212 = vunpack.c.l.b16 %v456
    %v1213 = vunpack.c.h.b16 %v456
    %v1214 = vunpack.c.l.b16 %v457
    %v1215 = vunpack.c.h.b16 %v457
    %v1216 = vunpack.c.l.b16 %v458
    %v1217 = vunpack.c.h.b16 %v458
    %v1218 = vunpack.c.l.b16 %v459
    %v1219 = vunpack.c.h.b16 %v459
    %v1220 = vunpack.c.l.b16 %v460
    %v1221 = vunpack.c.h.b16 %v460
    %v1222 = vunpack.c.l.b16 %v461
    %v1223 = vunpack.c.h.b16 %v461
    %v1224 = vunpack.c.l.b16 %v462
    %v1225 = vunpack.c.h.b16 %v462
    %v1226 = vunpack.c.l.b16 %v463
    %v1227 = vunpack.c.h.b16 %v463
    %v1228 = vunpack.c.l.b16 %v464
    %v1229 = vunpack.c.h.b16 %v464
    %v1230 = vunpack.c.l.b16 %v465
    %v1231 = vunpack.c.h.b16 %v465
    %v1232 = vunpack.c.l.b16 %v466
    %v1233 = vunpack.c.h.b16 %v466
    %v1234 = vunpack.c.l.b16 %v467
    %v1235 = vunpack.c.h.b16 %v467
    %v1236 = vunpack.c.l.b16 %v468
    %v1237 = vunpack.c.h.b16 %v468
    %v1238 = vunpack.c.l.b16 %v469
    %v1239 = vunpack.c.h.b16 %v469
    %v1240 = vunpack.c.l.b16 %v470
    %v1241 = vunpack.c.h.b16 %v470
    %v1242 = vunpack.c.l.b16 %v471
    %v1243 = vunpack.c.h.b16 %v471
    %v1244 = vunpack.c.l.b16 %v472
    %v1245 = vunpack.c.h.b16 %v472
    %v1246 = vunpack.c.l.b16 %v473
    %v1247 = vunpack.c.h.b16 %v473
    %v1248 = vunpack.c.l.b16 %v474
    %v1249 = vunpack.c.h.b16 %v474
    %v1250 = vunpack.c.l.b16 %v475
    %v1251 = vunpack.c.h.b16 %v475
    %v1252 = vunpack.c.l.b16 %v476
    %v1253 = vunpack.c.h.b16 %v476
    %v1254 = vunpack.c.l.b16 %v477
    %v1255 = vunpack.c.h.b16 %v477
    %v1256 = vunpack.c.l.b16 %v478
    %v1257 = vunpack.c.h.b16 %v478
    %v1258 = vunpack.c.l.b16 %v479
    %v1259 = vunpack.c.h.b16 %v479
    %v1260 = vunpack.c.l.b16 %v480
    %v1261 = vunpack.c.h.b16 %v480
    %v1262 = vunpack.c.l.b16 %v481
    %v1263 = vunpack.c.h.b16 %v481
    %v1264 = vunpack.c.l.b16 %v482
    %v1265 = vunpack.c.h.b16 %v482
    %v1266 = vunpack.c.l.b16 %v483
    %v1267 = vunpack.c.h.b16 %v483
    %v1268 = vunpack.c.l.b16 %v484
    %v1269 = vunpack.c.h.b16 %v484
    %v1270 = vunpack.c.l.b16 %v485
    %v1271 = vunpack.c.h.b16 %v485
    %v1272 = vunpack.c.l.b16 %v486
    %v1273 = vunpack.c.h.b16 %v486
    %v1274 = vunpack.c.l.b16 %v487
    %v1275 = vunpack.c.h.b16 %v487
    %v1276 = vunpack.c.l.b16 %v488
    %v1277 = vunpack.c.h.b16 %v488
    %v1278 = vunpack.c.l.b16 %v489
    %v1279 = vunpack.c.h.b16 %v489
    %v1280 = vunpack.c.l.b16 %v490
    %v1281 = vunpack.c.h.b16 %v490
    %v1282 = vunpack.c.l.b16 %v491
    %v1283 = vunpack.c.h.b16 %v491
    %v1284 = vunpack.c.l.b16 %v492
    %v1285 = vunpack.c.h.b16 %v492
    %v1286 = vunpack.c.l.b16 %v493
    %v1287 = vunpack.c.h.b16 %v493
    %v1288 = vunpack.c.l.b16 %v494
    %v1289 = vunpack.c.h.b16 %v494
    %v1290 = vunpack.c.l.b16 %v495
    %v1291 = vunpack.c.h.b16 %v495
    %v1292 = vunpack.c.l.b16 %v496
    %v1293 = vunpack.c.h.b16 %v496
    %v1294 = vunpack.c.l.b16 %v497
    %v1295 = vunpack.c.h.b16 %v497
    %v1296 = vunpack.c.l.b16 %v498
    %v1297 = vunpack.c.h.b16 %v498
    %v1298 = vunpack.c.l.b16 %v499
    %v1299 = vunpack.c.h.b16 %v499
    %v1300 = vunpack.c.l.b16 %v500
    %v1301 = vunpack.c.h.b16 %v500
    %v1302 = vunpack.c.l.b16 %v501
    %v1303 = vunpack.c.h.b16 %v501
    %v1304 = vunpack.c.l.b16 %v502
    %v1305 = vunpack.c.h.b16 %v502
    %v1306 = vunpack.c.l.b16 %v503
    %v1307 = vunpack.c.h.b16 %v503
    %v1308 = vunpack.c.l.b16 %v504
    %v1309 = vunpack.c.h.b16 %v504
    %v1310 = vunpack.c.l.b16 %v505
    %v1311 = vunpack.c.h.b16 %v505
    %v1312 = vunpack.c.l.b16 %v506
    %v1313 = vunpack.c.h.b16 %v506
    %v1314 = vunpack.c.l.b16 %v507
    %v1315 = vunpack.c.h.b16 %v507
    %v1316 = vunpack.c.l.b16 %v508
    %v1317 = vunpack.c.h.b16 %v508
    %v1318 = vunpack.c.l.b16 %v509
    %v1319 = vunpack.c.h.b16 %v509
    %v1320 = vunpack.c.l.b16 %v510
    %v1321 = vunpack.c.h.b16 %v510
    %v1322 = vunpack.c.l.b16 %v511
    %v1323 = vunpack.c.h.b16 %v511
    %v1324 = vunpack.c.l.b16 %v512
    %v1325 = vunpack.c.h.b16 %v512
    %v1326 = vunpack.c.l.b16 %v513
    %v1327 = vunpack.c.h.b16 %v513
    %v1328 = vunpack.c.l.b16 %v514
    %v1329 = vunpack.c.h.b16 %v514
    %v1330 = vunpack.c.l.b16 %v515
    %v1331 = vunpack.c.h.b16 %v515
    %v1332 = vunpack.c.l.b16 %v516
    %v1333 = vunpack.c.h.b16 %v516
    %v1334 = vunpack.c.l.b16 %v517
    %v1335 = vunpack.c.h.b16 %v517
    %v1336 = vunpack.c.l.b16 %v518
    %v1337 = vunpack.c.h.b16 %v518
    %v1338 = vunpack.c.l.b16 %v519
    %v1339 = vunpack.c.h.b16 %v519
    %v1340 = vunpack.c.l.b16 %v520
    %v1341 = vunpack.c.h.b16 %v520
    %v1342 = vunpack.c.l.b16 %v521
    %v1343 = vunpack.c.h.b16 %v521
    %v1344 = vunpack.c.l.b16 %v522
    %v1345 = vunpack.c.h.b16 %v522
    %v1346 = vunpack.c.l.b16 %v523
    %v1347 = vunpack.c.h.b16 %v523
    %v1348 = vunpack.c.l.b16 %v524
    %v1349 = vunpack.c.h.b16 %v524
    %v1350 = vunpack.c.l.b16 %v525
    %v1351 = vunpack.c.h.b16 %v525
    %v1352 = vunpack.c.l.b16 %v526
    %v1353 = vunpack.c.h.b16 %v526
    %v1354 = vunpack.c.l.b16 %v527
    %v1355 = vunpack.c.h.b16 %v527
    %v1356 = vunpack.c.l.b16 %v528
    %v1357 = vunpack.c.h.b16 %v528
    %v1358 = vunpack.c.l.b16 %v529
    %v1359 = vunpack.c.h.b16 %v529
    %v1360 = vunpack.c.l.b16 %v530
    %v1361 = vunpack.c.h.b16 %v530
    %v1362 = vunpack.c.l.b16 %v531
    %v1363 = vunpack.c.h.b16 %v531
    %v1364 = vunpack.c.l.b16 %v532
    %v1365 = vunpack.c.h.b16 %v532
    %v1366 = vunpack.c.l.b16 %v533
    %v1367 = vunpack.c.h.b16 %v533
    %v1368 = vunpack.c.l.b16 %v534
    %v1369 = vunpack.c.h.b16 %v534
    %v1370 = vunpack.c.l.b16 %v535
    %v1371 = vunpack.c.h.b16 %v535
    %v1372 = vunpack.c.l.b16 %v536
    %v1373 = vunpack.c.h.b16 %v536
    %v1374 = vunpack.c.l.b16 %v537
    %v1375 = vunpack.c.h.b16 %v537
    %v1376 = vunpack.c.l.b16 %v538
    %v1377 = vunpack.c.h.b16 %v538
    %v1378 = vunpack.c.l.b16 %v539
    %v1379 = vunpack.c.h.b16 %v539
    %v1380 = vunpack.c.l.b16 %v540
    %v1381 = vunpack.c.h.b16 %v540
    %v1382 = vunpack.c.l.b16 %v541
    %v1383 = vunpack.c.h.b16 %v541
    %v1384 = vunpack.c.l.b16 %v542
    %v1385 = vunpack.c.h.b16 %v542
    %v1386 = vunpack.c.l.b16 %v543
    %v1387 = vunpack.c.h.b16 %v543
    %v1388 = vunpack.c.l.b16 %v544
    %v1389 = vunpack.c.h.b16 %v544
    %v1390 = vunpack.c.l.b16 %v545
    %v1391 = vunpack.c.h.b16 %v545
    %v1392 = vunpack.c.l.b16 %v546
    %v1393 = vunpack.c.h.b16 %v546
    %v1394 = vunpack.c.l.b16 %v547
    %v1395 = vunpack.c.h.b16 %v547
    %v1396 = vunpack.c.l.b16 %v548
    %v1397 = vunpack.c.h.b16 %v548
    %v1398 = vunpack.c.l.b16 %v549
    %v1399 = vunpack.c.h.b16 %v549
    %v1400 = vunpack.c.l.b16 %v550
    %v1401 = vunpack.c.h.b16 %v550
    %v1402 = vunpack.c.l.b16 %v551
    %v1403 = vunpack.c.h.b16 %v551
    %v1404 = vunpack.c.l.b16 %v552
    %v1405 = vunpack.c.h.b16 %v552
    %v1406 = vunpack.c.l.b16 %v553
    %v1407 = vunpack.c.h.b16 %v553
    %v1408 = vunpack.c.l.b16 %v554
    %v1409 = vunpack.c.h.b16 %v554
    %v1410 = vunpack.c.l.b16 %v555
    %v1411 = vunpack.c.h.b16 %v555
    %v1412 = vunpack.c.l.b16 %v556
    %v1413 = vunpack.c.h.b16 %v556
    %v1414 = vunpack.c.l.b16 %v557
    %v1415 = vunpack.c.h.b16 %v557
    %v1416 = vunpack.c.l.b16 %v558
    %v1417 = vunpack.c.h.b16 %v558
    %v1418 = vunpack.c.l.b16 %v559
    %v1419 = vunpack.c.h.b16 %v559
    %v1420 = vunpack.c.l.b16 %v560
    %v1421 = vunpack.c.h.b16 %v560
    %v1422 = vunpack.c.l.b16 %v561
    %v1423 = vunpack.c.h.b16 %v561
    %v1424 = vunpack.c.l.b16 %v562
    %v1425 = vunpack.c.h.b16 %v562
    %v1426 = vunpack.c.l.b16 %v563
    %v1427 = vunpack.c.h.b16 %v563
    %v1428 = vunpack.c.l.b16 %v564
    %v1429 = vunpack.c.h.b16 %v564
    %v1430 = vunpack.c.l.b16 %v565
    %v1431 = vunpack.c.h.b16 %v565
    %v1432 = vunpack.c.l.b16 %v566
    %v1433 = vunpack.c.h.b16 %v566
    %v1434 = vunpack.c.l.b16 %v567
    %v1435 = vunpack.c.h.b16 %v567
    %v1436 = vunpack.c.l.b16 %v568
    %v1437 = vunpack.c.h.b16 %v568
    %v1438 = vunpack.c.l.b16 %v569
    %v1439 = vunpack.c.h.b16 %v569
    %v1440 = vunpack.c.l.b16 %v570
    %v1441 = vunpack.c.h.b16 %v570
    %v1442 = vunpack.c.l.b16 %v571
    %v1443 = vunpack.c.h.b16 %v571
    %v1444 = vunpack.c.l.b16 %v572
    %v1445 = vunpack.c.h.b16 %v572
    %v1446 = vunpack.c.l.b16 %v573
    %v1447 = vunpack.c.h.b16 %v573
    %v1448 = vunpack.c.l.b16 %v574
    %v1449 = vunpack.c.h.b16 %v574
    %v1450 = vunpack.c.l.b16 %v575
    %v1451 = vunpack.c.h.b16 %v575
    %v1452 = vunpack.c.l.b16 %v576
    %v1453 = vunpack.c.h.b16 %v576
    %v1454 = vunpack.c.l.b16 %v577
    %v1455 = vunpack.c.h.b16 %v577
    %v1456 = vpack.c.b16 %v1208, %v1200
    %v1457 = vpack.c.b16 %v1209, %v1201
    %v1458 = vpack.c.b16 %v1210, %v1202
    %v1459 = vpack.c.b16 %v1211, %v1203
    %v1460 = vpack.c.b16 %v1212, %v1204
    %v1461 = vpack.c.b16 %v1213, %v1205
    %v1462 = vpack.c.b16 %v1214, %v1206
    %v1463 = vpack.c.b16 %v1215, %v1207
    %v1464 = vpack.c.b16 %v1224, %v1216
    %v1465 = vpack.c.b16 %v1225, %v1217
    %v1466 = vpack.c.b16 %v1226, %v1218
    %v1467 = vpack.c.b16 %v1227, %v1219
    %v1468 = vpack.c.b16 %v1228, %v1220
    %v1469 = vpack.c.b16 %v1229, %v1221
    %v1470 = vpack.c.b16 %v1230, %v1222
    %v1471 = vpack.c.b16 %v1231, %v1223
    %v1472 = vpack.c.b16 %v1240, %v1232
    %v1473 = vpack.c.b16 %v1241, %v1233
    %v1474 = vpack.c.b16 %v1242, %v1234
    %v1475 = vpack.c.b16 %v1243, %v1235
    %v1476 = vpack.c.b16 %v1244, %v1236
    %v1477 = vpack.c.b16 %v1245, %v1237
    %v1478 = vpack.c.b16 %v1246, %v1238
    %v1479 = vpack.c.b16 %v1247, %v1239
    %v1480 = vpack.c.b16 %v1256, %v1248
    %v1481 = vpack.c.b16 %v1257, %v1249
    %v1482 = vpack.c.b16 %v1258, %v1250
    %v1483 = vpack.c.b16 %v1259, %v1251
    %v1484 = vpack.c.b16 %v1260, %v1252
    %v1485 = vpack.c.b16 %v1261, %v1253
    %v1486 = vpack.c.b16 %v1262, %v1254
    %v1487 = vpack.c.b16 %v1263, %v1255
    %v1488 = vpack.c.b16 %v1272, %v1264
    %v1489 = vpack.c.b16 %v1273, %v1265
    %v1490 = vpack.c.b16 %v1274, %v1266
    %v1491 = vpack.c.b16 %v1275, %v1267
    %v1492 = vpack.c.b16 %v1276, %v1268
    %v1493 = vpack.c.b16 %v1277, %v1269
    %v1494 = vpack.c.b16 %v1278, %v1270
    %v1495 = vpack.c.b16 %v1279, %v1271
    %v1496 = vpack.c.b16 %v1288, %v1280
    %v1497 = vpack.c.b16 %v1289, %v1281
    %v1498 = vpack.c.b16 %v1290, %v1282
    %v1499 = vpack.c.b16 %v1291, %v1283
    %v1500 = vpack.c.b16 %v1292, %v1284
    %v1501 = vpack.c.b16 %v1293, %v1285
    %v1502 = vpack.c.b16 %v1294, %v1286
    %v1503 = vpack.c.b16 %v1295, %v1287
    %v1504 = vpack.c.b16 %v1304, %v1296
    %v1505 = vpack.c.b16 %v1305, %v1297
    %v1506 = vpack.c.b16 %v1306, %v1298
    %v1507 = vpack.c.b16 %v1307, %v1299
    %v1508 = vpack.c.b16 %v1308, %v1300
    %v1509 = vpack.c.b16 %v1309, %v1301
    %v1510 = vpack.c.b16 %v1310, %v1302
    %v1511 = vpack.c.b16 %v1311, %v1303
    %v1512 = vpack.c.b16 %v1320, %v1312
    %v1513 = vpack.c.b16 %v1321, %v1313
    %v1514 = vpack.c.b16 %v1322, %v1314
    %v1515 = vpack.c.b16 %v1323, %v1315
    %v1516 = vpack.c.b16 %v1324, %v1316
    %v1517 = vpack.c.b16 %v1325, %v1317
    %v1518 = vpack.c.b16 %v1326, %v1318
    %v1519 = vpack.c.b16 %v1327, %v1319
    %v1520 = vpack.c.b16 %v1336, %v1328
    %v1521 = vpack.c.b16 %v1337, %v1329
    %v1522 = vpack.c.b16 %v1338, %v1330
    %v1523 = vpack.c.b16 %v1339, %v1331
    %v1524 = vpack.c.b16 %v1340, %v1332
    %v1525 = vpack.c.b16 %v1341, %v1333
    %v1526 = vpack.c.b16 %v1342, %v1334
    %v1527 = vpack.c.b16 %v1343, %v1335
    %v1528 = vpack.c.b16 %v1352, %v1344
    %v1529 = vpack.c.b16 %v1353, %v1345
    %v1530 = vpack.c.b16 %v1354, %v1346
    %v1531 = vpack.c.b16 %v1355, %v1347
    %v1532 = vpack.c.b16 %v1356, %v1348
    %v1533 = vpack.c.b16 %v1357, %v1349
    %v1534 = vpack.c.b16 %v1358, %v1350
    %v1535 = vpack.c.b16 %v1359, %v1351
    %v1536 = vpack.c.b16 %v1368, %v1360
    %v1537 = vpack.c.b16 %v1369, %v1361
    %v1538 = vpack.c.b16 %v1370, %v1362
    %v1539 = vpack.c.b16 %v1371, %v1363
    %v1540 = vpack.c.b16 %v1372, %v1364
    %v1541 = vpack.c.b16 %v1373, %v1365
    %v1542 = vpack.c.b16 %v1374, %v1366
    %v1543 = vpack.c.b16 %v1375, %v1367
    %v1544 = vpack.c.b16 %v1384, %v1376
    %v1545 = vpack.c.b16 %v1385, %v1377
    %v1546 = vpack.c.b16 %v1386, %v1378
    %v1547 = vpack.c.b16 %v1387, %v1379
    %v1548 = vpack.c.b16 %v1388, %v1380
    %v1549 = vpack.c.b16 %v1389, %v1381
    %v1550 = vpack.c.b16 %v1390, %v1382
    %v1551 = vpack.c.b16 %v1391, %v1383
    %v1552 = vpack.c.b16 %v1400, %v1392
    %v1553 = vpack.c.b16 %v1401, %v1393
    %v1554 = vpack.c.b16 %v1402, %v1394
    %v1555 = vpack.c.b16 %v1403, %v1395
    %v1556 = vpack.c.b16 %v1404, %v1396
    %v1557 = vpack.c.b16 %v1405, %v1397
    %v1558 = vpack.c.b16 %v1406, %v1398
    %v1559 = vpack.c.b16 %v1407, %v1399
    %v1560 = vpack.c.b16 %v1416, %v1408
    %v1561 = vpack.c.b16 %v1417, %v1409
    %v1562 = vpack.c.b16 %v1418, %v1410
    %v1563 = vpack.c.b16 %v1419, %v1411
    %v1564 = vpack.c.b16 %v1420, %v1412
    %v1565 = vpack.c.b16 %v1421, %v1413
    %v1566 = vpack.c.b16 %v1422, %v1414
    %v1567 = vpack.c.b16 %v1423, %v1415
    %v1568 = vpack.c.b16 %v1432, %v1424
    %v1569 = vpack.c.b16 %v1433, %v1425
    %v1570 = vpack.c.b16 %v1434, %v1426
    %v1571 = vpack.c.b16 %v1435, %v1427
    %v1572 = vpack.c.b16 %v1436, %v1428
    %v1573 = vpack.c.b16 %v1437, %v1429
    %v1574 = vpack.c.b16 %v1438, %v1430
    %v1575 = vpack.c.b16 %v1439, %v1431
    %v1576 = vpack.c.b16 %v1448, %v1440
    %v1577 = vpack.c.b16 %v1449, %v1441
    %v1578 = vpack.c.b16 %v1450, %v1442
    %v1579 = vpack.c.b16 %v1451, %v1443
    %v1580 = vpack.c.b16 %v1452, %v1444
    %v1581 = vpack.c.b16 %v1453, %v1445
    %v1582 = vpack.c.b16 %v1454, %v1446
    %v1583 = vpack.c.b16 %v1455, %v1447
    %1712 = vmatprep.subr.bf16.mxu0 %v1457
    %1713 = vmatpush1.bf16.msra.mxu0 %v1456
    %1714 = vmatprep.subr.bf16.mxu0 %v1465
    %1715 = vmatpush1.bf16.msra.mxu0 %v1464
    %1716 = vmatprep.subr.bf16.mxu0 %v1473
    %1717 = vmatpush1.bf16.msra.mxu0 %v1472
    %1718 = vmatprep.subr.bf16.mxu0 %v1481
    %1719 = vmatpush1.bf16.msra.mxu0 %v1480
    %1720 = vmatprep.subr.bf16.mxu0 %v1489
    %1721 = vmatpush1.bf16.msra.mxu0 %v1488
    %1722 = vmatprep.subr.bf16.mxu0 %v1497
    %1723 = vmatpush1.bf16.msra.mxu0 %v1496
    %1724 = vmatprep.subr.bf16.mxu0 %v1505
    %1725 = vmatpush1.bf16.msra.mxu0 %v1504
    %1726 = vmatprep.subr.bf16.mxu0 %v1513
    %1727 = vmatpush1.bf16.msra.mxu0 %v1512
    %1728 = vmatprep.subr.bf16.mxu0 %v1521
    %1729 = vmatpush1.bf16.msra.mxu0 %v1520
    %1730 = vmatprep.subr.bf16.mxu0 %v1529
    %1731 = vmatpush1.bf16.msra.mxu0 %v1528
    %1732 = vmatprep.subr.bf16.mxu0 %v1537
    %1733 = vmatpush1.bf16.msra.mxu0 %v1536
    %1734 = vmatprep.subr.bf16.mxu0 %v1545
    %1735 = vmatpush1.bf16.msra.mxu0 %v1544
    %1736 = vmatprep.subr.bf16.mxu0 %v1553
    %1737 = vmatpush1.bf16.msra.mxu0 %v1552
    %1738 = vmatprep.subr.bf16.mxu0 %v1561
    %1739 = vmatpush1.bf16.msra.mxu0 %v1560
    %1740 = vmatprep.subr.bf16.mxu0 %v1569
    %1741 = vmatpush1.bf16.msra.mxu0 %v1568
    %1742 = vmatprep.subr.bf16.mxu0 %v1577
    %1743 = vmatpush1.bf16.msra.mxu0 %v1576
    %1744 = vmatprep.mubr.bf16.mxu0 %v1071
    %1745 = vmatmul.mubr.bf16.gmra.mrb[0].mxu0 %v1070
    %v1746 = vpop.f32.mrb[0].mxu0
    %v1747 = vadd.f32 0.0, %v1746
    %v1748 = vpop.f32.mrb[0].mxu0
    %v1749 = vadd.f32 0.0, %v1748
    %v1750 = vpop.f32.mrb[0].mxu0
    %v1751 = vpop.f32.mrb[0].mxu0
    %1752 = vdwg.mxu0
    %1753 = vmatprep.subr.bf16.mxu0 %v1459
    %1754 = vmatpush1.bf16.msra.mxu0 %v1458
    %1755 = vmatprep.subr.bf16.mxu0 %v1467
    %1756 = vmatpush1.bf16.msra.mxu0 %v1466
    %1757 = vmatprep.subr.bf16.mxu0 %v1475
    %1758 = vmatpush1.bf16.msra.mxu0 %v1474
    %1759 = vmatprep.subr.bf16.mxu0 %v1483
    %1760 = vmatpush1.bf16.msra.mxu0 %v1482
    %1761 = vmatprep.subr.bf16.mxu0 %v1491
    %1762 = vmatpush1.bf16.msra.mxu0 %v1490
    %1763 = vmatprep.subr.bf16.mxu0 %v1499
    %1764 = vmatpush1.bf16.msra.mxu0 %v1498
    %1765 = vmatprep.subr.bf16.mxu0 %v1507
    %1766 = vmatpush1.bf16.msra.mxu0 %v1506
    %1767 = vmatprep.subr.bf16.mxu0 %v1515
    %1768 = vmatpush1.bf16.msra.mxu0 %v1514
    %1769 = vmatprep.subr.bf16.mxu0 %v1523
    %1770 = vmatpush1.bf16.msra.mxu0 %v1522
    %1771 = vmatprep.subr.bf16.mxu0 %v1531
    %1772 = vmatpush1.bf16.msra.mxu0 %v1530
    %1773 = vmatprep.subr.bf16.mxu0 %v1539
    %1774 = vmatpush1.bf16.msra.mxu0 %v1538
    %1775 = vmatprep.subr.bf16.mxu0 %v1547
    %1776 = vmatpush1.bf16.msra.mxu0 %v1546
    %1777 = vmatprep.subr.bf16.mxu0 %v1555
    %1778 = vmatpush1.bf16.msra.mxu0 %v1554
    %1779 = vmatprep.subr.bf16.mxu0 %v1563
    %1780 = vmatpush1.bf16.msra.mxu0 %v1562
    %1781 = vmatprep.subr.bf16.mxu0 %v1571
    %1782 = vmatpush1.bf16.msra.mxu0 %v1570
    %1783 = vmatprep.subr.bf16.mxu0 %v1579
    %1784 = vmatpush1.bf16.msra.mxu0 %v1578
    %1785 = vmatprep.mubr.bf16.mxu0 %v1071
    %1786 = vmatmul.mubr.bf16.gmra.mrb[0].mxu0 %v1070
    %v1787 = vpop.f32.mrb[0].mxu0
    %v1788 = vadd.f32 0.0, %v1787
    %v1789 = vpop.f32.mrb[0].mxu0
    %v1790 = vadd.f32 0.0, %v1789
    %v1791 = vpop.f32.mrb[0].mxu0
    %v1792 = vpop.f32.mrb[0].mxu0
    %1793 = vdwg.mxu0
    %1794 = vmatprep.subr.bf16.mxu0 %v1461
    %1795 = vmatpush1.bf16.msra.mxu0 %v1460
    %1796 = vmatprep.subr.bf16.mxu0 %v1469
    %1797 = vmatpush1.bf16.msra.mxu0 %v1468
    %1798 = vmatprep.subr.bf16.mxu0 %v1477
    %1799 = vmatpush1.bf16.msra.mxu0 %v1476
    %1800 = vmatprep.subr.bf16.mxu0 %v1485
    %1801 = vmatpush1.bf16.msra.mxu0 %v1484
    %1802 = vmatprep.subr.bf16.mxu0 %v1493
    %1803 = vmatpush1.bf16.msra.mxu0 %v1492
    %1804 = vmatprep.subr.bf16.mxu0 %v1501
    %1805 = vmatpush1.bf16.msra.mxu0 %v1500
    %1806 = vmatprep.subr.bf16.mxu0 %v1509
    %1807 = vmatpush1.bf16.msra.mxu0 %v1508
    %1808 = vmatprep.subr.bf16.mxu0 %v1517
    %1809 = vmatpush1.bf16.msra.mxu0 %v1516
    %1810 = vmatprep.subr.bf16.mxu0 %v1525
    %1811 = vmatpush1.bf16.msra.mxu0 %v1524
    %1812 = vmatprep.subr.bf16.mxu0 %v1533
    %1813 = vmatpush1.bf16.msra.mxu0 %v1532
    %1814 = vmatprep.subr.bf16.mxu0 %v1541
    %1815 = vmatpush1.bf16.msra.mxu0 %v1540
    %1816 = vmatprep.subr.bf16.mxu0 %v1549
    %1817 = vmatpush1.bf16.msra.mxu0 %v1548
    %1818 = vmatprep.subr.bf16.mxu0 %v1557
    %1819 = vmatpush1.bf16.msra.mxu0 %v1556
    %1820 = vmatprep.subr.bf16.mxu0 %v1565
    %1821 = vmatpush1.bf16.msra.mxu0 %v1564
    %1822 = vmatprep.subr.bf16.mxu0 %v1573
    %1823 = vmatpush1.bf16.msra.mxu0 %v1572
    %1824 = vmatprep.subr.bf16.mxu0 %v1581
    %1825 = vmatpush1.bf16.msra.mxu0 %v1580
    %1826 = vmatprep.mubr.bf16.mxu0 %v1071
    %1827 = vmatmul.mubr.bf16.gmra.mrb[0].mxu0 %v1070
    %v1828 = vpop.f32.mrb[0].mxu0
    %v1829 = vadd.f32 0.0, %v1828
    %v1830 = vpop.f32.mrb[0].mxu0
    %v1831 = vadd.f32 0.0, %v1830
    %v1832 = vpop.f32.mrb[0].mxu0
    %v1833 = vpop.f32.mrb[0].mxu0
    %1834 = vdwg.mxu0
    %1835 = vmatprep.subr.bf16.mxu0 %v1463
    %1836 = vmatpush1.bf16.msra.mxu0 %v1462
    %1837 = vmatprep.subr.bf16.mxu0 %v1471
    %1838 = vmatpush1.bf16.msra.mxu0 %v1470
    %1839 = vmatprep.subr.bf16.mxu0 %v1479
    %1840 = vmatpush1.bf16.msra.mxu0 %v1478
    %1841 = vmatprep.subr.bf16.mxu0 %v1487
    %1842 = vmatpush1.bf16.msra.mxu0 %v1486
    %1843 = vmatprep.subr.bf16.mxu0 %v1495
    %1844 = vmatpush1.bf16.msra.mxu0 %v1494
    %1845 = vmatprep.subr.bf16.mxu0 %v1503
    %1846 = vmatpush1.bf16.msra.mxu0 %v1502
    %1847 = vmatprep.subr.bf16.mxu0 %v1511
    %1848 = vmatpush1.bf16.msra.mxu0 %v1510
    %1849 = vmatprep.subr.bf16.mxu0 %v1519
    %1850 = vmatpush1.bf16.msra.mxu0 %v1518
    %1851 = vmatprep.subr.bf16.mxu0 %v1527
    %1852 = vmatpush1.bf16.msra.mxu0 %v1526
    %1853 = vmatprep.subr.bf16.mxu0 %v1535
    %1854 = vmatpush1.bf16.msra.mxu0 %v1534
    %1855 = vmatprep.subr.bf16.mxu0 %v1543
    %1856 = vmatpush1.bf16.msra.mxu0 %v1542
    %1857 = vmatprep.subr.bf16.mxu0 %v1551
    %1858 = vmatpush1.bf16.msra.mxu0 %v1550
    %1859 = vmatprep.subr.bf16.mxu0 %v1559
    %1860 = vmatpush1.bf16.msra.mxu0 %v1558
    %1861 = vmatprep.subr.bf16.mxu0 %v1567
    %1862 = vmatpush1.bf16.msra.mxu0 %v1566
    %1863 = vmatprep.subr.bf16.mxu0 %v1575
    %1864 = vmatpush1.bf16.msra.mxu0 %v1574
    %1865 = vmatprep.subr.bf16.mxu0 %v1583
    %1866 = vmatpush1.bf16.msra.mxu0 %v1582
    %1867 = vmatprep.mubr.bf16.mxu0 %v1071
    %1868 = vmatmul.mubr.bf16.gmra.mrb[0].mxu0 %v1070
    %v1869 = vpop.f32.mrb[0].mxu0
    %v1870 = vadd.f32 0.0, %v1869
    %v1871 = vpop.f32.mrb[0].mxu0
    %v1872 = vadd.f32 0.0, %v1871
    %v1873 = vpop.f32.mrb[0].mxu0
    %v1874 = vpop.f32.mrb[0].mxu0
    %1875 = vdwg.mxu0
    %v2132 = vunpack.c.l.b16 %v194
    %v2133 = vunpack.c.h.b16 %v194
    %v2134 = vunpack.c.l.b16 %v195
    %v2135 = vunpack.c.h.b16 %v195
    %v2136 = vunpack.c.l.b16 %v196
    %v2137 = vunpack.c.h.b16 %v196
    %v2138 = vunpack.c.l.b16 %v197
    %v2139 = vunpack.c.h.b16 %v197
    %v2140 = vunpack.c.l.b16 %v198
    %v2141 = vunpack.c.h.b16 %v198
    %v2142 = vunpack.c.l.b16 %v199
    %v2143 = vunpack.c.h.b16 %v199
    %v2144 = vunpack.c.l.b16 %v200
    %v2145 = vunpack.c.h.b16 %v200
    %v2146 = vunpack.c.l.b16 %v201
    %v2147 = vunpack.c.h.b16 %v201
    %v2148 = vunpack.c.l.b16 %v202
    %v2149 = vunpack.c.h.b16 %v202
    %v2150 = vunpack.c.l.b16 %v203
    %v2151 = vunpack.c.h.b16 %v203
    %v2152 = vunpack.c.l.b16 %v204
    %v2153 = vunpack.c.h.b16 %v204
    %v2154 = vunpack.c.l.b16 %v205
    %v2155 = vunpack.c.h.b16 %v205
    %v2156 = vunpack.c.l.b16 %v206
    %v2157 = vunpack.c.h.b16 %v206
    %v2158 = vunpack.c.l.b16 %v207
    %v2159 = vunpack.c.h.b16 %v207
    %v2160 = vunpack.c.l.b16 %v208
    %v2161 = vunpack.c.h.b16 %v208
    %v2162 = vunpack.c.l.b16 %v209
    %v2163 = vunpack.c.h.b16 %v209
    %v2164 = vunpack.c.l.b16 %v210
    %v2165 = vunpack.c.h.b16 %v210
    %v2166 = vunpack.c.l.b16 %v211
    %v2167 = vunpack.c.h.b16 %v211
    %v2168 = vunpack.c.l.b16 %v212
    %v2169 = vunpack.c.h.b16 %v212
    %v2170 = vunpack.c.l.b16 %v213
    %v2171 = vunpack.c.h.b16 %v213
    %v2172 = vunpack.c.l.b16 %v214
    %v2173 = vunpack.c.h.b16 %v214
    %v2174 = vunpack.c.l.b16 %v215
    %v2175 = vunpack.c.h.b16 %v215
    %v2176 = vunpack.c.l.b16 %v216
    %v2177 = vunpack.c.h.b16 %v216
    %v2178 = vunpack.c.l.b16 %v217
    %v2179 = vunpack.c.h.b16 %v217
    %v2180 = vunpack.c.l.b16 %v218
    %v2181 = vunpack.c.h.b16 %v218
    %v2182 = vunpack.c.l.b16 %v219
    %v2183 = vunpack.c.h.b16 %v219
    %v2184 = vunpack.c.l.b16 %v220
    %v2185 = vunpack.c.h.b16 %v220
    %v2186 = vunpack.c.l.b16 %v221
    %v2187 = vunpack.c.h.b16 %v221
    %v2188 = vunpack.c.l.b16 %v222
    %v2189 = vunpack.c.h.b16 %v222
    %v2190 = vunpack.c.l.b16 %v223
    %v2191 = vunpack.c.h.b16 %v223
    %v2192 = vunpack.c.l.b16 %v224
    %v2193 = vunpack.c.h.b16 %v224
    %v2194 = vunpack.c.l.b16 %v225
    %v2195 = vunpack.c.h.b16 %v225
    %v2196 = vunpack.c.l.b16 %v226
    %v2197 = vunpack.c.h.b16 %v226
    %v2198 = vunpack.c.l.b16 %v227
    %v2199 = vunpack.c.h.b16 %v227
    %v2200 = vunpack.c.l.b16 %v228
    %v2201 = vunpack.c.h.b16 %v228
    %v2202 = vunpack.c.l.b16 %v229
    %v2203 = vunpack.c.h.b16 %v229
    %v2204 = vunpack.c.l.b16 %v230
    %v2205 = vunpack.c.h.b16 %v230
    %v2206 = vunpack.c.l.b16 %v231
    %v2207 = vunpack.c.h.b16 %v231
    %v2208 = vunpack.c.l.b16 %v232
    %v2209 = vunpack.c.h.b16 %v232
    %v2210 = vunpack.c.l.b16 %v233
    %v2211 = vunpack.c.h.b16 %v233
    %v2212 = vunpack.c.l.b16 %v234
    %v2213 = vunpack.c.h.b16 %v234
    %v2214 = vunpack.c.l.b16 %v235
    %v2215 = vunpack.c.h.b16 %v235
    %v2216 = vunpack.c.l.b16 %v236
    %v2217 = vunpack.c.h.b16 %v236
    %v2218 = vunpack.c.l.b16 %v237
    %v2219 = vunpack.c.h.b16 %v237
    %v2220 = vunpack.c.l.b16 %v238
    %v2221 = vunpack.c.h.b16 %v238
    %v2222 = vunpack.c.l.b16 %v239
    %v2223 = vunpack.c.h.b16 %v239
    %v2224 = vunpack.c.l.b16 %v240
    %v2225 = vunpack.c.h.b16 %v240
    %v2226 = vunpack.c.l.b16 %v241
    %v2227 = vunpack.c.h.b16 %v241
    %v2228 = vunpack.c.l.b16 %v242
    %v2229 = vunpack.c.h.b16 %v242
    %v2230 = vunpack.c.l.b16 %v243
    %v2231 = vunpack.c.h.b16 %v243
    %v2232 = vunpack.c.l.b16 %v244
    %v2233 = vunpack.c.h.b16 %v244
    %v2234 = vunpack.c.l.b16 %v245
    %v2235 = vunpack.c.h.b16 %v245
    %v2236 = vunpack.c.l.b16 %v246
    %v2237 = vunpack.c.h.b16 %v246
    %v2238 = vunpack.c.l.b16 %v247
    %v2239 = vunpack.c.h.b16 %v247
    %v2240 = vunpack.c.l.b16 %v248
    %v2241 = vunpack.c.h.b16 %v248
    %v2242 = vunpack.c.l.b16 %v249
    %v2243 = vunpack.c.h.b16 %v249
    %v2244 = vunpack.c.l.b16 %v250
    %v2245 = vunpack.c.h.b16 %v250
    %v2246 = vunpack.c.l.b16 %v251
    %v2247 = vunpack.c.h.b16 %v251
    %v2248 = vunpack.c.l.b16 %v252
    %v2249 = vunpack.c.h.b16 %v252
    %v2250 = vunpack.c.l.b16 %v253
    %v2251 = vunpack.c.h.b16 %v253
    %v2252 = vunpack.c.l.b16 %v254
    %v2253 = vunpack.c.h.b16 %v254
    %v2254 = vunpack.c.l.b16 %v255
    %v2255 = vunpack.c.h.b16 %v255
    %v2256 = vunpack.c.l.b16 %v256
    %v2257 = vunpack.c.h.b16 %v256
    %v2258 = vunpack.c.l.b16 %v257
    %v2259 = vunpack.c.h.b16 %v257
    %v2260 = vunpack.c.l.b16 %v258
    %v2261 = vunpack.c.h.b16 %v258
    %v2262 = vunpack.c.l.b16 %v259
    %v2263 = vunpack.c.h.b16 %v259
    %v2264 = vunpack.c.l.b16 %v260
    %v2265 = vunpack.c.h.b16 %v260
    %v2266 = vunpack.c.l.b16 %v261
    %v2267 = vunpack.c.h.b16 %v261
    %v2268 = vunpack.c.l.b16 %v262
    %v2269 = vunpack.c.h.b16 %v262
    %v2270 = vunpack.c.l.b16 %v263
    %v2271 = vunpack.c.h.b16 %v263
    %v2272 = vunpack.c.l.b16 %v264
    %v2273 = vunpack.c.h.b16 %v264
    %v2274 = vunpack.c.l.b16 %v265
    %v2275 = vunpack.c.h.b16 %v265
    %v2276 = vunpack.c.l.b16 %v266
    %v2277 = vunpack.c.h.b16 %v266
    %v2278 = vunpack.c.l.b16 %v267
    %v2279 = vunpack.c.h.b16 %v267
    %v2280 = vunpack.c.l.b16 %v268
    %v2281 = vunpack.c.h.b16 %v268
    %v2282 = vunpack.c.l.b16 %v269
    %v2283 = vunpack.c.h.b16 %v269
    %v2284 = vunpack.c.l.b16 %v270
    %v2285 = vunpack.c.h.b16 %v270
    %v2286 = vunpack.c.l.b16 %v271
    %v2287 = vunpack.c.h.b16 %v271
    %v2288 = vunpack.c.l.b16 %v272
    %v2289 = vunpack.c.h.b16 %v272
    %v2290 = vunpack.c.l.b16 %v273
    %v2291 = vunpack.c.h.b16 %v273
    %v2292 = vunpack.c.l.b16 %v274
    %v2293 = vunpack.c.h.b16 %v274
    %v2294 = vunpack.c.l.b16 %v275
    %v2295 = vunpack.c.h.b16 %v275
    %v2296 = vunpack.c.l.b16 %v276
    %v2297 = vunpack.c.h.b16 %v276
    %v2298 = vunpack.c.l.b16 %v277
    %v2299 = vunpack.c.h.b16 %v277
    %v2300 = vunpack.c.l.b16 %v278
    %v2301 = vunpack.c.h.b16 %v278
    %v2302 = vunpack.c.l.b16 %v279
    %v2303 = vunpack.c.h.b16 %v279
    %v2304 = vunpack.c.l.b16 %v280
    %v2305 = vunpack.c.h.b16 %v280
    %v2306 = vunpack.c.l.b16 %v281
    %v2307 = vunpack.c.h.b16 %v281
    %v2308 = vunpack.c.l.b16 %v282
    %v2309 = vunpack.c.h.b16 %v282
    %v2310 = vunpack.c.l.b16 %v283
    %v2311 = vunpack.c.h.b16 %v283
    %v2312 = vunpack.c.l.b16 %v284
    %v2313 = vunpack.c.h.b16 %v284
    %v2314 = vunpack.c.l.b16 %v285
    %v2315 = vunpack.c.h.b16 %v285
    %v2316 = vunpack.c.l.b16 %v286
    %v2317 = vunpack.c.h.b16 %v286
    %v2318 = vunpack.c.l.b16 %v287
    %v2319 = vunpack.c.h.b16 %v287
    %v2320 = vunpack.c.l.b16 %v288
    %v2321 = vunpack.c.h.b16 %v288
    %v2322 = vunpack.c.l.b16 %v289
    %v2323 = vunpack.c.h.b16 %v289
    %v2324 = vunpack.c.l.b16 %v290
    %v2325 = vunpack.c.h.b16 %v290
    %v2326 = vunpack.c.l.b16 %v291
    %v2327 = vunpack.c.h.b16 %v291
    %v2328 = vunpack.c.l.b16 %v292
    %v2329 = vunpack.c.h.b16 %v292
    %v2330 = vunpack.c.l.b16 %v293
    %v2331 = vunpack.c.h.b16 %v293
    %v2332 = vunpack.c.l.b16 %v294
    %v2333 = vunpack.c.h.b16 %v294
    %v2334 = vunpack.c.l.b16 %v295
    %v2335 = vunpack.c.h.b16 %v295
    %v2336 = vunpack.c.l.b16 %v296
    %v2337 = vunpack.c.h.b16 %v296
    %v2338 = vunpack.c.l.b16 %v297
    %v2339 = vunpack.c.h.b16 %v297
    %v2340 = vunpack.c.l.b16 %v298
    %v2341 = vunpack.c.h.b16 %v298
    %v2342 = vunpack.c.l.b16 %v299
    %v2343 = vunpack.c.h.b16 %v299
    %v2344 = vunpack.c.l.b16 %v300
    %v2345 = vunpack.c.h.b16 %v300
    %v2346 = vunpack.c.l.b16 %v301
    %v2347 = vunpack.c.h.b16 %v301
    %v2348 = vunpack.c.l.b16 %v302
    %v2349 = vunpack.c.h.b16 %v302
    %v2350 = vunpack.c.l.b16 %v303
    %v2351 = vunpack.c.h.b16 %v303
    %v2352 = vunpack.c.l.b16 %v304
    %v2353 = vunpack.c.h.b16 %v304
    %v2354 = vunpack.c.l.b16 %v305
    %v2355 = vunpack.c.h.b16 %v305
    %v2356 = vunpack.c.l.b16 %v306
    %v2357 = vunpack.c.h.b16 %v306
    %v2358 = vunpack.c.l.b16 %v307
    %v2359 = vunpack.c.h.b16 %v307
    %v2360 = vunpack.c.l.b16 %v308
    %v2361 = vunpack.c.h.b16 %v308
    %v2362 = vunpack.c.l.b16 %v309
    %v2363 = vunpack.c.h.b16 %v309
    %v2364 = vunpack.c.l.b16 %v310
    %v2365 = vunpack.c.h.b16 %v310
    %v2366 = vunpack.c.l.b16 %v311
    %v2367 = vunpack.c.h.b16 %v311
    %v2368 = vunpack.c.l.b16 %v312
    %v2369 = vunpack.c.h.b16 %v312
    %v2370 = vunpack.c.l.b16 %v313
    %v2371 = vunpack.c.h.b16 %v313
    %v2372 = vunpack.c.l.b16 %v314
    %v2373 = vunpack.c.h.b16 %v314
    %v2374 = vunpack.c.l.b16 %v315
    %v2375 = vunpack.c.h.b16 %v315
    %v2376 = vunpack.c.l.b16 %v316
    %v2377 = vunpack.c.h.b16 %v316
    %v2378 = vunpack.c.l.b16 %v317
    %v2379 = vunpack.c.h.b16 %v317
    %v2380 = vunpack.c.l.b16 %v318
    %v2381 = vunpack.c.h.b16 %v318
    %v2382 = vunpack.c.l.b16 %v319
    %v2383 = vunpack.c.h.b16 %v319
    %v2384 = vunpack.c.l.b16 %v320
    %v2385 = vunpack.c.h.b16 %v320
    %v2386 = vunpack.c.l.b16 %v321
    %v2387 = vunpack.c.h.b16 %v321
    %v2388 = vunpack.c.l.b16 %v322
    %v2389 = vunpack.c.h.b16 %v322
    %v2390 = vunpack.c.l.b16 %v323
    %v2391 = vunpack.c.h.b16 %v323
    %v2392 = vunpack.c.l.b16 %v324
    %v2393 = vunpack.c.h.b16 %v324
    %v2394 = vunpack.c.l.b16 %v325
    %v2395 = vunpack.c.h.b16 %v325
    %v2396 = vunpack.c.l.b16 %v326
    %v2397 = vunpack.c.h.b16 %v326
    %v2398 = vunpack.c.l.b16 %v327
    %v2399 = vunpack.c.h.b16 %v327
    %v2400 = vunpack.c.l.b16 %v328
    %v2401 = vunpack.c.h.b16 %v328
    %v2402 = vunpack.c.l.b16 %v329
    %v2403 = vunpack.c.h.b16 %v329
    %v2404 = vunpack.c.l.b16 %v330
    %v2405 = vunpack.c.h.b16 %v330
    %v2406 = vunpack.c.l.b16 %v331
    %v2407 = vunpack.c.h.b16 %v331
    %v2408 = vunpack.c.l.b16 %v332
    %v2409 = vunpack.c.h.b16 %v332
    %v2410 = vunpack.c.l.b16 %v333
    %v2411 = vunpack.c.h.b16 %v333
    %v2412 = vunpack.c.l.b16 %v334
    %v2413 = vunpack.c.h.b16 %v334
    %v2414 = vunpack.c.l.b16 %v335
    %v2415 = vunpack.c.h.b16 %v335
    %v2416 = vunpack.c.l.b16 %v336
    %v2417 = vunpack.c.h.b16 %v336
    %v2418 = vunpack.c.l.b16 %v337
    %v2419 = vunpack.c.h.b16 %v337
    %v2420 = vunpack.c.l.b16 %v338
    %v2421 = vunpack.c.h.b16 %v338
    %v2422 = vunpack.c.l.b16 %v339
    %v2423 = vunpack.c.h.b16 %v339
    %v2424 = vunpack.c.l.b16 %v340
    %v2425 = vunpack.c.h.b16 %v340
    %v2426 = vunpack.c.l.b16 %v341
    %v2427 = vunpack.c.h.b16 %v341
    %v2428 = vunpack.c.l.b16 %v342
    %v2429 = vunpack.c.h.b16 %v342
    %v2430 = vunpack.c.l.b16 %v343
    %v2431 = vunpack.c.h.b16 %v343
    %v2432 = vunpack.c.l.b16 %v344
    %v2433 = vunpack.c.h.b16 %v344
    %v2434 = vunpack.c.l.b16 %v345
    %v2435 = vunpack.c.h.b16 %v345
    %v2436 = vunpack.c.l.b16 %v346
    %v2437 = vunpack.c.h.b16 %v346
    %v2438 = vunpack.c.l.b16 %v347
    %v2439 = vunpack.c.h.b16 %v347
    %v2440 = vunpack.c.l.b16 %v348
    %v2441 = vunpack.c.h.b16 %v348
    %v2442 = vunpack.c.l.b16 %v349
    %v2443 = vunpack.c.h.b16 %v349
    %v2444 = vunpack.c.l.b16 %v350
    %v2445 = vunpack.c.h.b16 %v350
    %v2446 = vunpack.c.l.b16 %v351
    %v2447 = vunpack.c.h.b16 %v351
    %v2448 = vunpack.c.l.b16 %v352
    %v2449 = vunpack.c.h.b16 %v352
    %v2450 = vunpack.c.l.b16 %v353
    %v2451 = vunpack.c.h.b16 %v353
    %v2452 = vunpack.c.l.b16 %v354
    %v2453 = vunpack.c.h.b16 %v354
    %v2454 = vunpack.c.l.b16 %v355
    %v2455 = vunpack.c.h.b16 %v355
    %v2456 = vunpack.c.l.b16 %v356
    %v2457 = vunpack.c.h.b16 %v356
    %v2458 = vunpack.c.l.b16 %v357
    %v2459 = vunpack.c.h.b16 %v357
    %v2460 = vunpack.c.l.b16 %v358
    %v2461 = vunpack.c.h.b16 %v358
    %v2462 = vunpack.c.l.b16 %v359
    %v2463 = vunpack.c.h.b16 %v359
    %v2464 = vunpack.c.l.b16 %v360
    %v2465 = vunpack.c.h.b16 %v360
    %v2466 = vunpack.c.l.b16 %v361
    %v2467 = vunpack.c.h.b16 %v361
    %v2468 = vunpack.c.l.b16 %v362
    %v2469 = vunpack.c.h.b16 %v362
    %v2470 = vunpack.c.l.b16 %v363
    %v2471 = vunpack.c.h.b16 %v363
    %v2472 = vunpack.c.l.b16 %v364
    %v2473 = vunpack.c.h.b16 %v364
    %v2474 = vunpack.c.l.b16 %v365
    %v2475 = vunpack.c.h.b16 %v365
    %v2476 = vunpack.c.l.b16 %v366
    %v2477 = vunpack.c.h.b16 %v366
    %v2478 = vunpack.c.l.b16 %v367
    %v2479 = vunpack.c.h.b16 %v367
    %v2480 = vunpack.c.l.b16 %v368
    %v2481 = vunpack.c.h.b16 %v368
    %v2482 = vunpack.c.l.b16 %v369
    %v2483 = vunpack.c.h.b16 %v369
    %v2484 = vunpack.c.l.b16 %v370
    %v2485 = vunpack.c.h.b16 %v370
    %v2486 = vunpack.c.l.b16 %v371
    %v2487 = vunpack.c.h.b16 %v371
    %v2488 = vunpack.c.l.b16 %v372
    %v2489 = vunpack.c.h.b16 %v372
    %v2490 = vunpack.c.l.b16 %v373
    %v2491 = vunpack.c.h.b16 %v373
    %v2492 = vunpack.c.l.b16 %v374
    %v2493 = vunpack.c.h.b16 %v374
    %v2494 = vunpack.c.l.b16 %v375
    %v2495 = vunpack.c.h.b16 %v375
    %v2496 = vunpack.c.l.b16 %v376
    %v2497 = vunpack.c.h.b16 %v376
    %v2498 = vunpack.c.l.b16 %v377
    %v2499 = vunpack.c.h.b16 %v377
    %v2500 = vunpack.c.l.b16 %v378
    %v2501 = vunpack.c.h.b16 %v378
    %v2502 = vunpack.c.l.b16 %v379
    %v2503 = vunpack.c.h.b16 %v379
    %v2504 = vunpack.c.l.b16 %v380
    %v2505 = vunpack.c.h.b16 %v380
    %v2506 = vunpack.c.l.b16 %v381
    %v2507 = vunpack.c.h.b16 %v381
    %v2508 = vunpack.c.l.b16 %v382
    %v2509 = vunpack.c.h.b16 %v382
    %v2510 = vunpack.c.l.b16 %v383
    %v2511 = vunpack.c.h.b16 %v383
    %v2512 = vunpack.c.l.b16 %v384
    %v2513 = vunpack.c.h.b16 %v384
    %v2514 = vunpack.c.l.b16 %v385
    %v2515 = vunpack.c.h.b16 %v385
    %v2516 = vunpack.c.l.b16 %v386
    %v2517 = vunpack.c.h.b16 %v386
    %v2518 = vunpack.c.l.b16 %v387
    %v2519 = vunpack.c.h.b16 %v387
    %v2520 = vunpack.c.l.b16 %v388
    %v2521 = vunpack.c.h.b16 %v388
    %v2522 = vunpack.c.l.b16 %v389
    %v2523 = vunpack.c.h.b16 %v389
    %v2524 = vunpack.c.l.b16 %v390
    %v2525 = vunpack.c.h.b16 %v390
    %v2526 = vunpack.c.l.b16 %v391
    %v2527 = vunpack.c.h.b16 %v391
    %v2528 = vunpack.c.l.b16 %v392
    %v2529 = vunpack.c.h.b16 %v392
    %v2530 = vunpack.c.l.b16 %v393
    %v2531 = vunpack.c.h.b16 %v393
    %v2532 = vunpack.c.l.b16 %v394
    %v2533 = vunpack.c.h.b16 %v394
    %v2534 = vunpack.c.l.b16 %v395
    %v2535 = vunpack.c.h.b16 %v395
    %v2536 = vunpack.c.l.b16 %v396
    %v2537 = vunpack.c.h.b16 %v396
    %v2538 = vunpack.c.l.b16 %v397
    %v2539 = vunpack.c.h.b16 %v397
    %v2540 = vunpack.c.l.b16 %v398
    %v2541 = vunpack.c.h.b16 %v398
    %v2542 = vunpack.c.l.b16 %v399
    %v2543 = vunpack.c.h.b16 %v399
    %v2544 = vunpack.c.l.b16 %v400
    %v2545 = vunpack.c.h.b16 %v400
    %v2546 = vunpack.c.l.b16 %v401
    %v2547 = vunpack.c.h.b16 %v401
    %v2548 = vunpack.c.l.b16 %v402
    %v2549 = vunpack.c.h.b16 %v402
    %v2550 = vunpack.c.l.b16 %v403
    %v2551 = vunpack.c.h.b16 %v403
    %v2552 = vunpack.c.l.b16 %v404
    %v2553 = vunpack.c.h.b16 %v404
    %v2554 = vunpack.c.l.b16 %v405
    %v2555 = vunpack.c.h.b16 %v405
    %v2556 = vunpack.c.l.b16 %v406
    %v2557 = vunpack.c.h.b16 %v406
    %v2558 = vunpack.c.l.b16 %v407
    %v2559 = vunpack.c.h.b16 %v407
    %v2560 = vunpack.c.l.b16 %v408
    %v2561 = vunpack.c.h.b16 %v408
    %v2562 = vunpack.c.l.b16 %v409
    %v2563 = vunpack.c.h.b16 %v409
    %v2564 = vunpack.c.l.b16 %v410
    %v2565 = vunpack.c.h.b16 %v410
    %v2566 = vunpack.c.l.b16 %v411
    %v2567 = vunpack.c.h.b16 %v411
    %v2568 = vunpack.c.l.b16 %v412
    %v2569 = vunpack.c.h.b16 %v412
    %v2570 = vunpack.c.l.b16 %v413
    %v2571 = vunpack.c.h.b16 %v413
    %v2572 = vunpack.c.l.b16 %v414
    %v2573 = vunpack.c.h.b16 %v414
    %v2574 = vunpack.c.l.b16 %v415
    %v2575 = vunpack.c.h.b16 %v415
    %v2576 = vunpack.c.l.b16 %v416
    %v2577 = vunpack.c.h.b16 %v416
    %v2578 = vunpack.c.l.b16 %v417
    %v2579 = vunpack.c.h.b16 %v417
    %v2580 = vunpack.c.l.b16 %v418
    %v2581 = vunpack.c.h.b16 %v418
    %v2582 = vunpack.c.l.b16 %v419
    %v2583 = vunpack.c.h.b16 %v419
    %v2584 = vunpack.c.l.b16 %v420
    %v2585 = vunpack.c.h.b16 %v420
    %v2586 = vunpack.c.l.b16 %v421
    %v2587 = vunpack.c.h.b16 %v421
    %v2588 = vunpack.c.l.b16 %v422
    %v2589 = vunpack.c.h.b16 %v422
    %v2590 = vunpack.c.l.b16 %v423
    %v2591 = vunpack.c.h.b16 %v423
    %v2592 = vunpack.c.l.b16 %v424
    %v2593 = vunpack.c.h.b16 %v424
    %v2594 = vunpack.c.l.b16 %v425
    %v2595 = vunpack.c.h.b16 %v425
    %v2596 = vunpack.c.l.b16 %v426
    %v2597 = vunpack.c.h.b16 %v426
    %v2598 = vunpack.c.l.b16 %v427
    %v2599 = vunpack.c.h.b16 %v427
    %v2600 = vunpack.c.l.b16 %v428
    %v2601 = vunpack.c.h.b16 %v428
    %v2602 = vunpack.c.l.b16 %v429
    %v2603 = vunpack.c.h.b16 %v429
    %v2604 = vunpack.c.l.b16 %v430
    %v2605 = vunpack.c.h.b16 %v430
    %v2606 = vunpack.c.l.b16 %v431
    %v2607 = vunpack.c.h.b16 %v431
    %v2608 = vunpack.c.l.b16 %v432
    %v2609 = vunpack.c.h.b16 %v432
    %v2610 = vunpack.c.l.b16 %v433
    %v2611 = vunpack.c.h.b16 %v433
    %v2612 = vunpack.c.l.b16 %v434
    %v2613 = vunpack.c.h.b16 %v434
    %v2614 = vunpack.c.l.b16 %v435
    %v2615 = vunpack.c.h.b16 %v435
    %v2616 = vunpack.c.l.b16 %v436
    %v2617 = vunpack.c.h.b16 %v436
    %v2618 = vunpack.c.l.b16 %v437
    %v2619 = vunpack.c.h.b16 %v437
    %v2620 = vunpack.c.l.b16 %v438
    %v2621 = vunpack.c.h.b16 %v438
    %v2622 = vunpack.c.l.b16 %v439
    %v2623 = vunpack.c.h.b16 %v439
    %v2624 = vunpack.c.l.b16 %v440
    %v2625 = vunpack.c.h.b16 %v440
    %v2626 = vunpack.c.l.b16 %v441
    %v2627 = vunpack.c.h.b16 %v441
    %v2628 = vunpack.c.l.b16 %v442
    %v2629 = vunpack.c.h.b16 %v442
    %v2630 = vunpack.c.l.b16 %v443
    %v2631 = vunpack.c.h.b16 %v443
    %v2632 = vunpack.c.l.b16 %v444
    %v2633 = vunpack.c.h.b16 %v444
    %v2634 = vunpack.c.l.b16 %v445
    %v2635 = vunpack.c.h.b16 %v445
    %v2636 = vunpack.c.l.b16 %v446
    %v2637 = vunpack.c.h.b16 %v446
    %v2638 = vunpack.c.l.b16 %v447
    %v2639 = vunpack.c.h.b16 %v447
    %v2640 = vunpack.c.l.b16 %v448
    %v2641 = vunpack.c.h.b16 %v448
    %v2642 = vunpack.c.l.b16 %v449
    %v2643 = vunpack.c.h.b16 %v449
    %v2644 = vpack.c.b16 %v2140, %v2132
    %v2645 = vpack.c.b16 %v2141, %v2133
    %v2646 = vpack.c.b16 %v2142, %v2134
    %v2647 = vpack.c.b16 %v2143, %v2135
    %v2648 = vpack.c.b16 %v2144, %v2136
    %v2649 = vpack.c.b16 %v2145, %v2137
    %v2650 = vpack.c.b16 %v2146, %v2138
    %v2651 = vpack.c.b16 %v2147, %v2139
    %v2652 = vpack.c.b16 %v2156, %v2148
    %v2653 = vpack.c.b16 %v2157, %v2149
    %v2654 = vpack.c.b16 %v2158, %v2150
    %v2655 = vpack.c.b16 %v2159, %v2151
    %v2656 = vpack.c.b16 %v2160, %v2152
    %v2657 = vpack.c.b16 %v2161, %v2153
    %v2658 = vpack.c.b16 %v2162, %v2154
    %v2659 = vpack.c.b16 %v2163, %v2155
    %v2660 = vpack.c.b16 %v2172, %v2164
    %v2661 = vpack.c.b16 %v2173, %v2165
    %v2662 = vpack.c.b16 %v2174, %v2166
    %v2663 = vpack.c.b16 %v2175, %v2167
    %v2664 = vpack.c.b16 %v2176, %v2168
    %v2665 = vpack.c.b16 %v2177, %v2169
    %v2666 = vpack.c.b16 %v2178, %v2170
    %v2667 = vpack.c.b16 %v2179, %v2171
    %v2668 = vpack.c.b16 %v2188, %v2180
    %v2669 = vpack.c.b16 %v2189, %v2181
    %v2670 = vpack.c.b16 %v2190, %v2182
    %v2671 = vpack.c.b16 %v2191, %v2183
    %v2672 = vpack.c.b16 %v2192, %v2184
    %v2673 = vpack.c.b16 %v2193, %v2185
    %v2674 = vpack.c.b16 %v2194, %v2186
    %v2675 = vpack.c.b16 %v2195, %v2187
    %v2676 = vpack.c.b16 %v2204, %v2196
    %v2677 = vpack.c.b16 %v2205, %v2197
    %v2678 = vpack.c.b16 %v2206, %v2198
    %v2679 = vpack.c.b16 %v2207, %v2199
    %v2680 = vpack.c.b16 %v2208, %v2200
    %v2681 = vpack.c.b16 %v2209, %v2201
    %v2682 = vpack.c.b16 %v2210, %v2202
    %v2683 = vpack.c.b16 %v2211, %v2203
    %v2684 = vpack.c.b16 %v2220, %v2212
    %v2685 = vpack.c.b16 %v2221, %v2213
    %v2686 = vpack.c.b16 %v2222, %v2214
    %v2687 = vpack.c.b16 %v2223, %v2215
    %v2688 = vpack.c.b16 %v2224, %v2216
    %v2689 = vpack.c.b16 %v2225, %v2217
    %v2690 = vpack.c.b16 %v2226, %v2218
    %v2691 = vpack.c.b16 %v2227, %v2219
    %v2692 = vpack.c.b16 %v2236, %v2228
    %v2693 = vpack.c.b16 %v2237, %v2229
    %v2694 = vpack.c.b16 %v2238, %v2230
    %v2695 = vpack.c.b16 %v2239, %v2231
    %v2696 = vpack.c.b16 %v2240, %v2232
    %v2697 = vpack.c.b16 %v2241, %v2233
    %v2698 = vpack.c.b16 %v2242, %v2234
    %v2699 = vpack.c.b16 %v2243, %v2235
    %v2700 = vpack.c.b16 %v2252, %v2244
    %v2701 = vpack.c.b16 %v2253, %v2245
    %v2702 = vpack.c.b16 %v2254, %v2246
    %v2703 = vpack.c.b16 %v2255, %v2247
    %v2704 = vpack.c.b16 %v2256, %v2248
    %v2705 = vpack.c.b16 %v2257, %v2249
    %v2706 = vpack.c.b16 %v2258, %v2250
    %v2707 = vpack.c.b16 %v2259, %v2251
    %v2708 = vpack.c.b16 %v2268, %v2260
    %v2709 = vpack.c.b16 %v2269, %v2261
    %v2710 = vpack.c.b16 %v2270, %v2262
    %v2711 = vpack.c.b16 %v2271, %v2263
    %v2712 = vpack.c.b16 %v2272, %v2264
    %v2713 = vpack.c.b16 %v2273, %v2265
    %v2714 = vpack.c.b16 %v2274, %v2266
    %v2715 = vpack.c.b16 %v2275, %v2267
    %v2716 = vpack.c.b16 %v2284, %v2276
    %v2717 = vpack.c.b16 %v2285, %v2277
    %v2718 = vpack.c.b16 %v2286, %v2278
    %v2719 = vpack.c.b16 %v2287, %v2279
    %v2720 = vpack.c.b16 %v2288, %v2280
    %v2721 = vpack.c.b16 %v2289, %v2281
    %v2722 = vpack.c.b16 %v2290, %v2282
    %v2723 = vpack.c.b16 %v2291, %v2283
    %v2724 = vpack.c.b16 %v2300, %v2292
    %v2725 = vpack.c.b16 %v2301, %v2293
    %v2726 = vpack.c.b16 %v2302, %v2294
    %v2727 = vpack.c.b16 %v2303, %v2295
    %v2728 = vpack.c.b16 %v2304, %v2296
    %v2729 = vpack.c.b16 %v2305, %v2297
    %v2730 = vpack.c.b16 %v2306, %v2298
    %v2731 = vpack.c.b16 %v2307, %v2299
    %v2732 = vpack.c.b16 %v2316, %v2308
    %v2733 = vpack.c.b16 %v2317, %v2309
    %v2734 = vpack.c.b16 %v2318, %v2310
    %v2735 = vpack.c.b16 %v2319, %v2311
    %v2736 = vpack.c.b16 %v2320, %v2312
    %v2737 = vpack.c.b16 %v2321, %v2313
    %v2738 = vpack.c.b16 %v2322, %v2314
    %v2739 = vpack.c.b16 %v2323, %v2315
    %v2740 = vpack.c.b16 %v2332, %v2324
    %v2741 = vpack.c.b16 %v2333, %v2325
    %v2742 = vpack.c.b16 %v2334, %v2326
    %v2743 = vpack.c.b16 %v2335, %v2327
    %v2744 = vpack.c.b16 %v2336, %v2328
    %v2745 = vpack.c.b16 %v2337, %v2329
    %v2746 = vpack.c.b16 %v2338, %v2330
    %v2747 = vpack.c.b16 %v2339, %v2331
    %v2748 = vpack.c.b16 %v2348, %v2340
    %v2749 = vpack.c.b16 %v2349, %v2341
    %v2750 = vpack.c.b16 %v2350, %v2342
    %v2751 = vpack.c.b16 %v2351, %v2343
    %v2752 = vpack.c.b16 %v2352, %v2344
    %v2753 = vpack.c.b16 %v2353, %v2345
    %v2754 = vpack.c.b16 %v2354, %v2346
    %v2755 = vpack.c.b16 %v2355, %v2347
    %v2756 = vpack.c.b16 %v2364, %v2356
    %v2757 = vpack.c.b16 %v2365, %v2357
    %v2758 = vpack.c.b16 %v2366, %v2358
    %v2759 = vpack.c.b16 %v2367, %v2359
    %v2760 = vpack.c.b16 %v2368, %v2360
    %v2761 = vpack.c.b16 %v2369, %v2361
    %v2762 = vpack.c.b16 %v2370, %v2362
    %v2763 = vpack.c.b16 %v2371, %v2363
    %v2764 = vpack.c.b16 %v2380, %v2372
    %v2765 = vpack.c.b16 %v2381, %v2373
    %v2766 = vpack.c.b16 %v2382, %v2374
    %v2767 = vpack.c.b16 %v2383, %v2375
    %v2768 = vpack.c.b16 %v2384, %v2376
    %v2769 = vpack.c.b16 %v2385, %v2377
    %v2770 = vpack.c.b16 %v2386, %v2378
    %v2771 = vpack.c.b16 %v2387, %v2379
    %v2772 = vpack.c.b16 %v2396, %v2388
    %v2773 = vpack.c.b16 %v2397, %v2389
    %v2774 = vpack.c.b16 %v2398, %v2390
    %v2775 = vpack.c.b16 %v2399, %v2391
    %v2776 = vpack.c.b16 %v2400, %v2392
    %v2777 = vpack.c.b16 %v2401, %v2393
    %v2778 = vpack.c.b16 %v2402, %v2394
    %v2779 = vpack.c.b16 %v2403, %v2395
    %v2780 = vpack.c.b16 %v2412, %v2404
    %v2781 = vpack.c.b16 %v2413, %v2405
    %v2782 = vpack.c.b16 %v2414, %v2406
    %v2783 = vpack.c.b16 %v2415, %v2407
    %v2784 = vpack.c.b16 %v2416, %v2408
    %v2785 = vpack.c.b16 %v2417, %v2409
    %v2786 = vpack.c.b16 %v2418, %v2410
    %v2787 = vpack.c.b16 %v2419, %v2411
    %v2788 = vpack.c.b16 %v2428, %v2420
    %v2789 = vpack.c.b16 %v2429, %v2421
    %v2790 = vpack.c.b16 %v2430, %v2422
    %v2791 = vpack.c.b16 %v2431, %v2423
    %v2792 = vpack.c.b16 %v2432, %v2424
    %v2793 = vpack.c.b16 %v2433, %v2425
    %v2794 = vpack.c.b16 %v2434, %v2426
    %v2795 = vpack.c.b16 %v2435, %v2427
    %v2796 = vpack.c.b16 %v2444, %v2436
    %v2797 = vpack.c.b16 %v2445, %v2437
    %v2798 = vpack.c.b16 %v2446, %v2438
    %v2799 = vpack.c.b16 %v2447, %v2439
    %v2800 = vpack.c.b16 %v2448, %v2440
    %v2801 = vpack.c.b16 %v2449, %v2441
    %v2802 = vpack.c.b16 %v2450, %v2442
    %v2803 = vpack.c.b16 %v2451, %v2443
    %v2804 = vpack.c.b16 %v2460, %v2452
    %v2805 = vpack.c.b16 %v2461, %v2453
    %v2806 = vpack.c.b16 %v2462, %v2454
    %v2807 = vpack.c.b16 %v2463, %v2455
    %v2808 = vpack.c.b16 %v2464, %v2456
    %v2809 = vpack.c.b16 %v2465, %v2457
    %v2810 = vpack.c.b16 %v2466, %v2458
    %v2811 = vpack.c.b16 %v2467, %v2459
    %v2812 = vpack.c.b16 %v2476, %v2468
    %v2813 = vpack.c.b16 %v2477, %v2469
    %v2814 = vpack.c.b16 %v2478, %v2470
    %v2815 = vpack.c.b16 %v2479, %v2471
    %v2816 = vpack.c.b16 %v2480, %v2472
    %v2817 = vpack.c.b16 %v2481, %v2473
    %v2818 = vpack.c.b16 %v2482, %v2474
    %v2819 = vpack.c.b16 %v2483, %v2475
    %v2820 = vpack.c.b16 %v2492, %v2484
    %v2821 = vpack.c.b16 %v2493, %v2485
    %v2822 = vpack.c.b16 %v2494, %v2486
    %v2823 = vpack.c.b16 %v2495, %v2487
    %v2824 = vpack.c.b16 %v2496, %v2488
    %v2825 = vpack.c.b16 %v2497, %v2489
    %v2826 = vpack.c.b16 %v2498, %v2490
    %v2827 = vpack.c.b16 %v2499, %v2491
    %v2828 = vpack.c.b16 %v2508, %v2500
    %v2829 = vpack.c.b16 %v2509, %v2501
    %v2830 = vpack.c.b16 %v2510, %v2502
    %v2831 = vpack.c.b16 %v2511, %v2503
    %v2832 = vpack.c.b16 %v2512, %v2504
    %v2833 = vpack.c.b16 %v2513, %v2505
    %v2834 = vpack.c.b16 %v2514, %v2506
    %v2835 = vpack.c.b16 %v2515, %v2507
    %v2836 = vpack.c.b16 %v2524, %v2516
    %v2837 = vpack.c.b16 %v2525, %v2517
    %v2838 = vpack.c.b16 %v2526, %v2518
    %v2839 = vpack.c.b16 %v2527, %v2519
    %v2840 = vpack.c.b16 %v2528, %v2520
    %v2841 = vpack.c.b16 %v2529, %v2521
    %v2842 = vpack.c.b16 %v2530, %v2522
    %v2843 = vpack.c.b16 %v2531, %v2523
    %v2844 = vpack.c.b16 %v2540, %v2532
    %v2845 = vpack.c.b16 %v2541, %v2533
    %v2846 = vpack.c.b16 %v2542, %v2534
    %v2847 = vpack.c.b16 %v2543, %v2535
    %v2848 = vpack.c.b16 %v2544, %v2536
    %v2849 = vpack.c.b16 %v2545, %v2537
    %v2850 = vpack.c.b16 %v2546, %v2538
    %v2851 = vpack.c.b16 %v2547, %v2539
    %v2852 = vpack.c.b16 %v2556, %v2548
    %v2853 = vpack.c.b16 %v2557, %v2549
    %v2854 = vpack.c.b16 %v2558, %v2550
    %v2855 = vpack.c.b16 %v2559, %v2551
    %v2856 = vpack.c.b16 %v2560, %v2552
    %v2857 = vpack.c.b16 %v2561, %v2553
    %v2858 = vpack.c.b16 %v2562, %v2554
    %v2859 = vpack.c.b16 %v2563, %v2555
    %v2860 = vpack.c.b16 %v2572, %v2564
    %v2861 = vpack.c.b16 %v2573, %v2565
    %v2862 = vpack.c.b16 %v2574, %v2566
    %v2863 = vpack.c.b16 %v2575, %v2567
    %v2864 = vpack.c.b16 %v2576, %v2568
    %v2865 = vpack.c.b16 %v2577, %v2569
    %v2866 = vpack.c.b16 %v2578, %v2570
    %v2867 = vpack.c.b16 %v2579, %v2571
    %v2868 = vpack.c.b16 %v2588, %v2580
    %v2869 = vpack.c.b16 %v2589, %v2581
    %v2870 = vpack.c.b16 %v2590, %v2582
    %v2871 = vpack.c.b16 %v2591, %v2583
    %v2872 = vpack.c.b16 %v2592, %v2584
    %v2873 = vpack.c.b16 %v2593, %v2585
    %v2874 = vpack.c.b16 %v2594, %v2586
    %v2875 = vpack.c.b16 %v2595, %v2587
    %v2876 = vpack.c.b16 %v2604, %v2596
    %v2877 = vpack.c.b16 %v2605, %v2597
    %v2878 = vpack.c.b16 %v2606, %v2598
    %v2879 = vpack.c.b16 %v2607, %v2599
    %v2880 = vpack.c.b16 %v2608, %v2600
    %v2881 = vpack.c.b16 %v2609, %v2601
    %v2882 = vpack.c.b16 %v2610, %v2602
    %v2883 = vpack.c.b16 %v2611, %v2603
    %v2884 = vpack.c.b16 %v2620, %v2612
    %v2885 = vpack.c.b16 %v2621, %v2613
    %v2886 = vpack.c.b16 %v2622, %v2614
    %v2887 = vpack.c.b16 %v2623, %v2615
    %v2888 = vpack.c.b16 %v2624, %v2616
    %v2889 = vpack.c.b16 %v2625, %v2617
    %v2890 = vpack.c.b16 %v2626, %v2618
    %v2891 = vpack.c.b16 %v2627, %v2619
    %v2892 = vpack.c.b16 %v2636, %v2628
    %v2893 = vpack.c.b16 %v2637, %v2629
    %v2894 = vpack.c.b16 %v2638, %v2630
    %v2895 = vpack.c.b16 %v2639, %v2631
    %v2896 = vpack.c.b16 %v2640, %v2632
    %v2897 = vpack.c.b16 %v2641, %v2633
    %v2898 = vpack.c.b16 %v2642, %v2634
    %v2899 = vpack.c.b16 %v2643, %v2635
    %3156 = vmatprep.subr.bf16.mxu0 %v2645
    %3157 = vmatpush1.bf16.msra.mxu0 %v2644
    %3158 = vmatprep.subr.bf16.mxu0 %v2653
    %3159 = vmatpush1.bf16.msra.mxu0 %v2652
    %3160 = vmatprep.subr.bf16.mxu0 %v2661
    %3161 = vmatpush1.bf16.msra.mxu0 %v2660
    %3162 = vmatprep.subr.bf16.mxu0 %v2669
    %3163 = vmatpush1.bf16.msra.mxu0 %v2668
    %3164 = vmatprep.subr.bf16.mxu0 %v2677
    %3165 = vmatpush1.bf16.msra.mxu0 %v2676
    %3166 = vmatprep.subr.bf16.mxu0 %v2685
    %3167 = vmatpush1.bf16.msra.mxu0 %v2684
    %3168 = vmatprep.subr.bf16.mxu0 %v2693
    %3169 = vmatpush1.bf16.msra.mxu0 %v2692
    %3170 = vmatprep.subr.bf16.mxu0 %v2701
    %3171 = vmatpush1.bf16.msra.mxu0 %v2700
    %3172 = vmatprep.subr.bf16.mxu0 %v2709
    %3173 = vmatpush1.bf16.msra.mxu0 %v2708
    %3174 = vmatprep.subr.bf16.mxu0 %v2717
    %3175 = vmatpush1.bf16.msra.mxu0 %v2716
    %3176 = vmatprep.subr.bf16.mxu0 %v2725
    %3177 = vmatpush1.bf16.msra.mxu0 %v2724
    %3178 = vmatprep.subr.bf16.mxu0 %v2733
    %3179 = vmatpush1.bf16.msra.mxu0 %v2732
    %3180 = vmatprep.subr.bf16.mxu0 %v2741
    %3181 = vmatpush1.bf16.msra.mxu0 %v2740
    %3182 = vmatprep.subr.bf16.mxu0 %v2749
    %3183 = vmatpush1.bf16.msra.mxu0 %v2748
    %3184 = vmatprep.subr.bf16.mxu0 %v2757
    %3185 = vmatpush1.bf16.msra.mxu0 %v2756
    %3186 = vmatprep.subr.bf16.mxu0 %v2765
    %3187 = vmatpush1.bf16.msra.mxu0 %v2764
    %3188 = vmatprep.mubr.bf16.mxu0 %v1056
    %3189 = vmatmul.mubr.bf16.gmra.mrb[0].mxu0 %v1055
    %v3190 = vpop.f32.mrb[0].mxu0
    %v3191 = vadd.f32 %v1747, %v3190
    %v3192 = vpop.f32.mrb[0].mxu0
    %v3193 = vadd.f32 %v1749, %v3192
    %v3194 = vpop.f32.mrb[0].mxu0
    %v3195 = vpop.f32.mrb[0].mxu0
    %3196 = vdwg.mxu0
    %3197 = vmatprep.subr.bf16.mxu0 %v2773
    %3198 = vmatpush1.bf16.msra.mxu0 %v2772
    %3199 = vmatprep.subr.bf16.mxu0 %v2781
    %3200 = vmatpush1.bf16.msra.mxu0 %v2780
    %3201 = vmatprep.subr.bf16.mxu0 %v2789
    %3202 = vmatpush1.bf16.msra.mxu0 %v2788
    %3203 = vmatprep.subr.bf16.mxu0 %v2797
    %3204 = vmatpush1.bf16.msra.mxu0 %v2796
    %3205 = vmatprep.subr.bf16.mxu0 %v2805
    %3206 = vmatpush1.bf16.msra.mxu0 %v2804
    %3207 = vmatprep.subr.bf16.mxu0 %v2813
    %3208 = vmatpush1.bf16.msra.mxu0 %v2812
    %3209 = vmatprep.subr.bf16.mxu0 %v2821
    %3210 = vmatpush1.bf16.msra.mxu0 %v2820
    %3211 = vmatprep.subr.bf16.mxu0 %v2829
    %3212 = vmatpush1.bf16.msra.mxu0 %v2828
    %3213 = vmatprep.subr.bf16.mxu0 %v2837
    %3214 = vmatpush1.bf16.msra.mxu0 %v2836
    %3215 = vmatprep.subr.bf16.mxu0 %v2845
    %3216 = vmatpush1.bf16.msra.mxu0 %v2844
    %3217 = vmatprep.subr.bf16.mxu0 %v2853
    %3218 = vmatpush1.bf16.msra.mxu0 %v2852
    %3219 = vmatprep.subr.bf16.mxu0 %v2861
    %3220 = vmatpush1.bf16.msra.mxu0 %v2860
    %3221 = vmatprep.subr.bf16.mxu0 %v2869
    %3222 = vmatpush1.bf16.msra.mxu0 %v2868
    %3223 = vmatprep.subr.bf16.mxu0 %v2877
    %3224 = vmatpush1.bf16.msra.mxu0 %v2876
    %3225 = vmatprep.subr.bf16.mxu0 %v2885
    %3226 = vmatpush1.bf16.msra.mxu0 %v2884
    %3227 = vmatprep.subr.bf16.mxu0 %v2893
    %3228 = vmatpush1.bf16.msra.mxu0 %v2892
    %3229 = vmatprep.mubr.bf16.mxu0 %v1058
    %3230 = vmatmul.mubr.bf16.gmra.mrb[0].mxu0 %v1057
    %v3231 = vpop.f32.mrb[0].mxu0
    %v3232 = vadd.f32 %v3191, %v3231
    %v3233 = vpop.f32.mrb[0].mxu0
    %v3234 = vadd.f32 %v3193, %v3233
    %v3235 = vpop.f32.mrb[0].mxu0
    %v3236 = vpop.f32.mrb[0].mxu0
    %3237 = vdwg.mxu0
    %3238 = vmatprep.subr.bf16.mxu0 %v2647
    %3239 = vmatpush1.bf16.msra.mxu0 %v2646
    %3240 = vmatprep.subr.bf16.mxu0 %v2655
    %3241 = vmatpush1.bf16.msra.mxu0 %v2654
    %3242 = vmatprep.subr.bf16.mxu0 %v2663
    %3243 = vmatpush1.bf16.msra.mxu0 %v2662
    %3244 = vmatprep.subr.bf16.mxu0 %v2671
    %3245 = vmatpush1.bf16.msra.mxu0 %v2670
    %3246 = vmatprep.subr.bf16.mxu0 %v2679
    %3247 = vmatpush1.bf16.msra.mxu0 %v2678
    %3248 = vmatprep.subr.bf16.mxu0 %v2687
    %3249 = vmatpush1.bf16.msra.mxu0 %v2686
    %3250 = vmatprep.subr.bf16.mxu0 %v2695
    %3251 = vmatpush1.bf16.msra.mxu0 %v2694
    %3252 = vmatprep.subr.bf16.mxu0 %v2703
    %3253 = vmatpush1.bf16.msra.mxu0 %v2702
    %3254 = vmatprep.subr.bf16.mxu0 %v2711
    %3255 = vmatpush1.bf16.msra.mxu0 %v2710
    %3256 = vmatprep.subr.bf16.mxu0 %v2719
    %3257 = vmatpush1.bf16.msra.mxu0 %v2718
    %3258 = vmatprep.subr.bf16.mxu0 %v2727
    %3259 = vmatpush1.bf16.msra.mxu0 %v2726
    %3260 = vmatprep.subr.bf16.mxu0 %v2735
    %3261 = vmatpush1.bf16.msra.mxu0 %v2734
    %3262 = vmatprep.subr.bf16.mxu0 %v2743
    %3263 = vmatpush1.bf16.msra.mxu0 %v2742
    %3264 = vmatprep.subr.bf16.mxu0 %v2751
    %3265 = vmatpush1.bf16.msra.mxu0 %v2750
    %3266 = vmatprep.subr.bf16.mxu0 %v2759
    %3267 = vmatpush1.bf16.msra.mxu0 %v2758
    %3268 = vmatprep.subr.bf16.mxu0 %v2767
    %3269 = vmatpush1.bf16.msra.mxu0 %v2766
    %3270 = vmatprep.mubr.bf16.mxu0 %v1056
    %3271 = vmatmul.mubr.bf16.gmra.mrb[0].mxu0 %v1055
    %v3272 = vpop.f32.mrb[0].mxu0
    %v3273 = vadd.f32 %v1788, %v3272
    %v3274 = vpop.f32.mrb[0].mxu0
    %v3275 = vadd.f32 %v1790, %v3274
    %v3276 = vpop.f32.mrb[0].mxu0
    %v3277 = vpop.f32.mrb[0].mxu0
    %3278 = vdwg.mxu0
    %3279 = vmatprep.subr.bf16.mxu0 %v2775
    %3280 = vmatpush1.bf16.msra.mxu0 %v2774
    %3281 = vmatprep.subr.bf16.mxu0 %v2783
    %3282 = vmatpush1.bf16.msra.mxu0 %v2782
    %3283 = vmatprep.subr.bf16.mxu0 %v2791
    %3284 = vmatpush1.bf16.msra.mxu0 %v2790
    %3285 = vmatprep.subr.bf16.mxu0 %v2799
    %3286 = vmatpush1.bf16.msra.mxu0 %v2798
    %3287 = vmatprep.subr.bf16.mxu0 %v2807
    %3288 = vmatpush1.bf16.msra.mxu0 %v2806
    %3289 = vmatprep.subr.bf16.mxu0 %v2815
    %3290 = vmatpush1.bf16.msra.mxu0 %v2814
    %3291 = vmatprep.subr.bf16.mxu0 %v2823
    %3292 = vmatpush1.bf16.msra.mxu0 %v2822
    %3293 = vmatprep.subr.bf16.mxu0 %v2831
    %3294 = vmatpush1.bf16.msra.mxu0 %v2830
    %3295 = vmatprep.subr.bf16.mxu0 %v2839
    %3296 = vmatpush1.bf16.msra.mxu0 %v2838
    %3297 = vmatprep.subr.bf16.mxu0 %v2847
    %3298 = vmatpush1.bf16.msra.mxu0 %v2846
    %3299 = vmatprep.subr.bf16.mxu0 %v2855
    %3300 = vmatpush1.bf16.msra.mxu0 %v2854
    %3301 = vmatprep.subr.bf16.mxu0 %v2863
    %3302 = vmatpush1.bf16.msra.mxu0 %v2862
    %3303 = vmatprep.subr.bf16.mxu0 %v2871
    %3304 = vmatpush1.bf16.msra.mxu0 %v2870
    %3305 = vmatprep.subr.bf16.mxu0 %v2879
    %3306 = vmatpush1.bf16.msra.mxu0 %v2878
    %3307 = vmatprep.subr.bf16.mxu0 %v2887
    %3308 = vmatpush1.bf16.msra.mxu0 %v2886
    %3309 = vmatprep.subr.bf16.mxu0 %v2895
    %3310 = vmatpush1.bf16.msra.mxu0 %v2894
    %3311 = vmatprep.mubr.bf16.mxu0 %v1058
    %3312 = vmatmul.mubr.bf16.gmra.mrb[0].mxu0 %v1057
    %v3313 = vpop.f32.mrb[0].mxu0
    %v3314 = vadd.f32 %v3273, %v3313
    %v3315 = vpop.f32.mrb[0].mxu0
    %v3316 = vadd.f32 %v3275, %v3315
    %v3317 = vpop.f32.mrb[0].mxu0
    %v3318 = vpop.f32.mrb[0].mxu0
    %3319 = vdwg.mxu0
    %3320 = vmatprep.subr.bf16.mxu0 %v2649
    %3321 = vmatpush1.bf16.msra.mxu0 %v2648
    %3322 = vmatprep.subr.bf16.mxu0 %v2657
    %3323 = vmatpush1.bf16.msra.mxu0 %v2656
    %3324 = vmatprep.subr.bf16.mxu0 %v2665
    %3325 = vmatpush1.bf16.msra.mxu0 %v2664
    %3326 = vmatprep.subr.bf16.mxu0 %v2673
    %3327 = vmatpush1.bf16.msra.mxu0 %v2672
    %3328 = vmatprep.subr.bf16.mxu0 %v2681
    %3329 = vmatpush1.bf16.msra.mxu0 %v2680
    %3330 = vmatprep.subr.bf16.mxu0 %v2689
    %3331 = vmatpush1.bf16.msra.mxu0 %v2688
    %3332 = vmatprep.subr.bf16.mxu0 %v2697
    %3333 = vmatpush1.bf16.msra.mxu0 %v2696
    %3334 = vmatprep.subr.bf16.mxu0 %v2705
    %3335 = vmatpush1.bf16.msra.mxu0 %v2704
    %3336 = vmatprep.subr.bf16.mxu0 %v2713
    %3337 = vmatpush1.bf16.msra.mxu0 %v2712
    %3338 = vmatprep.subr.bf16.mxu0 %v2721
    %3339 = vmatpush1.bf16.msra.mxu0 %v2720
    %3340 = vmatprep.subr.bf16.mxu0 %v2729
    %3341 = vmatpush1.bf16.msra.mxu0 %v2728
    %3342 = vmatprep.subr.bf16.mxu0 %v2737
    %3343 = vmatpush1.bf16.msra.mxu0 %v2736
    %3344 = vmatprep.subr.bf16.mxu0 %v2745
    %3345 = vmatpush1.bf16.msra.mxu0 %v2744
    %3346 = vmatprep.subr.bf16.mxu0 %v2753
    %3347 = vmatpush1.bf16.msra.mxu0 %v2752
    %3348 = vmatprep.subr.bf16.mxu0 %v2761
    %3349 = vmatpush1.bf16.msra.mxu0 %v2760
    %3350 = vmatprep.subr.bf16.mxu0 %v2769
    %3351 = vmatpush1.bf16.msra.mxu0 %v2768
    %3352 = vmatprep.mubr.bf16.mxu0 %v1056
    %3353 = vmatmul.mubr.bf16.gmra.mrb[0].mxu0 %v1055
    %v3354 = vpop.f32.mrb[0].mxu0
    %v3355 = vadd.f32 %v1829, %v3354
    %v3356 = vpop.f32.mrb[0].mxu0
    %v3357 = vadd.f32 %v1831, %v3356
    %v3358 = vpop.f32.mrb[0].mxu0
    %v3359 = vpop.f32.mrb[0].mxu0
    %3360 = vdwg.mxu0
    %3361 = vmatprep.subr.bf16.mxu0 %v2777
    %3362 = vmatpush1.bf16.msra.mxu0 %v2776
    %3363 = vmatprep.subr.bf16.mxu0 %v2785
    %3364 = vmatpush1.bf16.msra.mxu0 %v2784
    %3365 = vmatprep.subr.bf16.mxu0 %v2793
    %3366 = vmatpush1.bf16.msra.mxu0 %v2792
    %3367 = vmatprep.subr.bf16.mxu0 %v2801
    %3368 = vmatpush1.bf16.msra.mxu0 %v2800
    %3369 = vmatprep.subr.bf16.mxu0 %v2809
    %3370 = vmatpush1.bf16.msra.mxu0 %v2808
    %3371 = vmatprep.subr.bf16.mxu0 %v2817
    %3372 = vmatpush1.bf16.msra.mxu0 %v2816
    %3373 = vmatprep.subr.bf16.mxu0 %v2825
    %3374 = vmatpush1.bf16.msra.mxu0 %v2824
    %3375 = vmatprep.subr.bf16.mxu0 %v2833
    %3376 = vmatpush1.bf16.msra.mxu0 %v2832
    %3377 = vmatprep.subr.bf16.mxu0 %v2841
    %3378 = vmatpush1.bf16.msra.mxu0 %v2840
    %3379 = vmatprep.subr.bf16.mxu0 %v2849
    %3380 = vmatpush1.bf16.msra.mxu0 %v2848
    %3381 = vmatprep.subr.bf16.mxu0 %v2857
    %3382 = vmatpush1.bf16.msra.mxu0 %v2856
    %3383 = vmatprep.subr.bf16.mxu0 %v2865
    %3384 = vmatpush1.bf16.msra.mxu0 %v2864
    %3385 = vmatprep.subr.bf16.mxu0 %v2873
    %3386 = vmatpush1.bf16.msra.mxu0 %v2872
    %3387 = vmatprep.subr.bf16.mxu0 %v2881
    %3388 = vmatpush1.bf16.msra.mxu0 %v2880
    %3389 = vmatprep.subr.bf16.mxu0 %v2889
    %3390 = vmatpush1.bf16.msra.mxu0 %v2888
    %3391 = vmatprep.subr.bf16.mxu0 %v2897
    %3392 = vmatpush1.bf16.msra.mxu0 %v2896
    %3393 = vmatprep.mubr.bf16.mxu0 %v1058
    %3394 = vmatmul.mubr.bf16.gmra.mrb[0].mxu0 %v1057
    %v3395 = vpop.f32.mrb[0].mxu0
    %v3396 = vadd.f32 %v3355, %v3395
    %v3397 = vpop.f32.mrb[0].mxu0
    %v3398 = vadd.f32 %v3357, %v3397
    %v3399 = vpop.f32.mrb[0].mxu0
    %v3400 = vpop.f32.mrb[0].mxu0
    %3401 = vdwg.mxu0
    %3402 = vmatprep.subr.bf16.mxu0 %v2651
    %3403 = vmatpush1.bf16.msra.mxu0 %v2650
    %3404 = vmatprep.subr.bf16.mxu0 %v2659
    %3405 = vmatpush1.bf16.msra.mxu0 %v2658
    %3406 = vmatprep.subr.bf16.mxu0 %v2667
    %3407 = vmatpush1.bf16.msra.mxu0 %v2666
    %3408 = vmatprep.subr.bf16.mxu0 %v2675
    %3409 = vmatpush1.bf16.msra.mxu0 %v2674
    %3410 = vmatprep.subr.bf16.mxu0 %v2683
    %3411 = vmatpush1.bf16.msra.mxu0 %v2682
    %3412 = vmatprep.subr.bf16.mxu0 %v2691
    %3413 = vmatpush1.bf16.msra.mxu0 %v2690
    %3414 = vmatprep.subr.bf16.mxu0 %v2699
    %3415 = vmatpush1.bf16.msra.mxu0 %v2698
    %3416 = vmatprep.subr.bf16.mxu0 %v2707
    %3417 = vmatpush1.bf16.msra.mxu0 %v2706
    %3418 = vmatprep.subr.bf16.mxu0 %v2715
    %3419 = vmatpush1.bf16.msra.mxu0 %v2714
    %3420 = vmatprep.subr.bf16.mxu0 %v2723
    %3421 = vmatpush1.bf16.msra.mxu0 %v2722
    %3422 = vmatprep.subr.bf16.mxu0 %v2731
    %3423 = vmatpush1.bf16.msra.mxu0 %v2730
    %3424 = vmatprep.subr.bf16.mxu0 %v2739
    %3425 = vmatpush1.bf16.msra.mxu0 %v2738
    %3426 = vmatprep.subr.bf16.mxu0 %v2747
    %3427 = vmatpush1.bf16.msra.mxu0 %v2746
    %3428 = vmatprep.subr.bf16.mxu0 %v2755
    %3429 = vmatpush1.bf16.msra.mxu0 %v2754
    %3430 = vmatprep.subr.bf16.mxu0 %v2763
    %3431 = vmatpush1.bf16.msra.mxu0 %v2762
    %3432 = vmatprep.subr.bf16.mxu0 %v2771
    %3433 = vmatpush1.bf16.msra.mxu0 %v2770
    %3434 = vmatprep.mubr.bf16.mxu0 %v1056
    %3435 = vmatmul.mubr.bf16.gmra.mrb[0].mxu0 %v1055
    %v3436 = vpop.f32.mrb[0].mxu0
    %v3437 = vadd.f32 %v1870, %v3436
    %v3438 = vpop.f32.mrb[0].mxu0
    %v3439 = vadd.f32 %v1872, %v3438
    %v3440 = vpop.f32.mrb[0].mxu0
    %v3441 = vpop.f32.mrb[0].mxu0
    %3442 = vdwg.mxu0
    %3443 = vmatprep.subr.bf16.mxu0 %v2779
    %3444 = vmatpush1.bf16.msra.mxu0 %v2778
    %3445 = vmatprep.subr.bf16.mxu0 %v2787
    %3446 = vmatpush1.bf16.msra.mxu0 %v2786
    %3447 = vmatprep.subr.bf16.mxu0 %v2795
    %3448 = vmatpush1.bf16.msra.mxu0 %v2794
    %3449 = vmatprep.subr.bf16.mxu0 %v2803
    %3450 = vmatpush1.bf16.msra.mxu0 %v2802
    %3451 = vmatprep.subr.bf16.mxu0 %v2811
    %3452 = vmatpush1.bf16.msra.mxu0 %v2810
    %3453 = vmatprep.subr.bf16.mxu0 %v2819
    %3454 = vmatpush1.bf16.msra.mxu0 %v2818
    %3455 = vmatprep.subr.bf16.mxu0 %v2827
    %3456 = vmatpush1.bf16.msra.mxu0 %v2826
    %3457 = vmatprep.subr.bf16.mxu0 %v2835
    %3458 = vmatpush1.bf16.msra.mxu0 %v2834
    %3459 = vmatprep.subr.bf16.mxu0 %v2843
    %3460 = vmatpush1.bf16.msra.mxu0 %v2842
    %3461 = vmatprep.subr.bf16.mxu0 %v2851
    %3462 = vmatpush1.bf16.msra.mxu0 %v2850
    %3463 = vmatprep.subr.bf16.mxu0 %v2859
    %3464 = vmatpush1.bf16.msra.mxu0 %v2858
    %3465 = vmatprep.subr.bf16.mxu0 %v2867
    %3466 = vmatpush1.bf16.msra.mxu0 %v2866
    %3467 = vmatprep.subr.bf16.mxu0 %v2875
    %3468 = vmatpush1.bf16.msra.mxu0 %v2874
    %3469 = vmatprep.subr.bf16.mxu0 %v2883
    %3470 = vmatpush1.bf16.msra.mxu0 %v2882
    %3471 = vmatprep.subr.bf16.mxu0 %v2891
    %3472 = vmatpush1.bf16.msra.mxu0 %v2890
    %3473 = vmatprep.subr.bf16.mxu0 %v2899
    %3474 = vmatpush1.bf16.msra.mxu0 %v2898
    %3475 = vmatprep.mubr.bf16.mxu0 %v1058
    %3476 = vmatmul.mubr.bf16.gmra.mrb[0].mxu0 %v1057
    %v3477 = vpop.f32.mrb[0].mxu0
    %v3478 = vadd.f32 %v3437, %v3477
    %v3479 = vpop.f32.mrb[0].mxu0
    %v3480 = vadd.f32 %v3439, %v3479
    %v3481 = vpop.f32.mrb[0].mxu0
    %v3482 = vpop.f32.mrb[0].mxu0
    %3483 = vdwg.mxu0
    %v3485 = vlaneseq
    %v3486 = vshrl.u32 %v3485, 7
    %v3487 = vsub.s32 0, %v3486
    %v3488 = vrot.slane %v578, %v3487
    %v3489 = vlaneseq
    %v3490 = vshrl.u32 %v3489, 7
    %v3491 = vsub.s32 1, %v3490
    %v3492 = vrot.slane %v578, %v3491
    %v3493 = vlaneseq
    %v3494 = vshrl.u32 %v3493, 7
    %v3495 = vsub.s32 2, %v3494
    %v3496 = vrot.slane %v578, %v3495
    %v3497 = vlaneseq
    %v3498 = vshrl.u32 %v3497, 7
    %v3499 = vsub.s32 3, %v3498
    %v3500 = vrot.slane %v578, %v3499
    %v3501 = vlaneseq
    %v3502 = vshrl.u32 %v3501, 7
    %v3503 = vsub.s32 4, %v3502
    %v3504 = vrot.slane %v578, %v3503
    %v3505 = vlaneseq
    %v3506 = vshrl.u32 %v3505, 7
    %v3507 = vsub.s32 5, %v3506
    %v3508 = vrot.slane %v578, %v3507
    %v3509 = vlaneseq
    %v3510 = vshrl.u32 %v3509, 7
    %v3511 = vsub.s32 6, %v3510
    %v3512 = vrot.slane %v578, %v3511
    %v3513 = vlaneseq
    %v3514 = vshrl.u32 %v3513, 7
    %v3515 = vsub.s32 7, %v3514
    %v3516 = vrot.slane %v578, %v3515
    %v3525 = vadd.f32 %v3232, %v3488
    %v3526 = vadd.f32 %v3234, %v3492
    %v3527 = vadd.f32 %v3314, %v3496
    %v3528 = vadd.f32 %v3316, %v3500
    %v3529 = vadd.f32 %v3396, %v3504
    %v3530 = vadd.f32 %v3398, %v3508
    %v3531 = vadd.f32 %v3478, %v3512
    %v3532 = vadd.f32 %v3480, %v3516
    %v3533 = vmul.f32 %v3527, 0.5
    %v3534 = vmul.f32 %v3528, 0.5
    %v3535 = vtanh.pop %v3533
    %v3536 = vtanh.pop %v3534
    %v3537 = vmul.f32 %v3535, 0.5
    %v3538 = vmul.f32 %v3536, 0.5
    %v3539 = vadd.f32 %v3537, 0.5
    %v3540 = vadd.f32 %v3538, 0.5
    %v3543 = vunpack.c.l.s4 1983009808
    %v3544 = vunpack.c.0.s8 %v3543
    %v3545 = vlaneseq
    %v3546 = vshrl.u32 %v3545, 7
    %v3547 = vsub.s32 %v3544, %v3546
    %v3548 = vrot.slane %v614, %v3547
    %v3549 = vcombine.high %v3548, %v3548
    %v3552 = vmul.f32 %v3539, %v3548
    %v3553 = vmul.f32 %v3540, %v3549
    %v3554 = vmul.f32 %v3525, 0.5
    %v3555 = vmul.f32 %v3526, 0.5
    %v3556 = vtanh.pop %v3554
    %v3557 = vtanh.pop %v3555
    %v3558 = vmul.f32 %v3556, 0.5
    %v3559 = vmul.f32 %v3557, 0.5
    %v3560 = vadd.f32 %v3558, 0.5
    %v3561 = vadd.f32 %v3559, 0.5
    %v3562 = vtanh.pop %v3529
    %v3563 = vtanh.pop %v3530
    %v3564 = vmul.f32 %v3560, %v3562
    %v3565 = vmul.f32 %v3561, %v3563
    %v3566 = vadd.f32 %v3552, %v3564
    %v3567 = vadd.f32 %v3553, %v3565
    %v3568 = vmul.f32 %v3531, 0.5
    %v3569 = vmul.f32 %v3532, 0.5
    %v3570 = vtanh.pop %v3568
    %v3571 = vtanh.pop %v3569
    %v3572 = vmul.f32 %v3570, 0.5
    %v3573 = vmul.f32 %v3571, 0.5
    %v3574 = vadd.f32 %v3572, 0.5
    %v3575 = vadd.f32 %v3573, 0.5
    %v3576 = vtanh.pop %v3566
    %v3577 = vtanh.pop %v3567
    %v3578 = vmul.f32 %v3574, %v3576
    %v3579 = vmul.f32 %v3575, %v3577
    %v3580 = vpack.c.bf16 %v3578, %v3578
    %v3581 = vpack.c.bf16 %v3579, %v3579
    %v3583 = vlaneseq
    %v3584 = vshrl.u32 %v3583, 7
    %v3585 = vsub.s32 0, %v3584
    %v3586 = vrot.slane %v611, %v3585
    %v3587 = vlaneseq
    %v3588 = vshrl.u32 %v3587, 7
    %v3589 = vsub.s32 1, %v3588
    %v3590 = vrot.slane %v611, %v3589
    %v3625 = vunpack.c.l.b16 %v579
    %v3626 = vunpack.c.h.b16 %v579
    %v3627 = vunpack.c.l.b16 %v580
    %v3628 = vunpack.c.h.b16 %v580
    %v3629 = vunpack.c.l.b16 %v581
    %v3630 = vunpack.c.h.b16 %v581
    %v3631 = vunpack.c.l.b16 %v582
    %v3632 = vunpack.c.h.b16 %v582
    %v3633 = vunpack.c.l.b16 %v583
    %v3634 = vunpack.c.h.b16 %v583
    %v3635 = vunpack.c.l.b16 %v584
    %v3636 = vunpack.c.h.b16 %v584
    %v3637 = vunpack.c.l.b16 %v585
    %v3638 = vunpack.c.h.b16 %v585
    %v3639 = vunpack.c.l.b16 %v586
    %v3640 = vunpack.c.h.b16 %v586
    %v3641 = vunpack.c.l.b16 %v587
    %v3642 = vunpack.c.h.b16 %v587
    %v3643 = vunpack.c.l.b16 %v588
    %v3644 = vunpack.c.h.b16 %v588
    %v3645 = vunpack.c.l.b16 %v589
    %v3646 = vunpack.c.h.b16 %v589
    %v3647 = vunpack.c.l.b16 %v590
    %v3648 = vunpack.c.h.b16 %v590
    %v3649 = vunpack.c.l.b16 %v591
    %v3650 = vunpack.c.h.b16 %v591
    %v3651 = vunpack.c.l.b16 %v592
    %v3652 = vunpack.c.h.b16 %v592
    %v3653 = vunpack.c.l.b16 %v593
    %v3654 = vunpack.c.h.b16 %v593
    %v3655 = vunpack.c.l.b16 %v594
    %v3656 = vunpack.c.h.b16 %v594
    %v3657 = vunpack.c.l.b16 %v595
    %v3658 = vunpack.c.h.b16 %v595
    %v3659 = vunpack.c.l.b16 %v596
    %v3660 = vunpack.c.h.b16 %v596
    %v3661 = vunpack.c.l.b16 %v597
    %v3662 = vunpack.c.h.b16 %v597
    %v3663 = vunpack.c.l.b16 %v598
    %v3664 = vunpack.c.h.b16 %v598
    %v3665 = vunpack.c.l.b16 %v599
    %v3666 = vunpack.c.h.b16 %v599
    %v3667 = vunpack.c.l.b16 %v600
    %v3668 = vunpack.c.h.b16 %v600
    %v3669 = vunpack.c.l.b16 %v601
    %v3670 = vunpack.c.h.b16 %v601
    %v3671 = vunpack.c.l.b16 %v602
    %v3672 = vunpack.c.h.b16 %v602
    %v3673 = vunpack.c.l.b16 %v603
    %v3674 = vunpack.c.h.b16 %v603
    %v3675 = vunpack.c.l.b16 %v604
    %v3676 = vunpack.c.h.b16 %v604
    %v3677 = vunpack.c.l.b16 %v605
    %v3678 = vunpack.c.h.b16 %v605
    %v3679 = vunpack.c.l.b16 %v606
    %v3680 = vunpack.c.h.b16 %v606
    %v3681 = vunpack.c.l.b16 %v607
    %v3682 = vunpack.c.h.b16 %v607
    %v3683 = vunpack.c.l.b16 %v608
    %v3684 = vunpack.c.h.b16 %v608
    %v3685 = vunpack.c.l.b16 %v609
    %v3686 = vunpack.c.h.b16 %v609
    %v3687 = vunpack.c.l.b16 %v610
    %v3688 = vunpack.c.h.b16 %v610
    %v3689 = vpack.c.b16 %v3627, %v3625
    %v3690 = vpack.c.b16 %v3628, %v3626
    %v3691 = vpack.c.b16 %v3631, %v3629
    %v3692 = vpack.c.b16 %v3632, %v3630
    %v3693 = vpack.c.b16 %v3635, %v3633
    %v3694 = vpack.c.b16 %v3636, %v3634
    %v3695 = vpack.c.b16 %v3639, %v3637
    %v3696 = vpack.c.b16 %v3640, %v3638
    %v3697 = vpack.c.b16 %v3643, %v3641
    %v3698 = vpack.c.b16 %v3644, %v3642
    %v3699 = vpack.c.b16 %v3647, %v3645
    %v3700 = vpack.c.b16 %v3648, %v3646
    %v3701 = vpack.c.b16 %v3651, %v3649
    %v3702 = vpack.c.b16 %v3652, %v3650
    %v3703 = vpack.c.b16 %v3655, %v3653
    %v3704 = vpack.c.b16 %v3656, %v3654
    %v3705 = vpack.c.b16 %v3659, %v3657
    %v3706 = vpack.c.b16 %v3660, %v3658
    %v3707 = vpack.c.b16 %v3663, %v3661
    %v3708 = vpack.c.b16 %v3664, %v3662
    %v3709 = vpack.c.b16 %v3667, %v3665
    %v3710 = vpack.c.b16 %v3668, %v3666
    %v3711 = vpack.c.b16 %v3671, %v3669
    %v3712 = vpack.c.b16 %v3672, %v3670
    %v3713 = vpack.c.b16 %v3675, %v3673
    %v3714 = vpack.c.b16 %v3676, %v3674
    %v3715 = vpack.c.b16 %v3679, %v3677
    %v3716 = vpack.c.b16 %v3680, %v3678
    %v3717 = vpack.c.b16 %v3683, %v3681
    %v3718 = vpack.c.b16 %v3684, %v3682
    %v3719 = vpack.c.b16 %v3687, %v3685
    %v3720 = vpack.c.b16 %v3688, %v3686
    %3753 = vmatprep.subr.bf16.mxu0 %v3690
    %3754 = vmatpush1.bf16.msra.mxu0 %v3689
    %3755 = vmatprep.subr.bf16.mxu0 %v3692
    %3756 = vmatpush1.bf16.msra.mxu0 %v3691
    %3757 = vmatprep.subr.bf16.mxu0 %v3694
    %3758 = vmatpush1.bf16.msra.mxu0 %v3693
    %3759 = vmatprep.subr.bf16.mxu0 %v3696
    %3760 = vmatpush1.bf16.msra.mxu0 %v3695
    %3761 = vmatprep.subr.bf16.mxu0 %v3698
    %3762 = vmatpush1.bf16.msra.mxu0 %v3697
    %3763 = vmatprep.subr.bf16.mxu0 %v3700
    %3764 = vmatpush1.bf16.msra.mxu0 %v3699
    %3765 = vmatprep.subr.bf16.mxu0 %v3702
    %3766 = vmatpush1.bf16.msra.mxu0 %v3701
    %3767 = vmatprep.subr.bf16.mxu0 %v3704
    %3768 = vmatpush1.bf16.msra.mxu0 %v3703
    %3769 = vmatprep.subr.bf16.mxu0 %v3706
    %3770 = vmatpush1.bf16.msra.mxu0 %v3705
    %3771 = vmatprep.subr.bf16.mxu0 %v3708
    %3772 = vmatpush1.bf16.msra.mxu0 %v3707
    %3773 = vmatprep.subr.bf16.mxu0 %v3710
    %3774 = vmatpush1.bf16.msra.mxu0 %v3709
    %3775 = vmatprep.subr.bf16.mxu0 %v3712
    %3776 = vmatpush1.bf16.msra.mxu0 %v3711
    %3777 = vmatprep.subr.bf16.mxu0 %v3714
    %3778 = vmatpush1.bf16.msra.mxu0 %v3713
    %3779 = vmatprep.subr.bf16.mxu0 %v3716
    %3780 = vmatpush1.bf16.msra.mxu0 %v3715
    %3781 = vmatprep.subr.bf16.mxu0 %v3718
    %3782 = vmatpush1.bf16.msra.mxu0 %v3717
    %3783 = vmatprep.subr.bf16.mxu0 %v3720
    %3784 = vmatpush1.bf16.msra.mxu0 %v3719
    %3785 = vmatprep.mubr.bf16.mxu0 %v3581
    %3786 = vmatmul.mubr.bf16.gmra.mrb[0].mxu0 %v3580
    %v3787 = vpop.f32.mrb[0].mxu0
    %v3788 = vadd.f32 %v3586, %v3787
    %v3789 = vpop.f32.mrb[0].mxu0
    %v3790 = vadd.f32 %v3590, %v3789
    %v3791 = vpop.f32.mrb[0].mxu0
    %v3792 = vpop.f32.mrb[0].mxu0
    %3793 = vdwg.mxu0
    %v3796 = vcombine.low %v3788, %v3790
    %v3798 = vunpack.c.l.s4 1983009808
    %v3799 = vunpack.c.0.s8 %v3798
    %v3800 = vlaneseq
    %v3801 = vshrl.u32 %v3800, 7
    %v3802 = vsub.s32 %v3799, %v3801
    %v3803 = vrot.slane %v3796, %v3802
    %v3805 = vadd.f32 %v612, %v3803
    %3806 = vst [vmem:[#allocation14] sm:$0xf] %v3805
    %v3809 = vunpack.c.l.s4 1983009808
    %v3810 = vunpack.c.0.s8 %v3809
    %v3811 = vlaneseq
    %v3812 = vshrl.u32 %v3811, 7
    %v3813 = vsub.s32 %v3810, %v3812
    %v3814 = vrot.slane %v3805, %v3813
    %v3815 = vcombine.high %v3814, %v3814
    %v3818 = vpack.c.bf16 %v3814, %v3814
    %v3819 = vpack.c.bf16 %v3815, %v3815
    %3820 = vmatprep.subr.bf16.mxu0 %v842
    %3821 = vmatpush1.bf16.msra.mxu0 %v841
    %3822 = vmatprep.subr.bf16.mxu0 %v846
    %3823 = vmatpush1.bf16.msra.mxu0 %v845
    %3824 = vmatprep.subr.bf16.mxu0 %v850
    %3825 = vmatpush1.bf16.msra.mxu0 %v849
    %3826 = vmatprep.subr.bf16.mxu0 %v854
    %3827 = vmatpush1.bf16.msra.mxu0 %v853
    %3828 = vmatprep.subr.bf16.mxu0 %v858
    %3829 = vmatpush1.bf16.msra.mxu0 %v857
    %3830 = vmatprep.subr.bf16.mxu0 %v862
    %3831 = vmatpush1.bf16.msra.mxu0 %v861
    %3832 = vmatprep.subr.bf16.mxu0 %v866
    %3833 = vmatpush1.bf16.msra.mxu0 %v865
    %3834 = vmatprep.subr.bf16.mxu0 %v870
    %3835 = vmatpush1.bf16.msra.mxu0 %v869
    %3836 = vmatprep.subr.bf16.mxu0 %v874
    %3837 = vmatpush1.bf16.msra.mxu0 %v873
    %3838 = vmatprep.subr.bf16.mxu0 %v878
    %3839 = vmatpush1.bf16.msra.mxu0 %v877
    %3840 = vmatprep.subr.bf16.mxu0 %v882
    %3841 = vmatpush1.bf16.msra.mxu0 %v881
    %3842 = vmatprep.subr.bf16.mxu0 %v886
    %3843 = vmatpush1.bf16.msra.mxu0 %v885
    %3844 = vmatprep.subr.bf16.mxu0 %v890
    %3845 = vmatpush1.bf16.msra.mxu0 %v889
    %3846 = vmatprep.subr.bf16.mxu0 %v894
    %3847 = vmatpush1.bf16.msra.mxu0 %v893
    %3848 = vmatprep.subr.bf16.mxu0 %v898
    %3849 = vmatpush1.bf16.msra.mxu0 %v897
    %3850 = vmatprep.subr.bf16.mxu0 %v902
    %3851 = vmatpush1.bf16.msra.mxu0 %v901
    %3852 = vmatprep.mubr.bf16.mxu0 %v3819
    %3853 = vmatmul.mubr.bf16.gmra.mrb[0].mxu0 %v3818
    %v3854 = vpop.f32.mrb[0].mxu0
    %v3855 = vadd.f32 %v632, %v3854
    %v3856 = vpop.f32.mrb[0].mxu0
    %v3857 = vadd.f32 %v636, %v3856
    %v3858 = vpop.f32.mrb[0].mxu0
    %v3859 = vpop.f32.mrb[0].mxu0
    %3860 = vdwg.mxu0
    %3861 = vmatprep.subr.bf16.mxu0 %v844
    %3862 = vmatpush1.bf16.msra.mxu0 %v843
    %3863 = vmatprep.subr.bf16.mxu0 %v848
    %3864 = vmatpush1.bf16.msra.mxu0 %v847
    %3865 = vmatprep.subr.bf16.mxu0 %v852
    %3866 = vmatpush1.bf16.msra.mxu0 %v851
    %3867 = vmatprep.subr.bf16.mxu0 %v856
    %3868 = vmatpush1.bf16.msra.mxu0 %v855
    %3869 = vmatprep.subr.bf16.mxu0 %v860
    %3870 = vmatpush1.bf16.msra.mxu0 %v859
    %3871 = vmatprep.subr.bf16.mxu0 %v864
    %3872 = vmatpush1.bf16.msra.mxu0 %v863
    %3873 = vmatprep.subr.bf16.mxu0 %v868
    %3874 = vmatpush1.bf16.msra.mxu0 %v867
    %3875 = vmatprep.subr.bf16.mxu0 %v872
    %3876 = vmatpush1.bf16.msra.mxu0 %v871
    %3877 = vmatprep.subr.bf16.mxu0 %v876
    %3878 = vmatpush1.bf16.msra.mxu0 %v875
    %3879 = vmatprep.subr.bf16.mxu0 %v880
    %3880 = vmatpush1.bf16.msra.mxu0 %v879
    %3881 = vmatprep.subr.bf16.mxu0 %v884
    %3882 = vmatpush1.bf16.msra.mxu0 %v883
    %3883 = vmatprep.subr.bf16.mxu0 %v888
    %3884 = vmatpush1.bf16.msra.mxu0 %v887
    %3885 = vmatprep.subr.bf16.mxu0 %v892
    %3886 = vmatpush1.bf16.msra.mxu0 %v891
    %3887 = vmatprep.subr.bf16.mxu0 %v896
    %3888 = vmatpush1.bf16.msra.mxu0 %v895
    %3889 = vmatprep.subr.bf16.mxu0 %v900
    %3890 = vmatpush1.bf16.msra.mxu0 %v899
    %3891 = vmatprep.subr.bf16.mxu0 %v904
    %3892 = vmatpush1.bf16.msra.mxu0 %v903
    %3893 = vmatprep.mubr.bf16.mxu0 %v3819
    %3894 = vmatmul.mubr.bf16.gmra.mrb[0].mxu0 %v3818
    %v3895 = vpop.f32.mrb[0].mxu0
    %v3896 = vadd.f32 %v640, %v3895
    %v3897 = vpop.f32.mrb[0].mxu0
    %v3898 = vadd.f32 %v644, %v3897
    %v3899 = vpop.f32.mrb[0].mxu0
    %v3900 = vpop.f32.mrb[0].mxu0
    %3901 = vdwg.mxu0
    %v3902 = vmax.f32 %v3855, 0.0
    %v3903 = vmax.f32 %v3857, 0.0
    %v3904 = vmax.f32 %v3896, 0.0
    %v3905 = vmax.f32 %v3898, 0.0
    %v3906 = vpack.c.bf16 %v3902, %v3902
    %v3907 = vpack.c.bf16 %v3903, %v3903
    %v3908 = vpack.c.bf16 %v3904, %v3904
    %v3909 = vpack.c.bf16 %v3905, %v3905
    %3910 = vmatprep.subr.bf16.mxu0 %v1457
    %3911 = vmatpush1.bf16.msra.mxu0 %v1456
    %3912 = vmatprep.subr.bf16.mxu0 %v1465
    %3913 = vmatpush1.bf16.msra.mxu0 %v1464
    %3914 = vmatprep.subr.bf16.mxu0 %v1473
    %3915 = vmatpush1.bf16.msra.mxu0 %v1472
    %3916 = vmatprep.subr.bf16.mxu0 %v1481
    %3917 = vmatpush1.bf16.msra.mxu0 %v1480
    %3918 = vmatprep.subr.bf16.mxu0 %v1489
    %3919 = vmatpush1.bf16.msra.mxu0 %v1488
    %3920 = vmatprep.subr.bf16.mxu0 %v1497
    %3921 = vmatpush1.bf16.msra.mxu0 %v1496
    %3922 = vmatprep.subr.bf16.mxu0 %v1505
    %3923 = vmatpush1.bf16.msra.mxu0 %v1504
    %3924 = vmatprep.subr.bf16.mxu0 %v1513
    %3925 = vmatpush1.bf16.msra.mxu0 %v1512
    %3926 = vmatprep.subr.bf16.mxu0 %v1521
    %3927 = vmatpush1.bf16.msra.mxu0 %v1520
    %3928 = vmatprep.subr.bf16.mxu0 %v1529
    %3929 = vmatpush1.bf16.msra.mxu0 %v1528
    %3930 = vmatprep.subr.bf16.mxu0 %v1537
    %3931 = vmatpush1.bf16.msra.mxu0 %v1536
    %3932 = vmatprep.subr.bf16.mxu0 %v1545
    %3933 = vmatpush1.bf16.msra.mxu0 %v1544
    %3934 = vmatprep.subr.bf16.mxu0 %v1553
    %3935 = vmatpush1.bf16.msra.mxu0 %v1552
    %3936 = vmatprep.subr.bf16.mxu0 %v1561
    %3937 = vmatpush1.bf16.msra.mxu0 %v1560
    %3938 = vmatprep.subr.bf16.mxu0 %v1569
    %3939 = vmatpush1.bf16.msra.mxu0 %v1568
    %3940 = vmatprep.subr.bf16.mxu0 %v1577
    %3941 = vmatpush1.bf16.msra.mxu0 %v1576
    %3942 = vmatprep.mubr.bf16.mxu0 %v3581
    %3943 = vmatmul.mubr.bf16.gmra.mrb[0].mxu0 %v3580
    %v3944 = vpop.f32.mrb[0].mxu0
    %v3945 = vadd.f32 0.0, %v3944
    %v3946 = vpop.f32.mrb[0].mxu0
    %v3947 = vadd.f32 0.0, %v3946
    %v3948 = vpop.f32.mrb[0].mxu0
    %v3949 = vpop.f32.mrb[0].mxu0
    %3950 = vdwg.mxu0
    %3951 = vmatprep.subr.bf16.mxu0 %v1459
    %3952 = vmatpush1.bf16.msra.mxu0 %v1458
    %3953 = vmatprep.subr.bf16.mxu0 %v1467
    %3954 = vmatpush1.bf16.msra.mxu0 %v1466
    %3955 = vmatprep.subr.bf16.mxu0 %v1475
    %3956 = vmatpush1.bf16.msra.mxu0 %v1474
    %3957 = vmatprep.subr.bf16.mxu0 %v1483
    %3958 = vmatpush1.bf16.msra.mxu0 %v1482
    %3959 = vmatprep.subr.bf16.mxu0 %v1491
    %3960 = vmatpush1.bf16.msra.mxu0 %v1490
    %3961 = vmatprep.subr.bf16.mxu0 %v1499
    %3962 = vmatpush1.bf16.msra.mxu0 %v1498
    %3963 = vmatprep.subr.bf16.mxu0 %v1507
    %3964 = vmatpush1.bf16.msra.mxu0 %v1506
    %3965 = vmatprep.subr.bf16.mxu0 %v1515
    %3966 = vmatpush1.bf16.msra.mxu0 %v1514
    %3967 = vmatprep.subr.bf16.mxu0 %v1523
    %3968 = vmatpush1.bf16.msra.mxu0 %v1522
    %3969 = vmatprep.subr.bf16.mxu0 %v1531
    %3970 = vmatpush1.bf16.msra.mxu0 %v1530
    %3971 = vmatprep.subr.bf16.mxu0 %v1539
    %3972 = vmatpush1.bf16.msra.mxu0 %v1538
    %3973 = vmatprep.subr.bf16.mxu0 %v1547
    %3974 = vmatpush1.bf16.msra.mxu0 %v1546
    %3975 = vmatprep.subr.bf16.mxu0 %v1555
    %3976 = vmatpush1.bf16.msra.mxu0 %v1554
    %3977 = vmatprep.subr.bf16.mxu0 %v1563
    %3978 = vmatpush1.bf16.msra.mxu0 %v1562
    %3979 = vmatprep.subr.bf16.mxu0 %v1571
    %3980 = vmatpush1.bf16.msra.mxu0 %v1570
    %3981 = vmatprep.subr.bf16.mxu0 %v1579
    %3982 = vmatpush1.bf16.msra.mxu0 %v1578
    %3983 = vmatprep.mubr.bf16.mxu0 %v3581
    %3984 = vmatmul.mubr.bf16.gmra.mrb[0].mxu0 %v3580
    %v3985 = vpop.f32.mrb[0].mxu0
    %v3986 = vadd.f32 0.0, %v3985
    %v3987 = vpop.f32.mrb[0].mxu0
    %v3988 = vadd.f32 0.0, %v3987
    %v3989 = vpop.f32.mrb[0].mxu0
    %v3990 = vpop.f32.mrb[0].mxu0
    %3991 = vdwg.mxu0
    %3992 = vmatprep.subr.bf16.mxu0 %v1461
    %3993 = vmatpush1.bf16.msra.mxu0 %v1460
    %3994 = vmatprep.subr.bf16.mxu0 %v1469
    %3995 = vmatpush1.bf16.msra.mxu0 %v1468
    %3996 = vmatprep.subr.bf16.mxu0 %v1477
    %3997 = vmatpush1.bf16.msra.mxu0 %v1476
    %3998 = vmatprep.subr.bf16.mxu0 %v1485
    %3999 = vmatpush1.bf16.msra.mxu0 %v1484
    %4000 = vmatprep.subr.bf16.mxu0 %v1493
    %4001 = vmatpush1.bf16.msra.mxu0 %v1492
    %4002 = vmatprep.subr.bf16.mxu0 %v1501
    %4003 = vmatpush1.bf16.msra.mxu0 %v1500
    %4004 = vmatprep.subr.bf16.mxu0 %v1509
    %4005 = vmatpush1.bf16.msra.mxu0 %v1508
    %4006 = vmatprep.subr.bf16.mxu0 %v1517
    %4007 = vmatpush1.bf16.msra.mxu0 %v1516
    %4008 = vmatprep.subr.bf16.mxu0 %v1525
    %4009 = vmatpush1.bf16.msra.mxu0 %v1524
    %4010 = vmatprep.subr.bf16.mxu0 %v1533
    %4011 = vmatpush1.bf16.msra.mxu0 %v1532
    %4012 = vmatprep.subr.bf16.mxu0 %v1541
    %4013 = vmatpush1.bf16.msra.mxu0 %v1540
    %4014 = vmatprep.subr.bf16.mxu0 %v1549
    %4015 = vmatpush1.bf16.msra.mxu0 %v1548
    %4016 = vmatprep.subr.bf16.mxu0 %v1557
    %4017 = vmatpush1.bf16.msra.mxu0 %v1556
    %4018 = vmatprep.subr.bf16.mxu0 %v1565
    %4019 = vmatpush1.bf16.msra.mxu0 %v1564
    %4020 = vmatprep.subr.bf16.mxu0 %v1573
    %4021 = vmatpush1.bf16.msra.mxu0 %v1572
    %4022 = vmatprep.subr.bf16.mxu0 %v1581
    %4023 = vmatpush1.bf16.msra.mxu0 %v1580
    %4024 = vmatprep.mubr.bf16.mxu0 %v3581
    %4025 = vmatmul.mubr.bf16.gmra.mrb[0].mxu0 %v3580
    %v4026 = vpop.f32.mrb[0].mxu0
    %v4027 = vadd.f32 0.0, %v4026
    %v4028 = vpop.f32.mrb[0].mxu0
    %v4029 = vadd.f32 0.0, %v4028
    %v4030 = vpop.f32.mrb[0].mxu0
    %v4031 = vpop.f32.mrb[0].mxu0
    %4032 = vdwg.mxu0
    %4033 = vmatprep.subr.bf16.mxu0 %v1463
    %4034 = vmatpush1.bf16.msra.mxu0 %v1462
    %4035 = vmatprep.subr.bf16.mxu0 %v1471
    %4036 = vmatpush1.bf16.msra.mxu0 %v1470
    %4037 = vmatprep.subr.bf16.mxu0 %v1479
    %4038 = vmatpush1.bf16.msra.mxu0 %v1478
    %4039 = vmatprep.subr.bf16.mxu0 %v1487
    %4040 = vmatpush1.bf16.msra.mxu0 %v1486
    %4041 = vmatprep.subr.bf16.mxu0 %v1495
    %4042 = vmatpush1.bf16.msra.mxu0 %v1494
    %4043 = vmatprep.subr.bf16.mxu0 %v1503
    %4044 = vmatpush1.bf16.msra.mxu0 %v1502
    %4045 = vmatprep.subr.bf16.mxu0 %v1511
    %4046 = vmatpush1.bf16.msra.mxu0 %v1510
    %4047 = vmatprep.subr.bf16.mxu0 %v1519
    %4048 = vmatpush1.bf16.msra.mxu0 %v1518
    %4049 = vmatprep.subr.bf16.mxu0 %v1527
    %4050 = vmatpush1.bf16.msra.mxu0 %v1526
    %4051 = vmatprep.subr.bf16.mxu0 %v1535
    %4052 = vmatpush1.bf16.msra.mxu0 %v1534
    %4053 = vmatprep.subr.bf16.mxu0 %v1543
    %4054 = vmatpush1.bf16.msra.mxu0 %v1542
    %4055 = vmatprep.subr.bf16.mxu0 %v1551
    %4056 = vmatpush1.bf16.msra.mxu0 %v1550
    %4057 = vmatprep.subr.bf16.mxu0 %v1559
    %4058 = vmatpush1.bf16.msra.mxu0 %v1558
    %4059 = vmatprep.subr.bf16.mxu0 %v1567
    %4060 = vmatpush1.bf16.msra.mxu0 %v1566
    %4061 = vmatprep.subr.bf16.mxu0 %v1575
    %4062 = vmatpush1.bf16.msra.mxu0 %v1574
    %4063 = vmatprep.subr.bf16.mxu0 %v1583
    %4064 = vmatpush1.bf16.msra.mxu0 %v1582
    %4065 = vmatprep.mubr.bf16.mxu0 %v3581
    %4066 = vmatmul.mubr.bf16.gmra.mrb[0].mxu0 %v3580
    %v4067 = vpop.f32.mrb[0].mxu0
    %v4068 = vadd.f32 0.0, %v4067
    %v4069 = vpop.f32.mrb[0].mxu0
    %v4070 = vadd.f32 0.0, %v4069
    %v4071 = vpop.f32.mrb[0].mxu0
    %v4072 = vpop.f32.mrb[0].mxu0
    %4073 = vdwg.mxu0
    %4074 = vmatprep.subr.bf16.mxu0 %v2645
    %4075 = vmatpush1.bf16.msra.mxu0 %v2644
    %4076 = vmatprep.subr.bf16.mxu0 %v2653
    %4077 = vmatpush1.bf16.msra.mxu0 %v2652
    %4078 = vmatprep.subr.bf16.mxu0 %v2661
    %4079 = vmatpush1.bf16.msra.mxu0 %v2660
    %4080 = vmatprep.subr.bf16.mxu0 %v2669
    %4081 = vmatpush1.bf16.msra.mxu0 %v2668
    %4082 = vmatprep.subr.bf16.mxu0 %v2677
    %4083 = vmatpush1.bf16.msra.mxu0 %v2676
    %4084 = vmatprep.subr.bf16.mxu0 %v2685
    %4085 = vmatpush1.bf16.msra.mxu0 %v2684
    %4086 = vmatprep.subr.bf16.mxu0 %v2693
    %4087 = vmatpush1.bf16.msra.mxu0 %v2692
    %4088 = vmatprep.subr.bf16.mxu0 %v2701
    %4089 = vmatpush1.bf16.msra.mxu0 %v2700
    %4090 = vmatprep.subr.bf16.mxu0 %v2709
    %4091 = vmatpush1.bf16.msra.mxu0 %v2708
    %4092 = vmatprep.subr.bf16.mxu0 %v2717
    %4093 = vmatpush1.bf16.msra.mxu0 %v2716
    %4094 = vmatprep.subr.bf16.mxu0 %v2725
    %4095 = vmatpush1.bf16.msra.mxu0 %v2724
    %4096 = vmatprep.subr.bf16.mxu0 %v2733
    %4097 = vmatpush1.bf16.msra.mxu0 %v2732
    %4098 = vmatprep.subr.bf16.mxu0 %v2741
    %4099 = vmatpush1.bf16.msra.mxu0 %v2740
    %4100 = vmatprep.subr.bf16.mxu0 %v2749
    %4101 = vmatpush1.bf16.msra.mxu0 %v2748
    %4102 = vmatprep.subr.bf16.mxu0 %v2757
    %4103 = vmatpush1.bf16.msra.mxu0 %v2756
    %4104 = vmatprep.subr.bf16.mxu0 %v2765
    %4105 = vmatpush1.bf16.msra.mxu0 %v2764
    %4106 = vmatprep.mubr.bf16.mxu0 %v3907
    %4107 = vmatmul.mubr.bf16.gmra.mrb[0].mxu0 %v3906
    %v4108 = vpop.f32.mrb[0].mxu0
    %v4109 = vadd.f32 %v3945, %v4108
    %v4110 = vpop.f32.mrb[0].mxu0
    %v4111 = vadd.f32 %v3947, %v4110
    %v4112 = vpop.f32.mrb[0].mxu0
    %v4113 = vpop.f32.mrb[0].mxu0
    %4114 = vdwg.mxu0
    %4115 = vmatprep.subr.bf16.mxu0 %v2773
    %4116 = vmatpush1.bf16.msra.mxu0 %v2772
    %4117 = vmatprep.subr.bf16.mxu0 %v2781
    %4118 = vmatpush1.bf16.msra.mxu0 %v2780
    %4119 = vmatprep.subr.bf16.mxu0 %v2789
    %4120 = vmatpush1.bf16.msra.mxu0 %v2788
    %4121 = vmatprep.subr.bf16.mxu0 %v2797
    %4122 = vmatpush1.bf16.msra.mxu0 %v2796
    %4123 = vmatprep.subr.bf16.mxu0 %v2805
    %4124 = vmatpush1.bf16.msra.mxu0 %v2804
    %4125 = vmatprep.subr.bf16.mxu0 %v2813
    %4126 = vmatpush1.bf16.msra.mxu0 %v2812
    %4127 = vmatprep.subr.bf16.mxu0 %v2821
    %4128 = vmatpush1.bf16.msra.mxu0 %v2820
    %4129 = vmatprep.subr.bf16.mxu0 %v2829
    %4130 = vmatpush1.bf16.msra.mxu0 %v2828
    %4131 = vmatprep.subr.bf16.mxu0 %v2837
    %4132 = vmatpush1.bf16.msra.mxu0 %v2836
    %4133 = vmatprep.subr.bf16.mxu0 %v2845
    %4134 = vmatpush1.bf16.msra.mxu0 %v2844
    %4135 = vmatprep.subr.bf16.mxu0 %v2853
    %4136 = vmatpush1.bf16.msra.mxu0 %v2852
    %4137 = vmatprep.subr.bf16.mxu0 %v2861
    %4138 = vmatpush1.bf16.msra.mxu0 %v2860
    %4139 = vmatprep.subr.bf16.mxu0 %v2869
    %4140 = vmatpush1.bf16.msra.mxu0 %v2868
    %4141 = vmatprep.subr.bf16.mxu0 %v2877
    %4142 = vmatpush1.bf16.msra.mxu0 %v2876
    %4143 = vmatprep.subr.bf16.mxu0 %v2885
    %4144 = vmatpush1.bf16.msra.mxu0 %v2884
    %4145 = vmatprep.subr.bf16.mxu0 %v2893
    %4146 = vmatpush1.bf16.msra.mxu0 %v2892
    %4147 = vmatprep.mubr.bf16.mxu0 %v3909
    %4148 = vmatmul.mubr.bf16.gmra.mrb[0].mxu0 %v3908
    %v4149 = vpop.f32.mrb[0].mxu0
    %v4150 = vadd.f32 %v4109, %v4149
    %v4151 = vpop.f32.mrb[0].mxu0
    %v4152 = vadd.f32 %v4111, %v4151
    %v4153 = vpop.f32.mrb[0].mxu0
    %v4154 = vpop.f32.mrb[0].mxu0
    %4155 = vdwg.mxu0
    %4156 = vmatprep.subr.bf16.mxu0 %v2647
    %4157 = vmatpush1.bf16.msra.mxu0 %v2646
    %4158 = vmatprep.subr.bf16.mxu0 %v2655
    %4159 = vmatpush1.bf16.msra.mxu0 %v2654
    %4160 = vmatprep.subr.bf16.mxu0 %v2663
    %4161 = vmatpush1.bf16.msra.mxu0 %v2662
    %4162 = vmatprep.subr.bf16.mxu0 %v2671
    %4163 = vmatpush1.bf16.msra.mxu0 %v2670
    %4164 = vmatprep.subr.bf16.mxu0 %v2679
    %4165 = vmatpush1.bf16.msra.mxu0 %v2678
    %4166 = vmatprep.subr.bf16.mxu0 %v2687
    %4167 = vmatpush1.bf16.msra.mxu0 %v2686
    %4168 = vmatprep.subr.bf16.mxu0 %v2695
    %4169 = vmatpush1.bf16.msra.mxu0 %v2694
    %4170 = vmatprep.subr.bf16.mxu0 %v2703
    %4171 = vmatpush1.bf16.msra.mxu0 %v2702
    %4172 = vmatprep.subr.bf16.mxu0 %v2711
    %4173 = vmatpush1.bf16.msra.mxu0 %v2710
    %4174 = vmatprep.subr.bf16.mxu0 %v2719
    %4175 = vmatpush1.bf16.msra.mxu0 %v2718
    %4176 = vmatprep.subr.bf16.mxu0 %v2727
    %4177 = vmatpush1.bf16.msra.mxu0 %v2726
    %4178 = vmatprep.subr.bf16.mxu0 %v2735
    %4179 = vmatpush1.bf16.msra.mxu0 %v2734
    %4180 = vmatprep.subr.bf16.mxu0 %v2743
    %4181 = vmatpush1.bf16.msra.mxu0 %v2742
    %4182 = vmatprep.subr.bf16.mxu0 %v2751
    %4183 = vmatpush1.bf16.msra.mxu0 %v2750
    %4184 = vmatprep.subr.bf16.mxu0 %v2759
    %4185 = vmatpush1.bf16.msra.mxu0 %v2758
    %4186 = vmatprep.subr.bf16.mxu0 %v2767
    %4187 = vmatpush1.bf16.msra.mxu0 %v2766
    %4188 = vmatprep.mubr.bf16.mxu0 %v3907
    %4189 = vmatmul.mubr.bf16.gmra.mrb[0].mxu0 %v3906
    %v4190 = vpop.f32.mrb[0].mxu0
    %v4191 = vadd.f32 %v3986, %v4190
    %v4192 = vpop.f32.mrb[0].mxu0
    %v4193 = vadd.f32 %v3988, %v4192
    %v4194 = vpop.f32.mrb[0].mxu0
    %v4195 = vpop.f32.mrb[0].mxu0
    %4196 = vdwg.mxu0
    %4197 = vmatprep.subr.bf16.mxu0 %v2775
    %4198 = vmatpush1.bf16.msra.mxu0 %v2774
    %4199 = vmatprep.subr.bf16.mxu0 %v2783
    %4200 = vmatpush1.bf16.msra.mxu0 %v2782
    %4201 = vmatprep.subr.bf16.mxu0 %v2791
    %4202 = vmatpush1.bf16.msra.mxu0 %v2790
    %4203 = vmatprep.subr.bf16.mxu0 %v2799
    %4204 = vmatpush1.bf16.msra.mxu0 %v2798
    %4205 = vmatprep.subr.bf16.mxu0 %v2807
    %4206 = vmatpush1.bf16.msra.mxu0 %v2806
    %4207 = vmatprep.subr.bf16.mxu0 %v2815
    %4208 = vmatpush1.bf16.msra.mxu0 %v2814
    %4209 = vmatprep.subr.bf16.mxu0 %v2823
    %4210 = vmatpush1.bf16.msra.mxu0 %v2822
    %4211 = vmatprep.subr.bf16.mxu0 %v2831
    %4212 = vmatpush1.bf16.msra.mxu0 %v2830
    %4213 = vmatprep.subr.bf16.mxu0 %v2839
    %4214 = vmatpush1.bf16.msra.mxu0 %v2838
    %4215 = vmatprep.subr.bf16.mxu0 %v2847
    %4216 = vmatpush1.bf16.msra.mxu0 %v2846
    %4217 = vmatprep.subr.bf16.mxu0 %v2855
    %4218 = vmatpush1.bf16.msra.mxu0 %v2854
    %4219 = vmatprep.subr.bf16.mxu0 %v2863
    %4220 = vmatpush1.bf16.msra.mxu0 %v2862
    %4221 = vmatprep.subr.bf16.mxu0 %v2871
    %4222 = vmatpush1.bf16.msra.mxu0 %v2870
    %4223 = vmatprep.subr.bf16.mxu0 %v2879
    %4224 = vmatpush1.bf16.msra.mxu0 %v2878
    %4225 = vmatprep.subr.bf16.mxu0 %v2887
    %4226 = vmatpush1.bf16.msra.mxu0 %v2886
    %4227 = vmatprep.subr.bf16.mxu0 %v2895
    %4228 = vmatpush1.bf16.msra.mxu0 %v2894
    %4229 = vmatprep.mubr.bf16.mxu0 %v3909
    %4230 = vmatmul.mubr.bf16.gmra.mrb[0].mxu0 %v3908
    %v4231 = vpop.f32.mrb[0].mxu0
    %v4232 = vadd.f32 %v4191, %v4231
    %v4233 = vpop.f32.mrb[0].mxu0
    %v4234 = vadd.f32 %v4193, %v4233
    %v4235 = vpop.f32.mrb[0].mxu0
    %v4236 = vpop.f32.mrb[0].mxu0
    %4237 = vdwg.mxu0
    %4238 = vmatprep.subr.bf16.mxu0 %v2649
    %4239 = vmatpush1.bf16.msra.mxu0 %v2648
    %4240 = vmatprep.subr.bf16.mxu0 %v2657
    %4241 = vmatpush1.bf16.msra.mxu0 %v2656
    %4242 = vmatprep.subr.bf16.mxu0 %v2665
    %4243 = vmatpush1.bf16.msra.mxu0 %v2664
    %4244 = vmatprep.subr.bf16.mxu0 %v2673
    %4245 = vmatpush1.bf16.msra.mxu0 %v2672
    %4246 = vmatprep.subr.bf16.mxu0 %v2681
    %4247 = vmatpush1.bf16.msra.mxu0 %v2680
    %4248 = vmatprep.subr.bf16.mxu0 %v2689
    %4249 = vmatpush1.bf16.msra.mxu0 %v2688
    %4250 = vmatprep.subr.bf16.mxu0 %v2697
    %4251 = vmatpush1.bf16.msra.mxu0 %v2696
    %4252 = vmatprep.subr.bf16.mxu0 %v2705
    %4253 = vmatpush1.bf16.msra.mxu0 %v2704
    %4254 = vmatprep.subr.bf16.mxu0 %v2713
    %4255 = vmatpush1.bf16.msra.mxu0 %v2712
    %4256 = vmatprep.subr.bf16.mxu0 %v2721
    %4257 = vmatpush1.bf16.msra.mxu0 %v2720
    %4258 = vmatprep.subr.bf16.mxu0 %v2729
    %4259 = vmatpush1.bf16.msra.mxu0 %v2728
    %4260 = vmatprep.subr.bf16.mxu0 %v2737
    %4261 = vmatpush1.bf16.msra.mxu0 %v2736
    %4262 = vmatprep.subr.bf16.mxu0 %v2745
    %4263 = vmatpush1.bf16.msra.mxu0 %v2744
    %4264 = vmatprep.subr.bf16.mxu0 %v2753
    %4265 = vmatpush1.bf16.msra.mxu0 %v2752
    %4266 = vmatprep.subr.bf16.mxu0 %v2761
    %4267 = vmatpush1.bf16.msra.mxu0 %v2760
    %4268 = vmatprep.subr.bf16.mxu0 %v2769
    %4269 = vmatpush1.bf16.msra.mxu0 %v2768
    %4270 = vmatprep.mubr.bf16.mxu0 %v3907
    %4271 = vmatmul.mubr.bf16.gmra.mrb[0].mxu0 %v3906
    %v4272 = vpop.f32.mrb[0].mxu0
    %v4273 = vadd.f32 %v4027, %v4272
    %v4274 = vpop.f32.mrb[0].mxu0
    %v4275 = vadd.f32 %v4029, %v4274
    %v4276 = vpop.f32.mrb[0].mxu0
    %v4277 = vpop.f32.mrb[0].mxu0
    %4278 = vdwg.mxu0
    %4279 = vmatprep.subr.bf16.mxu0 %v2777
    %4280 = vmatpush1.bf16.msra.mxu0 %v2776
    %4281 = vmatprep.subr.bf16.mxu0 %v2785
    %4282 = vmatpush1.bf16.msra.mxu0 %v2784
    %4283 = vmatprep.subr.bf16.mxu0 %v2793
    %4284 = vmatpush1.bf16.msra.mxu0 %v2792
    %4285 = vmatprep.subr.bf16.mxu0 %v2801
    %4286 = vmatpush1.bf16.msra.mxu0 %v2800
    %4287 = vmatprep.subr.bf16.mxu0 %v2809
    %4288 = vmatpush1.bf16.msra.mxu0 %v2808
    %4289 = vmatprep.subr.bf16.mxu0 %v2817
    %4290 = vmatpush1.bf16.msra.mxu0 %v2816
    %4291 = vmatprep.subr.bf16.mxu0 %v2825
    %4292 = vmatpush1.bf16.msra.mxu0 %v2824
    %4293 = vmatprep.subr.bf16.mxu0 %v2833
    %4294 = vmatpush1.bf16.msra.mxu0 %v2832
    %4295 = vmatprep.subr.bf16.mxu0 %v2841
    %4296 = vmatpush1.bf16.msra.mxu0 %v2840
    %4297 = vmatprep.subr.bf16.mxu0 %v2849
    %4298 = vmatpush1.bf16.msra.mxu0 %v2848
    %4299 = vmatprep.subr.bf16.mxu0 %v2857
    %4300 = vmatpush1.bf16.msra.mxu0 %v2856
    %4301 = vmatprep.subr.bf16.mxu0 %v2865
    %4302 = vmatpush1.bf16.msra.mxu0 %v2864
    %4303 = vmatprep.subr.bf16.mxu0 %v2873
    %4304 = vmatpush1.bf16.msra.mxu0 %v2872
    %4305 = vmatprep.subr.bf16.mxu0 %v2881
    %4306 = vmatpush1.bf16.msra.mxu0 %v2880
    %4307 = vmatprep.subr.bf16.mxu0 %v2889
    %4308 = vmatpush1.bf16.msra.mxu0 %v2888
    %4309 = vmatprep.subr.bf16.mxu0 %v2897
    %4310 = vmatpush1.bf16.msra.mxu0 %v2896
    %4311 = vmatprep.mubr.bf16.mxu0 %v3909
    %4312 = vmatmul.mubr.bf16.gmra.mrb[0].mxu0 %v3908
    %v4313 = vpop.f32.mrb[0].mxu0
    %v4314 = vadd.f32 %v4273, %v4313
    %v4315 = vpop.f32.mrb[0].mxu0
    %v4316 = vadd.f32 %v4275, %v4315
    %v4317 = vpop.f32.mrb[0].mxu0
    %v4318 = vpop.f32.mrb[0].mxu0
    %4319 = vdwg.mxu0
    %4320 = vmatprep.subr.bf16.mxu0 %v2651
    %4321 = vmatpush1.bf16.msra.mxu0 %v2650
    %4322 = vmatprep.subr.bf16.mxu0 %v2659
    %4323 = vmatpush1.bf16.msra.mxu0 %v2658
    %4324 = vmatprep.subr.bf16.mxu0 %v2667
    %4325 = vmatpush1.bf16.msra.mxu0 %v2666
    %4326 = vmatprep.subr.bf16.mxu0 %v2675
    %4327 = vmatpush1.bf16.msra.mxu0 %v2674
    %4328 = vmatprep.subr.bf16.mxu0 %v2683
    %4329 = vmatpush1.bf16.msra.mxu0 %v2682
    %4330 = vmatprep.subr.bf16.mxu0 %v2691
    %4331 = vmatpush1.bf16.msra.mxu0 %v2690
    %4332 = vmatprep.subr.bf16.mxu0 %v2699
    %4333 = vmatpush1.bf16.msra.mxu0 %v2698
    %4334 = vmatprep.subr.bf16.mxu0 %v2707
    %4335 = vmatpush1.bf16.msra.mxu0 %v2706
    %4336 = vmatprep.subr.bf16.mxu0 %v2715
    %4337 = vmatpush1.bf16.msra.mxu0 %v2714
    %4338 = vmatprep.subr.bf16.mxu0 %v2723
    %4339 = vmatpush1.bf16.msra.mxu0 %v2722
    %4340 = vmatprep.subr.bf16.mxu0 %v2731
    %4341 = vmatpush1.bf16.msra.mxu0 %v2730
    %4342 = vmatprep.subr.bf16.mxu0 %v2739
    %4343 = vmatpush1.bf16.msra.mxu0 %v2738
    %4344 = vmatprep.subr.bf16.mxu0 %v2747
    %4345 = vmatpush1.bf16.msra.mxu0 %v2746
    %4346 = vmatprep.subr.bf16.mxu0 %v2755
    %4347 = vmatpush1.bf16.msra.mxu0 %v2754
    %4348 = vmatprep.subr.bf16.mxu0 %v2763
    %4349 = vmatpush1.bf16.msra.mxu0 %v2762
    %4350 = vmatprep.subr.bf16.mxu0 %v2771
    %4351 = vmatpush1.bf16.msra.mxu0 %v2770
    %4352 = vmatprep.mubr.bf16.mxu0 %v3907
    %4353 = vmatmul.mubr.bf16.gmra.mrb[0].mxu0 %v3906
    %v4354 = vpop.f32.mrb[0].mxu0
    %v4355 = vadd.f32 %v4068, %v4354
    %v4356 = vpop.f32.mrb[0].mxu0
    %v4357 = vadd.f32 %v4070, %v4356
    %v4358 = vpop.f32.mrb[0].mxu0
    %v4359 = vpop.f32.mrb[0].mxu0
    %4360 = vdwg.mxu0
    %4361 = vmatprep.subr.bf16.mxu0 %v2779
    %4362 = vmatpush1.bf16.msra.mxu0 %v2778
    %4363 = vmatprep.subr.bf16.mxu0 %v2787
    %4364 = vmatpush1.bf16.msra.mxu0 %v2786
    %4365 = vmatprep.subr.bf16.mxu0 %v2795
    %4366 = vmatpush1.bf16.msra.mxu0 %v2794
    %4367 = vmatprep.subr.bf16.mxu0 %v2803
    %4368 = vmatpush1.bf16.msra.mxu0 %v2802
    %4369 = vmatprep.subr.bf16.mxu0 %v2811
    %4370 = vmatpush1.bf16.msra.mxu0 %v2810
    %4371 = vmatprep.subr.bf16.mxu0 %v2819
    %4372 = vmatpush1.bf16.msra.mxu0 %v2818
    %4373 = vmatprep.subr.bf16.mxu0 %v2827
    %4374 = vmatpush1.bf16.msra.mxu0 %v2826
    %4375 = vmatprep.subr.bf16.mxu0 %v2835
    %4376 = vmatpush1.bf16.msra.mxu0 %v2834
    %4377 = vmatprep.subr.bf16.mxu0 %v2843
    %4378 = vmatpush1.bf16.msra.mxu0 %v2842
    %4379 = vmatprep.subr.bf16.mxu0 %v2851
    %4380 = vmatpush1.bf16.msra.mxu0 %v2850
    %4381 = vmatprep.subr.bf16.mxu0 %v2859
    %4382 = vmatpush1.bf16.msra.mxu0 %v2858
    %4383 = vmatprep.subr.bf16.mxu0 %v2867
    %4384 = vmatpush1.bf16.msra.mxu0 %v2866
    %4385 = vmatprep.subr.bf16.mxu0 %v2875
    %4386 = vmatpush1.bf16.msra.mxu0 %v2874
    %4387 = vmatprep.subr.bf16.mxu0 %v2883
    %4388 = vmatpush1.bf16.msra.mxu0 %v2882
    %4389 = vmatprep.subr.bf16.mxu0 %v2891
    %4390 = vmatpush1.bf16.msra.mxu0 %v2890
    %4391 = vmatprep.subr.bf16.mxu0 %v2899
    %4392 = vmatpush1.bf16.msra.mxu0 %v2898
    %4393 = vmatprep.mubr.bf16.mxu0 %v3909
    %4394 = vmatmul.mubr.bf16.gmra.mrb[0].mxu0 %v3908
    %v4395 = vpop.f32.mrb[0].mxu0
    %v4396 = vadd.f32 %v4355, %v4395
    %v4397 = vpop.f32.mrb[0].mxu0
    %v4398 = vadd.f32 %v4357, %v4397
    %v4399 = vpop.f32.mrb[0].mxu0
    %v4400 = vpop.f32.mrb[0].mxu0
    %4401 = vdwg.mxu0
    %v4402 = vadd.f32 %v4150, %v3488
    %v4403 = vadd.f32 %v4152, %v3492
    %v4404 = vadd.f32 %v4232, %v3496
    %v4405 = vadd.f32 %v4234, %v3500
    %v4406 = vadd.f32 %v4314, %v3504
    %v4407 = vadd.f32 %v4316, %v3508
    %v4408 = vadd.f32 %v4396, %v3512
    %v4409 = vadd.f32 %v4398, %v3516
    %v4410 = vmul.f32 %v4404, 0.5
    %v4411 = vmul.f32 %v4405, 0.5
    %v4412 = vtanh.pop %v4410
    %v4413 = vtanh.pop %v4411
    %v4414 = vmul.f32 %v4412, 0.5
    %v4415 = vmul.f32 %v4413, 0.5
    %v4416 = vadd.f32 %v4414, 0.5
    %v4417 = vadd.f32 %v4415, 0.5
    %v4418 = vmul.f32 %v4416, %v3566
    %v4419 = vmul.f32 %v4417, %v3567
    %v4420 = vmul.f32 %v4402, 0.5
    %v4421 = vmul.f32 %v4403, 0.5
    %v4422 = vtanh.pop %v4420
    %v4423 = vtanh.pop %v4421
    %v4424 = vmul.f32 %v4422, 0.5
    %v4425 = vmul.f32 %v4423, 0.5
    %v4426 = vadd.f32 %v4424, 0.5
    %v4427 = vadd.f32 %v4425, 0.5
    %v4428 = vtanh.pop %v4406
    %v4429 = vtanh.pop %v4407
    %v4430 = vmul.f32 %v4426, %v4428
    %v4431 = vmul.f32 %v4427, %v4429
    %v4432 = vadd.f32 %v4418, %v4430
    %v4433 = vadd.f32 %v4419, %v4431
    %v4434 = vmul.f32 %v4408, 0.5
    %v4435 = vmul.f32 %v4409, 0.5
    %v4436 = vtanh.pop %v4434
    %v4437 = vtanh.pop %v4435
    %v4438 = vmul.f32 %v4436, 0.5
    %v4439 = vmul.f32 %v4437, 0.5
    %v4440 = vadd.f32 %v4438, 0.5
    %v4441 = vadd.f32 %v4439, 0.5
    %v4442 = vtanh.pop %v4432
    %v4443 = vtanh.pop %v4433
    %v4444 = vmul.f32 %v4440, %v4442
    %v4445 = vmul.f32 %v4441, %v4443
    %v4446 = vpack.c.bf16 %v4444, %v4444
    %v4447 = vpack.c.bf16 %v4445, %v4445
    %4448 = vmatprep.subr.bf16.mxu0 %v3690
    %4449 = vmatpush1.bf16.msra.mxu0 %v3689
    %4450 = vmatprep.subr.bf16.mxu0 %v3692
    %4451 = vmatpush1.bf16.msra.mxu0 %v3691
    %4452 = vmatprep.subr.bf16.mxu0 %v3694
    %4453 = vmatpush1.bf16.msra.mxu0 %v3693
    %4454 = vmatprep.subr.bf16.mxu0 %v3696
    %4455 = vmatpush1.bf16.msra.mxu0 %v3695
    %4456 = vmatprep.subr.bf16.mxu0 %v3698
    %4457 = vmatpush1.bf16.msra.mxu0 %v3697
    %4458 = vmatprep.subr.bf16.mxu0 %v3700
    %4459 = vmatpush1.bf16.msra.mxu0 %v3699
    %4460 = vmatprep.subr.bf16.mxu0 %v3702
    %4461 = vmatpush1.bf16.msra.mxu0 %v3701
    %4462 = vmatprep.subr.bf16.mxu0 %v3704
    %4463 = vmatpush1.bf16.msra.mxu0 %v3703
    %4464 = vmatprep.subr.bf16.mxu0 %v3706
    %4465 = vmatpush1.bf16.msra.mxu0 %v3705
    %4466 = vmatprep.subr.bf16.mxu0 %v3708
    %4467 = vmatpush1.bf16.msra.mxu0 %v3707
    %4468 = vmatprep.subr.bf16.mxu0 %v3710
    %4469 = vmatpush1.bf16.msra.mxu0 %v3709
    %4470 = vmatprep.subr.bf16.mxu0 %v3712
    %4471 = vmatpush1.bf16.msra.mxu0 %v3711
    %4472 = vmatprep.subr.bf16.mxu0 %v3714
    %4473 = vmatpush1.bf16.msra.mxu0 %v3713
    %4474 = vmatprep.subr.bf16.mxu0 %v3716
    %4475 = vmatpush1.bf16.msra.mxu0 %v3715
    %4476 = vmatprep.subr.bf16.mxu0 %v3718
    %4477 = vmatpush1.bf16.msra.mxu0 %v3717
    %4478 = vmatprep.subr.bf16.mxu0 %v3720
    %4479 = vmatpush1.bf16.msra.mxu0 %v3719
    %4480 = vmatprep.mubr.bf16.mxu0 %v4447
    %4481 = vmatmul.mubr.bf16.gmra.mrb[0].mxu0 %v4446
    %v4482 = vpop.f32.mrb[0].mxu0
    %v4483 = vadd.f32 %v3586, %v4482
    %v4484 = vpop.f32.mrb[0].mxu0
    %v4485 = vadd.f32 %v3590, %v4484
    %v4486 = vpop.f32.mrb[0].mxu0
    %v4487 = vpop.f32.mrb[0].mxu0
    %4488 = vdwg.mxu0
    %v4491 = vcombine.low %v4483, %v4485
    %v4493 = vunpack.c.l.s4 1983009808
    %v4494 = vunpack.c.0.s8 %v4493
    %v4495 = vlaneseq
    %v4496 = vshrl.u32 %v4495, 7
    %v4497 = vsub.s32 %v4494, %v4496
    %v4498 = vrot.slane %v4491, %v4497
    %v4500 = vadd.f32 %v3805, %v4498
    %s4501 = scalar_lea.vmem [#allocation14], 4
    %4502 = vst [vmem:[%s4501] sm:$0xf] %v4500
    %v4505 = vcombine.low %v4444, %v4445
    %v4507 = vunpack.c.l.s4 1983009808
    %v4508 = vunpack.c.0.s8 %v4507
    %v4509 = vlaneseq
    %v4510 = vshrl.u32 %v4509, 7
    %v4511 = vsub.s32 %v4508, %v4510
    %v4512 = vrot.slane %v4505, %v4511
    %4514 = vst [vmem:[#allocation15] sm:$0xf] %v4512
    %v4517 = vcombine.low %v4432, %v4433
    %v4519 = vunpack.c.l.s4 1983009808
    %v4520 = vunpack.c.0.s8 %v4519
    %v4521 = vlaneseq
    %v4522 = vshrl.u32 %v4521, 7
    %v4523 = vsub.s32 %v4520, %v4522
    %v4524 = vrot.slane %v4517, %v4523
    %4526 = vst [vmem:[#allocation17] sm:$0xf] %v4524
    %v4529 = vunpack.c.l.s4 1983009808
    %v4530 = vunpack.c.0.s8 %v4529
    %v4531 = vlaneseq
    %v4532 = vshrl.u32 %v4531, 7
    %v4533 = vsub.s32 %v4530, %v4532
    %v4534 = vrot.slane %v4500, %v4533
    %v4535 = vcombine.high %v4534, %v4534
    %v4538 = vpack.c.bf16 %v4534, %v4534
    %v4539 = vpack.c.bf16 %v4535, %v4535
    %4540 = vmatprep.subr.bf16.mxu0 %v842
    %4541 = vmatpush1.bf16.msra.mxu0 %v841
    %4542 = vmatprep.subr.bf16.mxu0 %v846
    %4543 = vmatpush1.bf16.msra.mxu0 %v845
    %4544 = vmatprep.subr.bf16.mxu0 %v850
    %4545 = vmatpush1.bf16.msra.mxu0 %v849
    %4546 = vmatprep.subr.bf16.mxu0 %v854
    %4547 = vmatpush1.bf16.msra.mxu0 %v853
    %4548 = vmatprep.subr.bf16.mxu0 %v858
    %4549 = vmatpush1.bf16.msra.mxu0 %v857
    %4550 = vmatprep.subr.bf16.mxu0 %v862
    %4551 = vmatpush1.bf16.msra.mxu0 %v861
    %4552 = vmatprep.subr.bf16.mxu0 %v866
    %4553 = vmatpush1.bf16.msra.mxu0 %v865
    %4554 = vmatprep.subr.bf16.mxu0 %v870
    %4555 = vmatpush1.bf16.msra.mxu0 %v869
    %4556 = vmatprep.subr.bf16.mxu0 %v874
    %4557 = vmatpush1.bf16.msra.mxu0 %v873
    %4558 = vmatprep.subr.bf16.mxu0 %v878
    %4559 = vmatpush1.bf16.msra.mxu0 %v877
    %4560 = vmatprep.subr.bf16.mxu0 %v882
    %4561 = vmatpush1.bf16.msra.mxu0 %v881
    %4562 = vmatprep.subr.bf16.mxu0 %v886
    %4563 = vmatpush1.bf16.msra.mxu0 %v885
    %4564 = vmatprep.subr.bf16.mxu0 %v890
    %4565 = vmatpush1.bf16.msra.mxu0 %v889
    %4566 = vmatprep.subr.bf16.mxu0 %v894
    %4567 = vmatpush1.bf16.msra.mxu0 %v893
    %4568 = vmatprep.subr.bf16.mxu0 %v898
    %4569 = vmatpush1.bf16.msra.mxu0 %v897
    %4570 = vmatprep.subr.bf16.mxu0 %v902
    %4571 = vmatpush1.bf16.msra.mxu0 %v901
    %4572 = vmatprep.mubr.bf16.mxu0 %v4539
    %4573 = vmatmul.mubr.bf16.gmra.mrb[0].mxu0 %v4538
    %v4574 = vpop.f32.mrb[0].mxu0
    %v4575 = vadd.f32 %v632, %v4574
    %v4576 = vpop.f32.mrb[0].mxu0
    %v4577 = vadd.f32 %v636, %v4576
    %v4578 = vpop.f32.mrb[0].mxu0
    %v4579 = vpop.f32.mrb[0].mxu0
    %4580 = vdwg.mxu0
    %4581 = vmatprep.subr.bf16.mxu0 %v844
    %4582 = vmatpush1.bf16.msra.mxu0 %v843
    %4583 = vmatprep.subr.bf16.mxu0 %v848
    %4584 = vmatpush1.bf16.msra.mxu0 %v847
    %4585 = vmatprep.subr.bf16.mxu0 %v852
    %4586 = vmatpush1.bf16.msra.mxu0 %v851
    %4587 = vmatprep.subr.bf16.mxu0 %v856
    %4588 = vmatpush1.bf16.msra.mxu0 %v855
    %4589 = vmatprep.subr.bf16.mxu0 %v860
    %4590 = vmatpush1.bf16.msra.mxu0 %v859
    %4591 = vmatprep.subr.bf16.mxu0 %v864
    %4592 = vmatpush1.bf16.msra.mxu0 %v863
    %4593 = vmatprep.subr.bf16.mxu0 %v868
    %4594 = vmatpush1.bf16.msra.mxu0 %v867
    %4595 = vmatprep.subr.bf16.mxu0 %v872
    %4596 = vmatpush1.bf16.msra.mxu0 %v871
    %4597 = vmatprep.subr.bf16.mxu0 %v876
    %4598 = vmatpush1.bf16.msra.mxu0 %v875
    %4599 = vmatprep.subr.bf16.mxu0 %v880
    %4600 = vmatpush1.bf16.msra.mxu0 %v879
    %4601 = vmatprep.subr.bf16.mxu0 %v884
    %4602 = vmatpush1.bf16.msra.mxu0 %v883
    %4603 = vmatprep.subr.bf16.mxu0 %v888
    %4604 = vmatpush1.bf16.msra.mxu0 %v887
    %4605 = vmatprep.subr.bf16.mxu0 %v892
    %4606 = vmatpush1.bf16.msra.mxu0 %v891
    %4607 = vmatprep.subr.bf16.mxu0 %v896
    %4608 = vmatpush1.bf16.msra.mxu0 %v895
    %4609 = vmatprep.subr.bf16.mxu0 %v900
    %4610 = vmatpush1.bf16.msra.mxu0 %v899
    %4611 = vmatprep.subr.bf16.mxu0 %v904
    %4612 = vmatpush1.bf16.msra.mxu0 %v903
    %4613 = vmatprep.mubr.bf16.mxu0 %v4539
    %4614 = vmatmul.mubr.bf16.gmra.mrb[0].mxu0 %v4538
    %v4615 = vpop.f32.mrb[0].mxu0
    %v4616 = vadd.f32 %v640, %v4615
    %v4617 = vpop.f32.mrb[0].mxu0
    %v4618 = vadd.f32 %v644, %v4617
    %v4619 = vpop.f32.mrb[0].mxu0
    %v4620 = vpop.f32.mrb[0].mxu0
    %4621 = vdwg.mxu0
    %v4622 = vmax.f32 %v4575, 0.0
    %v4623 = vmax.f32 %v4577, 0.0
    %v4624 = vmax.f32 %v4616, 0.0
    %v4625 = vmax.f32 %v4618, 0.0
    %v4626 = vpack.c.bf16 %v4622, %v4622
    %v4627 = vpack.c.bf16 %v4623, %v4623
    %v4628 = vpack.c.bf16 %v4624, %v4624
    %v4629 = vpack.c.bf16 %v4625, %v4625
    %4630 = vmatprep.subr.bf16.mxu0 %v1457
    %4631 = vmatpush1.bf16.msra.mxu0 %v1456
    %4632 = vmatprep.subr.bf16.mxu0 %v1465
    %4633 = vmatpush1.bf16.msra.mxu0 %v1464
    %4634 = vmatprep.subr.bf16.mxu0 %v1473
    %4635 = vmatpush1.bf16.msra.mxu0 %v1472
    %4636 = vmatprep.subr.bf16.mxu0 %v1481
    %4637 = vmatpush1.bf16.msra.mxu0 %v1480
    %4638 = vmatprep.subr.bf16.mxu0 %v1489
    %4639 = vmatpush1.bf16.msra.mxu0 %v1488
    %4640 = vmatprep.subr.bf16.mxu0 %v1497
    %4641 = vmatpush1.bf16.msra.mxu0 %v1496
    %4642 = vmatprep.subr.bf16.mxu0 %v1505
    %4643 = vmatpush1.bf16.msra.mxu0 %v1504
    %4644 = vmatprep.subr.bf16.mxu0 %v1513
    %4645 = vmatpush1.bf16.msra.mxu0 %v1512
    %4646 = vmatprep.subr.bf16.mxu0 %v1521
    %4647 = vmatpush1.bf16.msra.mxu0 %v1520
    %4648 = vmatprep.subr.bf16.mxu0 %v1529
    %4649 = vmatpush1.bf16.msra.mxu0 %v1528
    %4650 = vmatprep.subr.bf16.mxu0 %v1537
    %4651 = vmatpush1.bf16.msra.mxu0 %v1536
    %4652 = vmatprep.subr.bf16.mxu0 %v1545
    %4653 = vmatpush1.bf16.msra.mxu0 %v1544
    %4654 = vmatprep.subr.bf16.mxu0 %v1553
    %4655 = vmatpush1.bf16.msra.mxu0 %v1552
    %4656 = vmatprep.subr.bf16.mxu0 %v1561
    %4657 = vmatpush1.bf16.msra.mxu0 %v1560
    %4658 = vmatprep.subr.bf16.mxu0 %v1569
    %4659 = vmatpush1.bf16.msra.mxu0 %v1568
    %4660 = vmatprep.subr.bf16.mxu0 %v1577
    %4661 = vmatpush1.bf16.msra.mxu0 %v1576
    %4662 = vmatprep.mubr.bf16.mxu0 %v4447
    %4663 = vmatmul.mubr.bf16.gmra.mrb[0].mxu0 %v4446
    %v4664 = vpop.f32.mrb[0].mxu0
    %v4665 = vadd.f32 0.0, %v4664
    %v4666 = vpop.f32.mrb[0].mxu0
    %v4667 = vadd.f32 0.0, %v4666
    %v4668 = vpop.f32.mrb[0].mxu0
    %v4669 = vpop.f32.mrb[0].mxu0
    %4670 = vdwg.mxu0
    %4671 = vmatprep.subr.bf16.mxu0 %v1459
    %4672 = vmatpush1.bf16.msra.mxu0 %v1458
    %4673 = vmatprep.subr.bf16.mxu0 %v1467
    %4674 = vmatpush1.bf16.msra.mxu0 %v1466
    %4675 = vmatprep.subr.bf16.mxu0 %v1475
    %4676 = vmatpush1.bf16.msra.mxu0 %v1474
    %4677 = vmatprep.subr.bf16.mxu0 %v1483
    %4678 = vmatpush1.bf16.msra.mxu0 %v1482
    %4679 = vmatprep.subr.bf16.mxu0 %v1491
    %4680 = vmatpush1.bf16.msra.mxu0 %v1490
    %4681 = vmatprep.subr.bf16.mxu0 %v1499
    %4682 = vmatpush1.bf16.msra.mxu0 %v1498
    %4683 = vmatprep.subr.bf16.mxu0 %v1507
    %4684 = vmatpush1.bf16.msra.mxu0 %v1506
    %4685 = vmatprep.subr.bf16.mxu0 %v1515
    %4686 = vmatpush1.bf16.msra.mxu0 %v1514
    %4687 = vmatprep.subr.bf16.mxu0 %v1523
    %4688 = vmatpush1.bf16.msra.mxu0 %v1522
    %4689 = vmatprep.subr.bf16.mxu0 %v1531
    %4690 = vmatpush1.bf16.msra.mxu0 %v1530
    %4691 = vmatprep.subr.bf16.mxu0 %v1539
    %4692 = vmatpush1.bf16.msra.mxu0 %v1538
    %4693 = vmatprep.subr.bf16.mxu0 %v1547
    %4694 = vmatpush1.bf16.msra.mxu0 %v1546
    %4695 = vmatprep.subr.bf16.mxu0 %v1555
    %4696 = vmatpush1.bf16.msra.mxu0 %v1554
    %4697 = vmatprep.subr.bf16.mxu0 %v1563
    %4698 = vmatpush1.bf16.msra.mxu0 %v1562
    %4699 = vmatprep.subr.bf16.mxu0 %v1571
    %4700 = vmatpush1.bf16.msra.mxu0 %v1570
    %4701 = vmatprep.subr.bf16.mxu0 %v1579
    %4702 = vmatpush1.bf16.msra.mxu0 %v1578
    %4703 = vmatprep.mubr.bf16.mxu0 %v4447
    %4704 = vmatmul.mubr.bf16.gmra.mrb[0].mxu0 %v4446
    %v4705 = vpop.f32.mrb[0].mxu0
    %v4706 = vadd.f32 0.0, %v4705
    %v4707 = vpop.f32.mrb[0].mxu0
    %v4708 = vadd.f32 0.0, %v4707
    %v4709 = vpop.f32.mrb[0].mxu0
    %v4710 = vpop.f32.mrb[0].mxu0
    %4711 = vdwg.mxu0
    %4712 = vmatprep.subr.bf16.mxu0 %v1461
    %4713 = vmatpush1.bf16.msra.mxu0 %v1460
    %4714 = vmatprep.subr.bf16.mxu0 %v1469
    %4715 = vmatpush1.bf16.msra.mxu0 %v1468
    %4716 = vmatprep.subr.bf16.mxu0 %v1477
    %4717 = vmatpush1.bf16.msra.mxu0 %v1476
    %4718 = vmatprep.subr.bf16.mxu0 %v1485
    %4719 = vmatpush1.bf16.msra.mxu0 %v1484
    %4720 = vmatprep.subr.bf16.mxu0 %v1493
    %4721 = vmatpush1.bf16.msra.mxu0 %v1492
    %4722 = vmatprep.subr.bf16.mxu0 %v1501
    %4723 = vmatpush1.bf16.msra.mxu0 %v1500
    %4724 = vmatprep.subr.bf16.mxu0 %v1509
    %4725 = vmatpush1.bf16.msra.mxu0 %v1508
    %4726 = vmatprep.subr.bf16.mxu0 %v1517
    %4727 = vmatpush1.bf16.msra.mxu0 %v1516
    %4728 = vmatprep.subr.bf16.mxu0 %v1525
    %4729 = vmatpush1.bf16.msra.mxu0 %v1524
    %4730 = vmatprep.subr.bf16.mxu0 %v1533
    %4731 = vmatpush1.bf16.msra.mxu0 %v1532
    %4732 = vmatprep.subr.bf16.mxu0 %v1541
    %4733 = vmatpush1.bf16.msra.mxu0 %v1540
    %4734 = vmatprep.subr.bf16.mxu0 %v1549
    %4735 = vmatpush1.bf16.msra.mxu0 %v1548
    %4736 = vmatprep.subr.bf16.mxu0 %v1557
    %4737 = vmatpush1.bf16.msra.mxu0 %v1556
    %4738 = vmatprep.subr.bf16.mxu0 %v1565
    %4739 = vmatpush1.bf16.msra.mxu0 %v1564
    %4740 = vmatprep.subr.bf16.mxu0 %v1573
    %4741 = vmatpush1.bf16.msra.mxu0 %v1572
    %4742 = vmatprep.subr.bf16.mxu0 %v1581
    %4743 = vmatpush1.bf16.msra.mxu0 %v1580
    %4744 = vmatprep.mubr.bf16.mxu0 %v4447
    %4745 = vmatmul.mubr.bf16.gmra.mrb[0].mxu0 %v4446
    %v4746 = vpop.f32.mrb[0].mxu0
    %v4747 = vadd.f32 0.0, %v4746
    %v4748 = vpop.f32.mrb[0].mxu0
    %v4749 = vadd.f32 0.0, %v4748
    %v4750 = vpop.f32.mrb[0].mxu0
    %v4751 = vpop.f32.mrb[0].mxu0
    %4752 = vdwg.mxu0
    %4753 = vmatprep.subr.bf16.mxu0 %v1463
    %4754 = vmatpush1.bf16.msra.mxu0 %v1462
    %4755 = vmatprep.subr.bf16.mxu0 %v1471
    %4756 = vmatpush1.bf16.msra.mxu0 %v1470
    %4757 = vmatprep.subr.bf16.mxu0 %v1479
    %4758 = vmatpush1.bf16.msra.mxu0 %v1478
    %4759 = vmatprep.subr.bf16.mxu0 %v1487
    %4760 = vmatpush1.bf16.msra.mxu0 %v1486
    %4761 = vmatprep.subr.bf16.mxu0 %v1495
    %4762 = vmatpush1.bf16.msra.mxu0 %v1494
    %4763 = vmatprep.subr.bf16.mxu0 %v1503
    %4764 = vmatpush1.bf16.msra.mxu0 %v1502
    %4765 = vmatprep.subr.bf16.mxu0 %v1511
    %4766 = vmatpush1.bf16.msra.mxu0 %v1510
    %4767 = vmatprep.subr.bf16.mxu0 %v1519
    %4768 = vmatpush1.bf16.msra.mxu0 %v1518
    %4769 = vmatprep.subr.bf16.mxu0 %v1527
    %4770 = vmatpush1.bf16.msra.mxu0 %v1526
    %4771 = vmatprep.subr.bf16.mxu0 %v1535
    %4772 = vmatpush1.bf16.msra.mxu0 %v1534
    %4773 = vmatprep.subr.bf16.mxu0 %v1543
    %4774 = vmatpush1.bf16.msra.mxu0 %v1542
    %4775 = vmatprep.subr.bf16.mxu0 %v1551
    %4776 = vmatpush1.bf16.msra.mxu0 %v1550
    %4777 = vmatprep.subr.bf16.mxu0 %v1559
    %4778 = vmatpush1.bf16.msra.mxu0 %v1558
    %4779 = vmatprep.subr.bf16.mxu0 %v1567
    %4780 = vmatpush1.bf16.msra.mxu0 %v1566
    %4781 = vmatprep.subr.bf16.mxu0 %v1575
    %4782 = vmatpush1.bf16.msra.mxu0 %v1574
    %4783 = vmatprep.subr.bf16.mxu0 %v1583
    %4784 = vmatpush1.bf16.msra.mxu0 %v1582
    %4785 = vmatprep.mubr.bf16.mxu0 %v4447
    %4786 = vmatmul.mubr.bf16.gmra.mrb[0].mxu0 %v4446
    %v4787 = vpop.f32.mrb[0].mxu0
    %v4788 = vadd.f32 0.0, %v4787
    %v4789 = vpop.f32.mrb[0].mxu0
    %v4790 = vadd.f32 0.0, %v4789
    %v4791 = vpop.f32.mrb[0].mxu0
    %v4792 = vpop.f32.mrb[0].mxu0
    %4793 = vdwg.mxu0
    %4794 = vmatprep.subr.bf16.mxu0 %v2645
    %4795 = vmatpush1.bf16.msra.mxu0 %v2644
    %4796 = vmatprep.subr.bf16.mxu0 %v2653
    %4797 = vmatpush1.bf16.msra.mxu0 %v2652
    %4798 = vmatprep.subr.bf16.mxu0 %v2661
    %4799 = vmatpush1.bf16.msra.mxu0 %v2660
    %4800 = vmatprep.subr.bf16.mxu0 %v2669
    %4801 = vmatpush1.bf16.msra.mxu0 %v2668
    %4802 = vmatprep.subr.bf16.mxu0 %v2677
    %4803 = vmatpush1.bf16.msra.mxu0 %v2676
    %4804 = vmatprep.subr.bf16.mxu0 %v2685
    %4805 = vmatpush1.bf16.msra.mxu0 %v2684
    %4806 = vmatprep.subr.bf16.mxu0 %v2693
    %4807 = vmatpush1.bf16.msra.mxu0 %v2692
    %4808 = vmatprep.subr.bf16.mxu0 %v2701
    %4809 = vmatpush1.bf16.msra.mxu0 %v2700
    %4810 = vmatprep.subr.bf16.mxu0 %v2709
    %4811 = vmatpush1.bf16.msra.mxu0 %v2708
    %4812 = vmatprep.subr.bf16.mxu0 %v2717
    %4813 = vmatpush1.bf16.msra.mxu0 %v2716
    %4814 = vmatprep.subr.bf16.mxu0 %v2725
    %4815 = vmatpush1.bf16.msra.mxu0 %v2724
    %4816 = vmatprep.subr.bf16.mxu0 %v2733
    %4817 = vmatpush1.bf16.msra.mxu0 %v2732
    %4818 = vmatprep.subr.bf16.mxu0 %v2741
    %4819 = vmatpush1.bf16.msra.mxu0 %v2740
    %4820 = vmatprep.subr.bf16.mxu0 %v2749
    %4821 = vmatpush1.bf16.msra.mxu0 %v2748
    %4822 = vmatprep.subr.bf16.mxu0 %v2757
    %4823 = vmatpush1.bf16.msra.mxu0 %v2756
    %4824 = vmatprep.subr.bf16.mxu0 %v2765
    %4825 = vmatpush1.bf16.msra.mxu0 %v2764
    %4826 = vmatprep.mubr.bf16.mxu0 %v4627
    %4827 = vmatmul.mubr.bf16.gmra.mrb[0].mxu0 %v4626
    %v4828 = vpop.f32.mrb[0].mxu0
    %v4829 = vadd.f32 %v4665, %v4828
    %v4830 = vpop.f32.mrb[0].mxu0
    %v4831 = vadd.f32 %v4667, %v4830
    %v4832 = vpop.f32.mrb[0].mxu0
    %v4833 = vpop.f32.mrb[0].mxu0
    %4834 = vdwg.mxu0
    %4835 = vmatprep.subr.bf16.mxu0 %v2773
    %4836 = vmatpush1.bf16.msra.mxu0 %v2772
    %4837 = vmatprep.subr.bf16.mxu0 %v2781
    %4838 = vmatpush1.bf16.msra.mxu0 %v2780
    %4839 = vmatprep.subr.bf16.mxu0 %v2789
    %4840 = vmatpush1.bf16.msra.mxu0 %v2788
    %4841 = vmatprep.subr.bf16.mxu0 %v2797
    %4842 = vmatpush1.bf16.msra.mxu0 %v2796
    %4843 = vmatprep.subr.bf16.mxu0 %v2805
    %4844 = vmatpush1.bf16.msra.mxu0 %v2804
    %4845 = vmatprep.subr.bf16.mxu0 %v2813
    %4846 = vmatpush1.bf16.msra.mxu0 %v2812
    %4847 = vmatprep.subr.bf16.mxu0 %v2821
    %4848 = vmatpush1.bf16.msra.mxu0 %v2820
    %4849 = vmatprep.subr.bf16.mxu0 %v2829
    %4850 = vmatpush1.bf16.msra.mxu0 %v2828
    %4851 = vmatprep.subr.bf16.mxu0 %v2837
    %4852 = vmatpush1.bf16.msra.mxu0 %v2836
    %4853 = vmatprep.subr.bf16.mxu0 %v2845
    %4854 = vmatpush1.bf16.msra.mxu0 %v2844
    %4855 = vmatprep.subr.bf16.mxu0 %v2853
    %4856 = vmatpush1.bf16.msra.mxu0 %v2852
    %4857 = vmatprep.subr.bf16.mxu0 %v2861
    %4858 = vmatpush1.bf16.msra.mxu0 %v2860
    %4859 = vmatprep.subr.bf16.mxu0 %v2869
    %4860 = vmatpush1.bf16.msra.mxu0 %v2868
    %4861 = vmatprep.subr.bf16.mxu0 %v2877
    %4862 = vmatpush1.bf16.msra.mxu0 %v2876
    %4863 = vmatprep.subr.bf16.mxu0 %v2885
    %4864 = vmatpush1.bf16.msra.mxu0 %v2884
    %4865 = vmatprep.subr.bf16.mxu0 %v2893
    %4866 = vmatpush1.bf16.msra.mxu0 %v2892
    %4867 = vmatprep.mubr.bf16.mxu0 %v4629
    %4868 = vmatmul.mubr.bf16.gmra.mrb[0].mxu0 %v4628
    %v4869 = vpop.f32.mrb[0].mxu0
    %v4870 = vadd.f32 %v4829, %v4869
    %v4871 = vpop.f32.mrb[0].mxu0
    %v4872 = vadd.f32 %v4831, %v4871
    %v4873 = vpop.f32.mrb[0].mxu0
    %v4874 = vpop.f32.mrb[0].mxu0
    %4875 = vdwg.mxu0
    %4876 = vmatprep.subr.bf16.mxu0 %v2647
    %4877 = vmatpush1.bf16.msra.mxu0 %v2646
    %4878 = vmatprep.subr.bf16.mxu0 %v2655
    %4879 = vmatpush1.bf16.msra.mxu0 %v2654
    %4880 = vmatprep.subr.bf16.mxu0 %v2663
    %4881 = vmatpush1.bf16.msra.mxu0 %v2662
    %4882 = vmatprep.subr.bf16.mxu0 %v2671
    %4883 = vmatpush1.bf16.msra.mxu0 %v2670
    %4884 = vmatprep.subr.bf16.mxu0 %v2679
    %4885 = vmatpush1.bf16.msra.mxu0 %v2678
    %4886 = vmatprep.subr.bf16.mxu0 %v2687
    %4887 = vmatpush1.bf16.msra.mxu0 %v2686
    %4888 = vmatprep.subr.bf16.mxu0 %v2695
    %4889 = vmatpush1.bf16.msra.mxu0 %v2694
    %4890 = vmatprep.subr.bf16.mxu0 %v2703
    %4891 = vmatpush1.bf16.msra.mxu0 %v2702
    %4892 = vmatprep.subr.bf16.mxu0 %v2711
    %4893 = vmatpush1.bf16.msra.mxu0 %v2710
    %4894 = vmatprep.subr.bf16.mxu0 %v2719
    %4895 = vmatpush1.bf16.msra.mxu0 %v2718
    %4896 = vmatprep.subr.bf16.mxu0 %v2727
    %4897 = vmatpush1.bf16.msra.mxu0 %v2726
    %4898 = vmatprep.subr.bf16.mxu0 %v2735
    %4899 = vmatpush1.bf16.msra.mxu0 %v2734
    %4900 = vmatprep.subr.bf16.mxu0 %v2743
    %4901 = vmatpush1.bf16.msra.mxu0 %v2742
    %4902 = vmatprep.subr.bf16.mxu0 %v2751
    %4903 = vmatpush1.bf16.msra.mxu0 %v2750
    %4904 = vmatprep.subr.bf16.mxu0 %v2759
    %4905 = vmatpush1.bf16.msra.mxu0 %v2758
    %4906 = vmatprep.subr.bf16.mxu0 %v2767
    %4907 = vmatpush1.bf16.msra.mxu0 %v2766
    %4908 = vmatprep.mubr.bf16.mxu0 %v4627
    %4909 = vmatmul.mubr.bf16.gmra.mrb[0].mxu0 %v4626
    %v4910 = vpop.f32.mrb[0].mxu0
    %v4911 = vadd.f32 %v4706, %v4910
    %v4912 = vpop.f32.mrb[0].mxu0
    %v4913 = vadd.f32 %v4708, %v4912
    %v4914 = vpop.f32.mrb[0].mxu0
    %v4915 = vpop.f32.mrb[0].mxu0
    %4916 = vdwg.mxu0
    %4917 = vmatprep.subr.bf16.mxu0 %v2775
    %4918 = vmatpush1.bf16.msra.mxu0 %v2774
    %4919 = vmatprep.subr.bf16.mxu0 %v2783
    %4920 = vmatpush1.bf16.msra.mxu0 %v2782
    %4921 = vmatprep.subr.bf16.mxu0 %v2791
    %4922 = vmatpush1.bf16.msra.mxu0 %v2790
    %4923 = vmatprep.subr.bf16.mxu0 %v2799
    %4924 = vmatpush1.bf16.msra.mxu0 %v2798
    %4925 = vmatprep.subr.bf16.mxu0 %v2807
    %4926 = vmatpush1.bf16.msra.mxu0 %v2806
    %4927 = vmatprep.subr.bf16.mxu0 %v2815
    %4928 = vmatpush1.bf16.msra.mxu0 %v2814
    %4929 = vmatprep.subr.bf16.mxu0 %v2823
    %4930 = vmatpush1.bf16.msra.mxu0 %v2822
    %4931 = vmatprep.subr.bf16.mxu0 %v2831
    %4932 = vmatpush1.bf16.msra.mxu0 %v2830
    %4933 = vmatprep.subr.bf16.mxu0 %v2839
    %4934 = vmatpush1.bf16.msra.mxu0 %v2838
    %4935 = vmatprep.subr.bf16.mxu0 %v2847
    %4936 = vmatpush1.bf16.msra.mxu0 %v2846
    %4937 = vmatprep.subr.bf16.mxu0 %v2855
    %4938 = vmatpush1.bf16.msra.mxu0 %v2854
    %4939 = vmatprep.subr.bf16.mxu0 %v2863
    %4940 = vmatpush1.bf16.msra.mxu0 %v2862
    %4941 = vmatprep.subr.bf16.mxu0 %v2871
    %4942 = vmatpush1.bf16.msra.mxu0 %v2870
    %4943 = vmatprep.subr.bf16.mxu0 %v2879
    %4944 = vmatpush1.bf16.msra.mxu0 %v2878
    %4945 = vmatprep.subr.bf16.mxu0 %v2887
    %4946 = vmatpush1.bf16.msra.mxu0 %v2886
    %4947 = vmatprep.subr.bf16.mxu0 %v2895
    %4948 = vmatpush1.bf16.msra.mxu0 %v2894
    %4949 = vmatprep.mubr.bf16.mxu0 %v4629
    %4950 = vmatmul.mubr.bf16.gmra.mrb[0].mxu0 %v4628
    %v4951 = vpop.f32.mrb[0].mxu0
    %v4952 = vadd.f32 %v4911, %v4951
    %v4953 = vpop.f32.mrb[0].mxu0
    %v4954 = vadd.f32 %v4913, %v4953
    %v4955 = vpop.f32.mrb[0].mxu0
    %v4956 = vpop.f32.mrb[0].mxu0
    %4957 = vdwg.mxu0
    %4958 = vmatprep.subr.bf16.mxu0 %v2649
    %4959 = vmatpush1.bf16.msra.mxu0 %v2648
    %4960 = vmatprep.subr.bf16.mxu0 %v2657
    %4961 = vmatpush1.bf16.msra.mxu0 %v2656
    %4962 = vmatprep.subr.bf16.mxu0 %v2665
    %4963 = vmatpush1.bf16.msra.mxu0 %v2664
    %4964 = vmatprep.subr.bf16.mxu0 %v2673
    %4965 = vmatpush1.bf16.msra.mxu0 %v2672
    %4966 = vmatprep.subr.bf16.mxu0 %v2681
    %4967 = vmatpush1.bf16.msra.mxu0 %v2680
    %4968 = vmatprep.subr.bf16.mxu0 %v2689
    %4969 = vmatpush1.bf16.msra.mxu0 %v2688
    %4970 = vmatprep.subr.bf16.mxu0 %v2697
    %4971 = vmatpush1.bf16.msra.mxu0 %v2696
    %4972 = vmatprep.subr.bf16.mxu0 %v2705
    %4973 = vmatpush1.bf16.msra.mxu0 %v2704
    %4974 = vmatprep.subr.bf16.mxu0 %v2713
    %4975 = vmatpush1.bf16.msra.mxu0 %v2712
    %4976 = vmatprep.subr.bf16.mxu0 %v2721
    %4977 = vmatpush1.bf16.msra.mxu0 %v2720
    %4978 = vmatprep.subr.bf16.mxu0 %v2729
    %4979 = vmatpush1.bf16.msra.mxu0 %v2728
    %4980 = vmatprep.subr.bf16.mxu0 %v2737
    %4981 = vmatpush1.bf16.msra.mxu0 %v2736
    %4982 = vmatprep.subr.bf16.mxu0 %v2745
    %4983 = vmatpush1.bf16.msra.mxu0 %v2744
    %4984 = vmatprep.subr.bf16.mxu0 %v2753
    %4985 = vmatpush1.bf16.msra.mxu0 %v2752
    %4986 = vmatprep.subr.bf16.mxu0 %v2761
    %4987 = vmatpush1.bf16.msra.mxu0 %v2760
    %4988 = vmatprep.subr.bf16.mxu0 %v2769
    %4989 = vmatpush1.bf16.msra.mxu0 %v2768
    %4990 = vmatprep.mubr.bf16.mxu0 %v4627
    %4991 = vmatmul.mubr.bf16.gmra.mrb[0].mxu0 %v4626
    %v4992 = vpop.f32.mrb[0].mxu0
    %v4993 = vadd.f32 %v4747, %v4992
    %v4994 = vpop.f32.mrb[0].mxu0
    %v4995 = vadd.f32 %v4749, %v4994
    %v4996 = vpop.f32.mrb[0].mxu0
    %v4997 = vpop.f32.mrb[0].mxu0
    %4998 = vdwg.mxu0
    %4999 = vmatprep.subr.bf16.mxu0 %v2777
    %5000 = vmatpush1.bf16.msra.mxu0 %v2776
    %5001 = vmatprep.subr.bf16.mxu0 %v2785
    %5002 = vmatpush1.bf16.msra.mxu0 %v2784
    %5003 = vmatprep.subr.bf16.mxu0 %v2793
    %5004 = vmatpush1.bf16.msra.mxu0 %v2792
    %5005 = vmatprep.subr.bf16.mxu0 %v2801
    %5006 = vmatpush1.bf16.msra.mxu0 %v2800
    %5007 = vmatprep.subr.bf16.mxu0 %v2809
    %5008 = vmatpush1.bf16.msra.mxu0 %v2808
    %5009 = vmatprep.subr.bf16.mxu0 %v2817
    %5010 = vmatpush1.bf16.msra.mxu0 %v2816
    %5011 = vmatprep.subr.bf16.mxu0 %v2825
    %5012 = vmatpush1.bf16.msra.mxu0 %v2824
    %5013 = vmatprep.subr.bf16.mxu0 %v2833
    %5014 = vmatpush1.bf16.msra.mxu0 %v2832
    %5015 = vmatprep.subr.bf16.mxu0 %v2841
    %5016 = vmatpush1.bf16.msra.mxu0 %v2840
    %5017 = vmatprep.subr.bf16.mxu0 %v2849
    %5018 = vmatpush1.bf16.msra.mxu0 %v2848
    %5019 = vmatprep.subr.bf16.mxu0 %v2857
    %5020 = vmatpush1.bf16.msra.mxu0 %v2856
    %5021 = vmatprep.subr.bf16.mxu0 %v2865
    %5022 = vmatpush1.bf16.msra.mxu0 %v2864
    %5023 = vmatprep.subr.bf16.mxu0 %v2873
    %5024 = vmatpush1.bf16.msra.mxu0 %v2872
    %5025 = vmatprep.subr.bf16.mxu0 %v2881
    %5026 = vmatpush1.bf16.msra.mxu0 %v2880
    %5027 = vmatprep.subr.bf16.mxu0 %v2889
    %5028 = vmatpush1.bf16.msra.mxu0 %v2888
    %5029 = vmatprep.subr.bf16.mxu0 %v2897
    %5030 = vmatpush1.bf16.msra.mxu0 %v2896
    %5031 = vmatprep.mubr.bf16.mxu0 %v4629
    %5032 = vmatmul.mubr.bf16.gmra.mrb[0].mxu0 %v4628
    %v5033 = vpop.f32.mrb[0].mxu0
    %v5034 = vadd.f32 %v4993, %v5033
    %v5035 = vpop.f32.mrb[0].mxu0
    %v5036 = vadd.f32 %v4995, %v5035
    %v5037 = vpop.f32.mrb[0].mxu0
    %v5038 = vpop.f32.mrb[0].mxu0
    %5039 = vdwg.mxu0
    %5040 = vmatprep.subr.bf16.mxu0 %v2651
    %5041 = vmatpush1.bf16.msra.mxu0 %v2650
    %5042 = vmatprep.subr.bf16.mxu0 %v2659
    %5043 = vmatpush1.bf16.msra.mxu0 %v2658
    %5044 = vmatprep.subr.bf16.mxu0 %v2667
    %5045 = vmatpush1.bf16.msra.mxu0 %v2666
    %5046 = vmatprep.subr.bf16.mxu0 %v2675
    %5047 = vmatpush1.bf16.msra.mxu0 %v2674
    %5048 = vmatprep.subr.bf16.mxu0 %v2683
    %5049 = vmatpush1.bf16.msra.mxu0 %v2682
    %5050 = vmatprep.subr.bf16.mxu0 %v2691
    %5051 = vmatpush1.bf16.msra.mxu0 %v2690
    %5052 = vmatprep.subr.bf16.mxu0 %v2699
    %5053 = vmatpush1.bf16.msra.mxu0 %v2698
    %5054 = vmatprep.subr.bf16.mxu0 %v2707
    %5055 = vmatpush1.bf16.msra.mxu0 %v2706
    %5056 = vmatprep.subr.bf16.mxu0 %v2715
    %5057 = vmatpush1.bf16.msra.mxu0 %v2714
    %5058 = vmatprep.subr.bf16.mxu0 %v2723
    %5059 = vmatpush1.bf16.msra.mxu0 %v2722
    %5060 = vmatprep.subr.bf16.mxu0 %v2731
    %5061 = vmatpush1.bf16.msra.mxu0 %v2730
    %5062 = vmatprep.subr.bf16.mxu0 %v2739
    %5063 = vmatpush1.bf16.msra.mxu0 %v2738
    %5064 = vmatprep.subr.bf16.mxu0 %v2747
    %5065 = vmatpush1.bf16.msra.mxu0 %v2746
    %5066 = vmatprep.subr.bf16.mxu0 %v2755
    %5067 = vmatpush1.bf16.msra.mxu0 %v2754
    %5068 = vmatprep.subr.bf16.mxu0 %v2763
    %5069 = vmatpush1.bf16.msra.mxu0 %v2762
    %5070 = vmatprep.subr.bf16.mxu0 %v2771
    %5071 = vmatpush1.bf16.msra.mxu0 %v2770
    %5072 = vmatprep.mubr.bf16.mxu0 %v4627
    %5073 = vmatmul.mubr.bf16.gmra.mrb[0].mxu0 %v4626
    %v5074 = vpop.f32.mrb[0].mxu0
    %v5075 = vadd.f32 %v4788, %v5074
    %v5076 = vpop.f32.mrb[0].mxu0
    %v5077 = vadd.f32 %v4790, %v5076
    %v5078 = vpop.f32.mrb[0].mxu0
    %v5079 = vpop.f32.mrb[0].mxu0
    %5080 = vdwg.mxu0
    %5081 = vmatprep.subr.bf16.mxu0 %v2779
    %5082 = vmatpush1.bf16.msra.mxu0 %v2778
    %5083 = vmatprep.subr.bf16.mxu0 %v2787
    %5084 = vmatpush1.bf16.msra.mxu0 %v2786
    %5085 = vmatprep.subr.bf16.mxu0 %v2795
    %5086 = vmatpush1.bf16.msra.mxu0 %v2794
    %5087 = vmatprep.subr.bf16.mxu0 %v2803
    %5088 = vmatpush1.bf16.msra.mxu0 %v2802
    %5089 = vmatprep.subr.bf16.mxu0 %v2811
    %5090 = vmatpush1.bf16.msra.mxu0 %v2810
    %5091 = vmatprep.subr.bf16.mxu0 %v2819
    %5092 = vmatpush1.bf16.msra.mxu0 %v2818
    %5093 = vmatprep.subr.bf16.mxu0 %v2827
    %5094 = vmatpush1.bf16.msra.mxu0 %v2826
    %5095 = vmatprep.subr.bf16.mxu0 %v2835
    %5096 = vmatpush1.bf16.msra.mxu0 %v2834
    %5097 = vmatprep.subr.bf16.mxu0 %v2843
    %5098 = vmatpush1.bf16.msra.mxu0 %v2842
    %5099 = vmatprep.subr.bf16.mxu0 %v2851
    %5100 = vmatpush1.bf16.msra.mxu0 %v2850
    %5101 = vmatprep.subr.bf16.mxu0 %v2859
    %5102 = vmatpush1.bf16.msra.mxu0 %v2858
    %5103 = vmatprep.subr.bf16.mxu0 %v2867
    %5104 = vmatpush1.bf16.msra.mxu0 %v2866
    %5105 = vmatprep.subr.bf16.mxu0 %v2875
    %5106 = vmatpush1.bf16.msra.mxu0 %v2874
    %5107 = vmatprep.subr.bf16.mxu0 %v2883
    %5108 = vmatpush1.bf16.msra.mxu0 %v2882
    %5109 = vmatprep.subr.bf16.mxu0 %v2891
    %5110 = vmatpush1.bf16.msra.mxu0 %v2890
    %5111 = vmatprep.subr.bf16.mxu0 %v2899
    %5112 = vmatpush1.bf16.msra.mxu0 %v2898
    %5113 = vmatprep.mubr.bf16.mxu0 %v4629
    %5114 = vmatmul.mubr.bf16.gmra.mrb[0].mxu0 %v4628
    %v5115 = vpop.f32.mrb[0].mxu0
    %v5116 = vadd.f32 %v5075, %v5115
    %v5117 = vpop.f32.mrb[0].mxu0
    %v5118 = vadd.f32 %v5077, %v5117
    %v5119 = vpop.f32.mrb[0].mxu0
    %v5120 = vpop.f32.mrb[0].mxu0
    %5121 = vdwg.mxu0
    %v5122 = vadd.f32 %v4870, %v3488
    %v5123 = vadd.f32 %v4872, %v3492
    %v5124 = vadd.f32 %v4952, %v3496
    %v5125 = vadd.f32 %v4954, %v3500
    %v5126 = vadd.f32 %v5034, %v3504
    %v5127 = vadd.f32 %v5036, %v3508
    %v5128 = vadd.f32 %v5116, %v3512
    %v5129 = vadd.f32 %v5118, %v3516
    %v5130 = vmul.f32 %v5124, 0.5
    %v5131 = vmul.f32 %v5125, 0.5
    %v5132 = vtanh.pop %v5130
    %v5133 = vtanh.pop %v5131
    %v5134 = vmul.f32 %v5132, 0.5
    %v5135 = vmul.f32 %v5133, 0.5
    %v5136 = vadd.f32 %v5134, 0.5
    %v5137 = vadd.f32 %v5135, 0.5
    %v5138 = vmul.f32 %v5136, %v4432
    %v5139 = vmul.f32 %v5137, %v4433
    %v5140 = vmul.f32 %v5122, 0.5
    %v5141 = vmul.f32 %v5123, 0.5
    %v5142 = vtanh.pop %v5140
    %v5143 = vtanh.pop %v5141
    %v5144 = vmul.f32 %v5142, 0.5
    %v5145 = vmul.f32 %v5143, 0.5
    %v5146 = vadd.f32 %v5144, 0.5
    %v5147 = vadd.f32 %v5145, 0.5
    %v5148 = vtanh.pop %v5126
    %v5149 = vtanh.pop %v5127
    %v5150 = vmul.f32 %v5146, %v5148
    %v5151 = vmul.f32 %v5147, %v5149
    %v5152 = vadd.f32 %v5138, %v5150
    %v5153 = vadd.f32 %v5139, %v5151
    %v5154 = vmul.f32 %v5128, 0.5
    %v5155 = vmul.f32 %v5129, 0.5
    %v5156 = vtanh.pop %v5154
    %v5157 = vtanh.pop %v5155
    %v5158 = vmul.f32 %v5156, 0.5
    %v5159 = vmul.f32 %v5157, 0.5
    %v5160 = vadd.f32 %v5158, 0.5
    %v5161 = vadd.f32 %v5159, 0.5
    %v5162 = vtanh.pop %v5152
    %v5163 = vtanh.pop %v5153
    %v5164 = vmul.f32 %v5160, %v5162
    %v5165 = vmul.f32 %v5161, %v5163
    %v5166 = vpack.c.bf16 %v5164, %v5164
    %v5167 = vpack.c.bf16 %v5165, %v5165
    %5168 = vmatprep.subr.bf16.mxu0 %v3690
    %5169 = vmatpush1.bf16.msra.mxu0 %v3689
    %5170 = vmatprep.subr.bf16.mxu0 %v3692
    %5171 = vmatpush1.bf16.msra.mxu0 %v3691
    %5172 = vmatprep.subr.bf16.mxu0 %v3694
    %5173 = vmatpush1.bf16.msra.mxu0 %v3693
    %5174 = vmatprep.subr.bf16.mxu0 %v3696
    %5175 = vmatpush1.bf16.msra.mxu0 %v3695
    %5176 = vmatprep.subr.bf16.mxu0 %v3698
    %5177 = vmatpush1.bf16.msra.mxu0 %v3697
    %5178 = vmatprep.subr.bf16.mxu0 %v3700
    %5179 = vmatpush1.bf16.msra.mxu0 %v3699
    %5180 = vmatprep.subr.bf16.mxu0 %v3702
    %5181 = vmatpush1.bf16.msra.mxu0 %v3701
    %5182 = vmatprep.subr.bf16.mxu0 %v3704
    %5183 = vmatpush1.bf16.msra.mxu0 %v3703
    %5184 = vmatprep.subr.bf16.mxu0 %v3706
    %5185 = vmatpush1.bf16.msra.mxu0 %v3705
    %5186 = vmatprep.subr.bf16.mxu0 %v3708
    %5187 = vmatpush1.bf16.msra.mxu0 %v3707
    %5188 = vmatprep.subr.bf16.mxu0 %v3710
    %5189 = vmatpush1.bf16.msra.mxu0 %v3709
    %5190 = vmatprep.subr.bf16.mxu0 %v3712
    %5191 = vmatpush1.bf16.msra.mxu0 %v3711
    %5192 = vmatprep.subr.bf16.mxu0 %v3714
    %5193 = vmatpush1.bf16.msra.mxu0 %v3713
    %5194 = vmatprep.subr.bf16.mxu0 %v3716
    %5195 = vmatpush1.bf16.msra.mxu0 %v3715
    %5196 = vmatprep.subr.bf16.mxu0 %v3718
    %5197 = vmatpush1.bf16.msra.mxu0 %v3717
    %5198 = vmatprep.subr.bf16.mxu0 %v3720
    %5199 = vmatpush1.bf16.msra.mxu0 %v3719
    %5200 = vmatprep.mubr.bf16.mxu0 %v5167
    %5201 = vmatmul.mubr.bf16.gmra.mrb[0].mxu0 %v5166
    %v5202 = vpop.f32.mrb[0].mxu0
    %v5203 = vadd.f32 %v3586, %v5202
    %v5204 = vpop.f32.mrb[0].mxu0
    %v5205 = vadd.f32 %v3590, %v5204
    %v5206 = vpop.f32.mrb[0].mxu0
    %v5207 = vpop.f32.mrb[0].mxu0
    %5208 = vdwg.mxu0
    %v5211 = vcombine.low %v5203, %v5205
    %v5213 = vunpack.c.l.s4 1983009808
    %v5214 = vunpack.c.0.s8 %v5213
    %v5215 = vlaneseq
    %v5216 = vshrl.u32 %v5215, 7
    %v5217 = vsub.s32 %v5214, %v5216
    %v5218 = vrot.slane %v5211, %v5217
    %v5220 = vadd.f32 %v4500, %v5218
    %s5221 = scalar_lea.vmem [#allocation14], 8
    %5222 = vst [vmem:[%s5221] sm:$0xf] %v5220
    // Predicated region
    $region70: #{tpu_custom_call.1} parent=1 // pred_check
      _
    $region71: #{tpu_custom_call.1} parent=1 // pred_check_branch
      %5224 = sbr.rel (0) target = $region73
    $region72: #{tpu_custom_call.1} parent=1 // pred_region
      %s5226 = ssub.s32 192, 192
      %5227 = vsyncadd [#allocation4], %s5226
      %s5228 = sshll.u32 [#allocation14], 4
      %s5229 = int_to_ptr.vmem [resolvable:$true] %s5228
      %5234 = dma.vmem_to_hbm [thread:$0]  %s5229, 192, %s10, [#allocation4], 64, 64, 4
    $region73: #{tpu_custom_call.1} parent=1 // pred_fallthru
      _
    // Predicated region
    $region74: #{tpu_custom_call.1} parent=1 // pred_check
      _
    $region75: #{tpu_custom_call.1} parent=1 // pred_check_branch
      %5236 = sbr.rel (0) target = $region77
    $region76: #{tpu_custom_call.1} parent=1 // pred_region
      %s5238 = ssub.s32 64, 64
      %5239 = vsyncadd [#allocation16], %s5238
      %s5241 = sshll.u32 [#allocation15], 4
      %s5242 = int_to_ptr.vmem [resolvable:$true] %s5241
      %5244 = dma.vmem_to_hbm [thread:$0]  %s5242, 64, %s11, [#allocation16]
    $region77: #{tpu_custom_call.1} parent=1 // pred_fallthru
      _
    // Predicated region
    $region78: #{tpu_custom_call.1} parent=1 // pred_check
      _
    $region79: #{tpu_custom_call.1} parent=1 // pred_check_branch
      %5246 = sbr.rel (0) target = $region81
    $region80: #{tpu_custom_call.1} parent=1 // pred_region
      %s5248 = ssub.s32 64, 64
      %5249 = vsyncadd [#allocation16], %s5248
      %s5251 = sshll.u32 [#allocation17], 4
      %s5252 = int_to_ptr.vmem [resolvable:$true] %s5251
      %5254 = dma.vmem_to_hbm [thread:$0]  %s5252, 64, %s12, [#allocation16]
    $region81: #{tpu_custom_call.1} parent=1 // pred_fallthru
      _
    // Predicated region
    $region82: #{tpu_custom_call.1} parent=1 // pred_check
      _
    $region83: #{tpu_custom_call.1} parent=1 // pred_check_branch
      %5256 = sbr.rel (0) target = $region85
    $region84: #{tpu_custom_call.1} parent=1 // pred_region
      %5257 = dma.done [#allocation4], 192
    $region85: #{tpu_custom_call.1} parent=1 // pred_fallthru
      _
    // Predicated region
    $region86: #{tpu_custom_call.1} parent=1 // pred_check
      _
    $region87: #{tpu_custom_call.1} parent=1 // pred_check_branch
      %5259 = sbr.rel (0) target = $region89
    $region88: #{tpu_custom_call.1} parent=1 // pred_region
      %5260 = dma.done [#allocation16], 64
    $region89: #{tpu_custom_call.1} parent=1 // pred_fallthru
      _
    // Predicated region
    $region90: #{tpu_custom_call.1} parent=1 // pred_check
      _
    $region91: #{tpu_custom_call.1} parent=1 // pred_check_branch
      %5262 = sbr.rel (0) target = $region93
    $region92: #{tpu_custom_call.1} parent=1 // pred_region
      %5263 = dma.done [#allocation16], 64
    $region93: #{tpu_custom_call.1} parent=1 // pred_fallthru
      _
    %5264 = vsyncpa [#allocation3], 1
    %5265 = vsyncpa [#allocation6], 1
    %5266 = vsyncpa [#allocation9], 1
    %5267 = vsyncpa [#allocation12], 1
    %5268 = vsyncpa [#allocation4], 1
    %5269 = vsyncpa [#allocation16], 1

</llo_original>
